<compile_context>
chip_gen: v6e
topology: v6e:2x2x1
jax: 0.10.0
libtpu: 0.0.40
codegen_flags: <defaults>
</compile_context>

<pallas_src>
import functools

import jax
import jax.numpy as jnp
from jax.experimental import pallas as pl
from jax.experimental.pallas import tpu as pltpu


# ----------------------------------------------------------------------------
# Pallas kernel
# ----------------------------------------------------------------------------
def _lstm_cell(gates, c_prev, hidden):
    """Standard LSTM cell update from pre-activation gates (B, 4H), f32 math."""
    H = hidden
    i_g = jax.nn.sigmoid(gates[:, 0 * H:1 * H])
    f_g = jax.nn.sigmoid(gates[:, 1 * H:2 * H])
    g_g = jnp.tanh(gates[:, 2 * H:3 * H])
    o_g = jax.nn.sigmoid(gates[:, 3 * H:4 * H])
    c_new = f_g * c_prev + i_g * g_g
    h_new = o_g * jnp.tanh(c_new)
    return h_new, c_new


def fused_bilstm_kernel(x_ref, *refs, seq_len, batch, hidden, num_layers,
                        compute_dtype):
    """Entire BiLSTM forward (all layers, both directions, FC + softmax).

    x_ref: (T*B, D_in) time-major input, flattened over (t, b).
    refs : [4 * num_layers layer-weight refs] + [fc_w, fc_b]     (inputs)
           + [out]                                               (output)
           + [seq_buf]                                           (VMEM scratch)
    Per-layer weights: (wih_cat (D_in, 8H), whh_f (H, 4H), whh_b (H, 4H),
                        b_cat (1, 8H))  -- fwd gates in cols [0,4H),
                        bwd gates in cols [4H,8H).
    seq_buf: (T*B, 2H) f32; rows t*B:(t+1)*B hold [h_fwd(t) | h_bwd(t)] of the
             previous layer (only written for non-final layers).
    """
    T, B, H = seq_len, batch, hidden
    G4 = 4 * H
    f32 = jnp.float32
    cd = compute_dtype

    n_w = 4 * num_layers
    layer_refs = refs[:n_w]
    fc_w_ref, fc_b_ref = refs[n_w], refs[n_w + 1]
    out_ref = refs[n_w + 2]
    seq_buf = refs[n_w + 3]

    h_f = h_b_last_time = None

    for layer in range(num_layers):
        wih_cat, whh_f, whh_b, b_cat = layer_refs[4 * layer:4 * layer + 4]

        # ---- hoisted input projection: ONE MXU matmul for BOTH directions --
        # (bias folded in; lane-dense 8H-wide result; direction split is at a
        #  128-lane vreg boundary, so it's free)
        if layer == 0:
            feat = x_ref[...].astype(cd)                      # (T*B, D_in)
        else:
            feat = seq_buf[...].astype(cd)                    # (T*B, 2H)
        gx = jnp.dot(feat, wih_cat[...],
                     preferred_element_type=f32) + b_cat[...]  # (T*B, 8H)
        gx_f = gx[:, 0:G4]
        gx_b = gx[:, G4:2 * G4]

        # ---- fused fwd/bwd recurrence, fully unrolled over time ------------
        is_last = layer == num_layers - 1
        h_f = jnp.zeros((B, H), f32)
        c_f = jnp.zeros((B, H), f32)
        h_b = jnp.zeros((B, H), f32)
        c_b = jnp.zeros((B, H), f32)
        w_hh_f = whh_f[...]            # load recurrent weights once per layer
        w_hh_b = whh_b[...]

        for t in range(T):             # static unroll; all slicing is static
            tb = T - 1 - t
            gates_f = gx_f[t * B:(t + 1) * B, :] + jnp.dot(
                h_f.astype(cd), w_hh_f, preferred_element_type=f32)
            h_f, c_f = _lstm_cell(gates_f, c_f, H)

            gates_b = gx_b[tb * B:(tb + 1) * B, :] + jnp.dot(
                h_b.astype(cd), w_hh_b, preferred_element_type=f32)
            h_b, c_b = _lstm_cell(gates_b, c_b, H)

            if t == 0:
                h_b_last_time = h_b    # backward hidden state at time T-1
            if not is_last:            # last layer: only out[:, -1, :] needed
                seq_buf[t * B:(t + 1) * B, 0:H] = h_f
                seq_buf[tb * B:(tb + 1) * B, H:2 * H] = h_b

    # ---- fused FC + softmax head on out[:, -1, :] = [h_f(T-1), h_b(T-1)] ---
    logits = (jnp.dot(h_f.astype(cd), fc_w_ref[0:H, :],
                      preferred_element_type=f32)
              + jnp.dot(h_b_last_time.astype(cd), fc_w_ref[H:2 * H, :],
                        preferred_element_type=f32)
              + fc_b_ref[...])
    m = jnp.max(logits, axis=1, keepdims=True)
    e = jnp.exp(logits - m)
    denom = jnp.sum(e, axis=1, keepdims=True)
    out_ref[...] = e * pl.reciprocal(denom, approx=True)


# ----------------------------------------------------------------------------
# Wrapper
# ----------------------------------------------------------------------------
def bilstm_forward(x, params, *, compute_dtype=jnp.float32):
    """Equivalent of BiLSTM.forward.  x: (B, T, input_dim), batch-first.

    compute_dtype: dtype of the MXU operands (weights / activation inputs).
      Use jnp.bfloat16 on v6e/v7x (native bf16 MXU, half the weight VMEM);
      keep jnp.float32 on v5e.  Cell state, gate math and accumulation stay
      f32.
    """
    B, T, D = x.shape
    layers = params["lstm"]
    num_layers = len(layers)
    H = layers[0][1].shape[0]              # whh_f: (H, 4H)
    C = params["fc_w"].shape[1]
    cd = compute_dtype

    # time-major, flattened over (t, b): row t*B + b  <->  x[b, t, :]
    x_flat = jnp.transpose(x, (1, 0, 2)).reshape(T * B, D).astype(cd)

    # Fold each layer's two directions into one projection matrix / bias so
    # the in-kernel hoisted projection is a single lane-dense matmul.
    weight_args = []
    for (wih_f, whh_f, b_f, wih_b, whh_b, b_b) in layers:
        wih_cat = jnp.concatenate([wih_f, wih_b], axis=1).astype(cd)  # (Din,8H)
        b_cat = jnp.concatenate([b_f, b_b], axis=1)                   # (1, 8H)
        weight_args += [wih_cat, whh_f.astype(cd), whh_b.astype(cd), b_cat]
    weight_args += [params["fc_w"].astype(cd), params["fc_b"]]

    kernel = functools.partial(
        fused_bilstm_kernel, seq_len=T, batch=B, hidden=H,
        num_layers=num_layers, compute_dtype=cd)

    vmem = pl.BlockSpec(memory_space=pltpu.MemorySpace.VMEM)
    n_inputs = 1 + len(weight_args)
    return pl.pallas_call(
        kernel,
        out_shape=jax.ShapeDtypeStruct((B, C), jnp.float32),
        in_specs=[vmem] * n_inputs,
        out_specs=vmem,
        scratch_shapes=[
            pltpu.VMEM((T * B, 2 * H), jnp.float32),  # inter-layer activations
        ],
    )(x_flat, *weight_args)


# ----------------------------------------------------------------------------
# Pure-JAX reference (for correctness check)
# ----------------------------------------------------------------------------
def _lstm_dir_ref(x_tm, w_ih, w_hh, b):
    T, B, _ = x_tm.shape
    H = w_hh.shape[0]
    h = jnp.zeros((B, H), jnp.float32)
    c = jnp.zeros((B, H), jnp.float32)
    outs = []
    for t in range(T):
        gates = x_tm[t] @ w_ih + h @ w_hh + b
        i_g = jax.nn.sigmoid(gates[:, 0 * H:1 * H])
        f_g = jax.nn.sigmoid(gates[:, 1 * H:2 * H])
        g_g = jnp.tanh(gates[:, 2 * H:3 * H])
        o_g = jax.nn.sigmoid(gates[:, 3 * H:4 * H])
        c = f_g * c + i_g * g_g
        h = o_g * jnp.tanh(c)
        outs.append(h)
    return jnp.stack(outs, axis=0)


def bilstm_forward_ref(x, params):
    inp = jnp.transpose(x, (1, 0, 2))
    for (wih_f, whh_f, b_f, wih_b, whh_b, b_b) in params["lstm"]:
        out_f = _lstm_dir_ref(inp, wih_f, whh_f, b_f)
        out_b = _lstm_dir_ref(inp[::-1], wih_b, whh_b, b_b)[::-1]
        inp = jnp.concatenate([out_f, out_b], axis=-1)
    last = inp[-1]
    logits = last @ params["fc_w"] + params["fc_b"]
    return jax.nn.softmax(logits, axis=1)


# ----------------------------------------------------------------------------
# Deterministic parameter construction (PyTorch-style uniform init)
# ----------------------------------------------------------------------------
def make_params(key, input_dim, hidden, num_layers, output_dim):
    scale = 1.0 / jnp.sqrt(hidden)

    def unif(k, shape):
        return jax.random.uniform(k, shape, jnp.float32, -scale, scale)

    layers = []
    for layer in range(num_layers):
        d_in = input_dim if layer == 0 else 2 * hidden
        key, *ks = jax.random.split(key, 9)
        wih_f = unif(ks[0], (d_in, 4 * hidden))
        whh_f = unif(ks[1], (hidden, 4 * hidden))
        b_f = (unif(ks[2], (1, 4 * hidden)) + unif(ks[3], (1, 4 * hidden)))
        wih_b = unif(ks[4], (d_in, 4 * hidden))
        whh_b = unif(ks[5], (hidden, 4 * hidden))
        b_b = (unif(ks[6], (1, 4 * hidden)) + unif(ks[7], (1, 4 * hidden)))
        layers.append((wih_f, whh_f, b_f, wih_b, whh_b, b_b))

    key, k1, k2 = jax.random.split(key, 3)
    fc_scale = 1.0 / jnp.sqrt(2 * hidden)
    fc_w = jax.random.uniform(k1, (2 * hidden, output_dim), jnp.float32,
                              -fc_scale, fc_scale)
    fc_b = jax.random.uniform(k2, (1, output_dim), jnp.float32,
                              -fc_scale, fc_scale)
    return {"lstm": layers, "fc_w": fc_w, "fc_b": fc_b}


# ----------------------------------------------------------------------------
if __name__ == "__main__":
    B, T = 2, 8
    INPUT_DIM, HIDDEN, NUM_LAYERS, OUTPUT_DIM = 16, 32, 2, 4

    key = jax.random.PRNGKey(0)
    key, kx = jax.random.split(key)
    x = jax.random.normal(kx, (B, T, INPUT_DIM), jnp.float32)
    params = make_params(key, INPUT_DIM, HIDDEN, NUM_LAYERS, OUTPUT_DIM)

    ref = bilstm_forward_ref(x, params)

    # f32 MXU operands (use this path on v5e or when exact f32 parity matters)
    out = jax.block_until_ready(bilstm_forward(x, params))
    assert out.shape == (B, OUTPUT_DIM)
    assert jnp.allclose(out, ref, rtol=5e-3, atol=5e-3), "f32 kernel mismatch"
    assert jnp.allclose(jnp.sum(out, axis=1), 1.0, atol=5e-3)

    # bf16 MXU operands (recommended on v6e/v7x); cell state / gate math f32.
    out_bf16 = jax.block_until_ready(
        bilstm_forward(x, params, compute_dtype=jnp.bfloat16))
    assert out_bf16.shape == (B, OUTPUT_DIM)
    assert jnp.allclose(out_bf16, ref, atol=5e-2), "bf16 kernel drifted"

    print("KERNEL_OK")
</pallas_src>

<mosaic_0001>
module attributes {stable_mosaic.version = 11 : i64} {
  func.func @fused_bilstm_kernel(%arg0: memref<16x16xf32, #tpu.memory_space<vmem>>, %arg1: memref<16x256xf32, #tpu.memory_space<vmem>>, %arg2: memref<32x128xf32, #tpu.memory_space<vmem>>, %arg3: memref<32x128xf32, #tpu.memory_space<vmem>>, %arg4: memref<1x256xf32, #tpu.memory_space<vmem>>, %arg5: memref<64x256xf32, #tpu.memory_space<vmem>>, %arg6: memref<32x128xf32, #tpu.memory_space<vmem>>, %arg7: memref<32x128xf32, #tpu.memory_space<vmem>>, %arg8: memref<1x256xf32, #tpu.memory_space<vmem>>, %arg9: memref<64x4xf32, #tpu.memory_space<vmem>>, %arg10: memref<1x4xf32, #tpu.memory_space<vmem>>, %arg11: memref<2x4xf32, #tpu.memory_space<vmem>>, %arg12: memref<16x64xf32, #tpu.memory_space<vmem>>) attributes {dimension_semantics = [], scalar_prefetch = 0 : i64, scratch_operands = 1 : i64, tpu.core_type = #tpu.core_type<tc>} {
    %c0 = arith.constant 0 : index
    %c0_0 = arith.constant 0 : index
    %0 = vector.load %arg0[%c0, %c0_0] : memref<16x16xf32, #tpu.memory_space<vmem>>, vector<16x16xf32>
    %c0_1 = arith.constant 0 : index
    %c0_2 = arith.constant 0 : index
    %1 = vector.load %arg1[%c0_1, %c0_2] : memref<16x256xf32, #tpu.memory_space<vmem>>, vector<16x256xf32>
    %cst = arith.constant dense<0.000000e+00> : vector<16x256xf32>
    %2 = tpu.matmul %0, %1, %cst {dimension_numbers = #tpu.dot_dimension_numbers<[1], [0], [0], [1], [0, 0, 1, 1], [], []>} : vector<16x16xf32>, vector<16x256xf32>, vector<16x256xf32> -> vector<16x256xf32>
    %c0_3 = arith.constant 0 : index
    %c0_4 = arith.constant 0 : index
    %3 = vector.load %arg4[%c0_3, %c0_4] : memref<1x256xf32, #tpu.memory_space<vmem>>, vector<1x256xf32>
    %4 = vector.broadcast %3 : vector<1x256xf32> to vector<16x256xf32>
    %5 = arith.addf %2, %4 : vector<16x256xf32>
    %6 = vector.extract_strided_slice %5 {offsets = [0, 0], sizes = [16, 128], strides = [1, 1]} : vector<16x256xf32> to vector<16x128xf32>
    %7 = vector.extract_strided_slice %5 {offsets = [0, 128], sizes = [16, 128], strides = [1, 1]} : vector<16x256xf32> to vector<16x128xf32>
    %cst_5 = arith.constant 0.000000e+00 : f32
    %8 = vector.broadcast %cst_5 : f32 to vector<2x32xf32>
    %cst_6 = arith.constant 0.000000e+00 : f32
    %9 = vector.broadcast %cst_6 : f32 to vector<2x32xf32>
    %cst_7 = arith.constant 0.000000e+00 : f32
    %10 = vector.broadcast %cst_7 : f32 to vector<2x32xf32>
    %cst_8 = arith.constant 0.000000e+00 : f32
    %11 = vector.broadcast %cst_8 : f32 to vector<2x32xf32>
    %c0_9 = arith.constant 0 : index
    %c0_10 = arith.constant 0 : index
    %12 = vector.load %arg2[%c0_9, %c0_10] : memref<32x128xf32, #tpu.memory_space<vmem>>, vector<32x128xf32>
    %c0_11 = arith.constant 0 : index
    %c0_12 = arith.constant 0 : index
    %13 = vector.load %arg3[%c0_11, %c0_12] : memref<32x128xf32, #tpu.memory_space<vmem>>, vector<32x128xf32>
    %14 = vector.extract_strided_slice %6 {offsets = [0, 0], sizes = [2, 128], strides = [1, 1]} : vector<16x128xf32> to vector<2x128xf32>
    %cst_13 = arith.constant dense<0.000000e+00> : vector<2x128xf32>
    %15 = tpu.matmul %8, %12, %cst_13 {dimension_numbers = #tpu.dot_dimension_numbers<[1], [0], [0], [1], [0, 0, 1, 1], [], []>} : vector<2x32xf32>, vector<32x128xf32>, vector<2x128xf32> -> vector<2x128xf32>
    %16 = arith.addf %14, %15 : vector<2x128xf32>
    %17 = vector.extract_strided_slice %16 {offsets = [0, 0], sizes = [2, 32], strides = [1, 1]} : vector<2x128xf32> to vector<2x32xf32>
    %18 = arith.negf %17 : vector<2x32xf32>
    %19 = math.exp %18 : vector<2x32xf32>
    %cst_14 = arith.constant 1.000000e+00 : f32
    %20 = vector.broadcast %cst_14 : f32 to vector<2x32xf32>
    %21 = arith.addf %20, %19 : vector<2x32xf32>
    %22 = arith.divf %20, %21 : vector<2x32xf32>
    %23 = vector.extract_strided_slice %16 {offsets = [0, 32], sizes = [2, 32], strides = [1, 1]} : vector<2x128xf32> to vector<2x32xf32>
    %24 = arith.negf %23 : vector<2x32xf32>
    %25 = math.exp %24 : vector<2x32xf32>
    %cst_15 = arith.constant 1.000000e+00 : f32
    %26 = vector.broadcast %cst_15 : f32 to vector<2x32xf32>
    %27 = arith.addf %26, %25 : vector<2x32xf32>
    %28 = arith.divf %26, %27 : vector<2x32xf32>
    %29 = vector.extract_strided_slice %16 {offsets = [0, 64], sizes = [2, 32], strides = [1, 1]} : vector<2x128xf32> to vector<2x32xf32>
    %30 = math.tanh %29 : vector<2x32xf32>
    %31 = vector.extract_strided_slice %16 {offsets = [0, 96], sizes = [2, 32], strides = [1, 1]} : vector<2x128xf32> to vector<2x32xf32>
    %32 = arith.negf %31 : vector<2x32xf32>
    %33 = math.exp %32 : vector<2x32xf32>
    %cst_16 = arith.constant 1.000000e+00 : f32
    %34 = vector.broadcast %cst_16 : f32 to vector<2x32xf32>
    %35 = arith.addf %34, %33 : vector<2x32xf32>
    %36 = arith.divf %34, %35 : vector<2x32xf32>
    %37 = arith.mulf %28, %9 : vector<2x32xf32>
    %38 = arith.mulf %22, %30 : vector<2x32xf32>
    %39 = arith.addf %37, %38 : vector<2x32xf32>
    %40 = math.tanh %39 : vector<2x32xf32>
    %41 = arith.mulf %36, %40 : vector<2x32xf32>
    %42 = vector.extract_strided_slice %7 {offsets = [14, 0], sizes = [2, 128], strides = [1, 1]} : vector<16x128xf32> to vector<2x128xf32>
    %cst_17 = arith.constant dense<0.000000e+00> : vector<2x128xf32>
    %43 = tpu.matmul %10, %13, %cst_17 {dimension_numbers = #tpu.dot_dimension_numbers<[1], [0], [0], [1], [0, 0, 1, 1], [], []>} : vector<2x32xf32>, vector<32x128xf32>, vector<2x128xf32> -> vector<2x128xf32>
    %44 = arith.addf %42, %43 : vector<2x128xf32>
    %45 = vector.extract_strided_slice %44 {offsets = [0, 0], sizes = [2, 32], strides = [1, 1]} : vector<2x128xf32> to vector<2x32xf32>
    %46 = arith.negf %45 : vector<2x32xf32>
    %47 = math.exp %46 : vector<2x32xf32>
    %cst_18 = arith.constant 1.000000e+00 : f32
    %48 = vector.broadcast %cst_18 : f32 to vector<2x32xf32>
    %49 = arith.addf %48, %47 : vector<2x32xf32>
    %50 = arith.divf %48, %49 : vector<2x32xf32>
    %51 = vector.extract_strided_slice %44 {offsets = [0, 32], sizes = [2, 32], strides = [1, 1]} : vector<2x128xf32> to vector<2x32xf32>
    %52 = arith.negf %51 : vector<2x32xf32>
    %53 = math.exp %52 : vector<2x32xf32>
    %cst_19 = arith.constant 1.000000e+00 : f32
    %54 = vector.broadcast %cst_19 : f32 to vector<2x32xf32>
    %55 = arith.addf %54, %53 : vector<2x32xf32>
    %56 = arith.divf %54, %55 : vector<2x32xf32>
    %57 = vector.extract_strided_slice %44 {offsets = [0, 64], sizes = [2, 32], strides = [1, 1]} : vector<2x128xf32> to vector<2x32xf32>
    %58 = math.tanh %57 : vector<2x32xf32>
    %59 = vector.extract_strided_slice %44 {offsets = [0, 96], sizes = [2, 32], strides = [1, 1]} : vector<2x128xf32> to vector<2x32xf32>
    %60 = arith.negf %59 : vector<2x32xf32>
    %61 = math.exp %60 : vector<2x32xf32>
    %cst_20 = arith.constant 1.000000e+00 : f32
    %62 = vector.broadcast %cst_20 : f32 to vector<2x32xf32>
    %63 = arith.addf %62, %61 : vector<2x32xf32>
    %64 = arith.divf %62, %63 : vector<2x32xf32>
    %65 = arith.mulf %56, %11 : vector<2x32xf32>
    %66 = arith.mulf %50, %58 : vector<2x32xf32>
    %67 = arith.addf %65, %66 : vector<2x32xf32>
    %68 = math.tanh %67 : vector<2x32xf32>
    %69 = arith.mulf %64, %68 : vector<2x32xf32>
    %c0_21 = arith.constant 0 : index
    %c0_22 = arith.constant 0 : index
    %70 = vector.load %arg12[%c0_21, %c0_22] : memref<16x64xf32, #tpu.memory_space<vmem>>, vector<2x32xf32>
    tpu.vector_store %arg12[%c0_21, %c0_22], %41 {strides = array<i32>} : memref<16x64xf32, #tpu.memory_space<vmem>>, vector<2x32xf32>,
    %c14 = arith.constant 14 : index
    %c32 = arith.constant 32 : index
    %71 = vector.load %arg12[%c14, %c32] : memref<16x64xf32, #tpu.memory_space<vmem>>, vector<2x32xf32>
    tpu.vector_store %arg12[%c14, %c32], %69 {strides = array<i32>} : memref<16x64xf32, #tpu.memory_space<vmem>>, vector<2x32xf32>,
    %72 = vector.extract_strided_slice %6 {offsets = [2, 0], sizes = [2, 128], strides = [1, 1]} : vector<16x128xf32> to vector<2x128xf32>
    %cst_23 = arith.constant dense<0.000000e+00> : vector<2x128xf32>
    %73 = tpu.matmul %41, %12, %cst_23 {dimension_numbers = #tpu.dot_dimension_numbers<[1], [0], [0], [1], [0, 0, 1, 1], [], []>} : vector<2x32xf32>, vector<32x128xf32>, vector<2x128xf32> -> vector<2x128xf32>
    %74 = arith.addf %72, %73 : vector<2x128xf32>
    %75 = vector.extract_strided_slice %74 {offsets = [0, 0], sizes = [2, 32], strides = [1, 1]} : vector<2x128xf32> to vector<2x32xf32>
    %76 = arith.negf %75 : vector<2x32xf32>
    %77 = math.exp %76 : vector<2x32xf32>
    %cst_24 = arith.constant 1.000000e+00 : f32
    %78 = vector.broadcast %cst_24 : f32 to vector<2x32xf32>
    %79 = arith.addf %78, %77 : vector<2x32xf32>
    %80 = arith.divf %78, %79 : vector<2x32xf32>
    %81 = vector.extract_strided_slice %74 {offsets = [0, 32], sizes = [2, 32], strides = [1, 1]} : vector<2x128xf32> to vector<2x32xf32>
    %82 = arith.negf %81 : vector<2x32xf32>
    %83 = math.exp %82 : vector<2x32xf32>
    %cst_25 = arith.constant 1.000000e+00 : f32
    %84 = vector.broadcast %cst_25 : f32 to vector<2x32xf32>
    %85 = arith.addf %84, %83 : vector<2x32xf32>
    %86 = arith.divf %84, %85 : vector<2x32xf32>
    %87 = vector.extract_strided_slice %74 {offsets = [0, 64], sizes = [2, 32], strides = [1, 1]} : vector<2x128xf32> to vector<2x32xf32>
    %88 = math.tanh %87 : vector<2x32xf32>
    %89 = vector.extract_strided_slice %74 {offsets = [0, 96], sizes = [2, 32], strides = [1, 1]} : vector<2x128xf32> to vector<2x32xf32>
    %90 = arith.negf %89 : vector<2x32xf32>
    %91 = math.exp %90 : vector<2x32xf32>
    %cst_26 = arith.constant 1.000000e+00 : f32
    %92 = vector.broadcast %cst_26 : f32 to vector<2x32xf32>
    %93 = arith.addf %92, %91 : vector<2x32xf32>
    %94 = arith.divf %92, %93 : vector<2x32xf32>
    %95 = arith.mulf %86, %39 : vector<2x32xf32>
    %96 = arith.mulf %80, %88 : vector<2x32xf32>
    %97 = arith.addf %95, %96 : vector<2x32xf32>
    %98 = math.tanh %97 : vector<2x32xf32>
    %99 = arith.mulf %94, %98 : vector<2x32xf32>
    %100 = vector.extract_strided_slice %7 {offsets = [12, 0], sizes = [2, 128], strides = [1, 1]} : vector<16x128xf32> to vector<2x128xf32>
    %cst_27 = arith.constant dense<0.000000e+00> : vector<2x128xf32>
    %101 = tpu.matmul %69, %13, %cst_27 {dimension_numbers = #tpu.dot_dimension_numbers<[1], [0], [0], [1], [0, 0, 1, 1], [], []>} : vector<2x32xf32>, vector<32x128xf32>, vector<2x128xf32> -> vector<2x128xf32>
    %102 = arith.addf %100, %101 : vector<2x128xf32>
    %103 = vector.extract_strided_slice %102 {offsets = [0, 0], sizes = [2, 32], strides = [1, 1]} : vector<2x128xf32> to vector<2x32xf32>
    %104 = arith.negf %103 : vector<2x32xf32>
    %105 = math.exp %104 : vector<2x32xf32>
    %cst_28 = arith.constant 1.000000e+00 : f32
    %106 = vector.broadcast %cst_28 : f32 to vector<2x32xf32>
    %107 = arith.addf %106, %105 : vector<2x32xf32>
    %108 = arith.divf %106, %107 : vector<2x32xf32>
    %109 = vector.extract_strided_slice %102 {offsets = [0, 32], sizes = [2, 32], strides = [1, 1]} : vector<2x128xf32> to vector<2x32xf32>
    %110 = arith.negf %109 : vector<2x32xf32>
    %111 = math.exp %110 : vector<2x32xf32>
    %cst_29 = arith.constant 1.000000e+00 : f32
    %112 = vector.broadcast %cst_29 : f32 to vector<2x32xf32>
    %113 = arith.addf %112, %111 : vector<2x32xf32>
    %114 = arith.divf %112, %113 : vector<2x32xf32>
    %115 = vector.extract_strided_slice %102 {offsets = [0, 64], sizes = [2, 32], strides = [1, 1]} : vector<2x128xf32> to vector<2x32xf32>
    %116 = math.tanh %115 : vector<2x32xf32>
    %117 = vector.extract_strided_slice %102 {offsets = [0, 96], sizes = [2, 32], strides = [1, 1]} : vector<2x128xf32> to vector<2x32xf32>
    %118 = arith.negf %117 : vector<2x32xf32>
    %119 = math.exp %118 : vector<2x32xf32>
    %cst_30 = arith.constant 1.000000e+00 : f32
    %120 = vector.broadcast %cst_30 : f32 to vector<2x32xf32>
    %121 = arith.addf %120, %119 : vector<2x32xf32>
    %122 = arith.divf %120, %121 : vector<2x32xf32>
    %123 = arith.mulf %114, %67 : vector<2x32xf32>
    %124 = arith.mulf %108, %116 : vector<2x32xf32>
    %125 = arith.addf %123, %124 : vector<2x32xf32>
    %126 = math.tanh %125 : vector<2x32xf32>
    %127 = arith.mulf %122, %126 : vector<2x32xf32>
    %c2 = arith.constant 2 : index
    %c0_31 = arith.constant 0 : index
    %128 = vector.load %arg12[%c2, %c0_31] : memref<16x64xf32, #tpu.memory_space<vmem>>, vector<2x32xf32>
    tpu.vector_store %arg12[%c2, %c0_31], %99 {strides = array<i32>} : memref<16x64xf32, #tpu.memory_space<vmem>>, vector<2x32xf32>,
    %c12 = arith.constant 12 : index
    %c32_32 = arith.constant 32 : index
    %129 = vector.load %arg12[%c12, %c32_32] : memref<16x64xf32, #tpu.memory_space<vmem>>, vector<2x32xf32>
    tpu.vector_store %arg12[%c12, %c32_32], %127 {strides = array<i32>} : memref<16x64xf32, #tpu.memory_space<vmem>>, vector<2x32xf32>,
    %130 = vector.extract_strided_slice %6 {offsets = [4, 0], sizes = [2, 128], strides = [1, 1]} : vector<16x128xf32> to vector<2x128xf32>
    %cst_33 = arith.constant dense<0.000000e+00> : vector<2x128xf32>
    %131 = tpu.matmul %99, %12, %cst_33 {dimension_numbers = #tpu.dot_dimension_numbers<[1], [0], [0], [1], [0, 0, 1, 1], [], []>} : vector<2x32xf32>, vector<32x128xf32>, vector<2x128xf32> -> vector<2x128xf32>
    %132 = arith.addf %130, %131 : vector<2x128xf32>
    %133 = vector.extract_strided_slice %132 {offsets = [0, 0], sizes = [2, 32], strides = [1, 1]} : vector<2x128xf32> to vector<2x32xf32>
    %134 = arith.negf %133 : vector<2x32xf32>
    %135 = math.exp %134 : vector<2x32xf32>
    %cst_34 = arith.constant 1.000000e+00 : f32
    %136 = vector.broadcast %cst_34 : f32 to vector<2x32xf32>
    %137 = arith.addf %136, %135 : vector<2x32xf32>
    %138 = arith.divf %136, %137 : vector<2x32xf32>
    %139 = vector.extract_strided_slice %132 {offsets = [0, 32], sizes = [2, 32], strides = [1, 1]} : vector<2x128xf32> to vector<2x32xf32>
    %140 = arith.negf %139 : vector<2x32xf32>
    %141 = math.exp %140 : vector<2x32xf32>
    %cst_35 = arith.constant 1.000000e+00 : f32
    %142 = vector.broadcast %cst_35 : f32 to vector<2x32xf32>
    %143 = arith.addf %142, %141 : vector<2x32xf32>
    %144 = arith.divf %142, %143 : vector<2x32xf32>
    %145 = vector.extract_strided_slice %132 {offsets = [0, 64], sizes = [2, 32], strides = [1, 1]} : vector<2x128xf32> to vector<2x32xf32>
    %146 = math.tanh %145 : vector<2x32xf32>
    %147 = vector.extract_strided_slice %132 {offsets = [0, 96], sizes = [2, 32], strides = [1, 1]} : vector<2x128xf32> to vector<2x32xf32>
    %148 = arith.negf %147 : vector<2x32xf32>
    %149 = math.exp %148 : vector<2x32xf32>
    %cst_36 = arith.constant 1.000000e+00 : f32
    %150 = vector.broadcast %cst_36 : f32 to vector<2x32xf32>
    %151 = arith.addf %150, %149 : vector<2x32xf32>
    %152 = arith.divf %150, %151 : vector<2x32xf32>
    %153 = arith.mulf %144, %97 : vector<2x32xf32>
    %154 = arith.mulf %138, %146 : vector<2x32xf32>
    %155 = arith.addf %153, %154 : vector<2x32xf32>
    %156 = math.tanh %155 : vector<2x32xf32>
    %157 = arith.mulf %152, %156 : vector<2x32xf32>
    %158 = vector.extract_strided_slice %7 {offsets = [10, 0], sizes = [2, 128], strides = [1, 1]} : vector<16x128xf32> to vector<2x128xf32>
    %cst_37 = arith.constant dense<0.000000e+00> : vector<2x128xf32>
    %159 = tpu.matmul %127, %13, %cst_37 {dimension_numbers = #tpu.dot_dimension_numbers<[1], [0], [0], [1], [0, 0, 1, 1], [], []>} : vector<2x32xf32>, vector<32x128xf32>, vector<2x128xf32> -> vector<2x128xf32>
    %160 = arith.addf %158, %159 : vector<2x128xf32>
    %161 = vector.extract_strided_slice %160 {offsets = [0, 0], sizes = [2, 32], strides = [1, 1]} : vector<2x128xf32> to vector<2x32xf32>
    %162 = arith.negf %161 : vector<2x32xf32>
    %163 = math.exp %162 : vector<2x32xf32>
    %cst_38 = arith.constant 1.000000e+00 : f32
    %164 = vector.broadcast %cst_38 : f32 to vector<2x32xf32>
    %165 = arith.addf %164, %163 : vector<2x32xf32>
    %166 = arith.divf %164, %165 : vector<2x32xf32>
    %167 = vector.extract_strided_slice %160 {offsets = [0, 32], sizes = [2, 32], strides = [1, 1]} : vector<2x128xf32> to vector<2x32xf32>
    %168 = arith.negf %167 : vector<2x32xf32>
    %169 = math.exp %168 : vector<2x32xf32>
    %cst_39 = arith.constant 1.000000e+00 : f32
    %170 = vector.broadcast %cst_39 : f32 to vector<2x32xf32>
    %171 = arith.addf %170, %169 : vector<2x32xf32>
    %172 = arith.divf %170, %171 : vector<2x32xf32>
    %173 = vector.extract_strided_slice %160 {offsets = [0, 64], sizes = [2, 32], strides = [1, 1]} : vector<2x128xf32> to vector<2x32xf32>
    %174 = math.tanh %173 : vector<2x32xf32>
    %175 = vector.extract_strided_slice %160 {offsets = [0, 96], sizes = [2, 32], strides = [1, 1]} : vector<2x128xf32> to vector<2x32xf32>
    %176 = arith.negf %175 : vector<2x32xf32>
    %177 = math.exp %176 : vector<2x32xf32>
    %cst_40 = arith.constant 1.000000e+00 : f32
    %178 = vector.broadcast %cst_40 : f32 to vector<2x32xf32>
    %179 = arith.addf %178, %177 : vector<2x32xf32>
    %180 = arith.divf %178, %179 : vector<2x32xf32>
    %181 = arith.mulf %172, %125 : vector<2x32xf32>
    %182 = arith.mulf %166, %174 : vector<2x32xf32>
    %183 = arith.addf %181, %182 : vector<2x32xf32>
    %184 = math.tanh %183 : vector<2x32xf32>
    %185 = arith.mulf %180, %184 : vector<2x32xf32>
    %c4 = arith.constant 4 : index
    %c0_41 = arith.constant 0 : index
    %186 = vector.load %arg12[%c4, %c0_41] : memref<16x64xf32, #tpu.memory_space<vmem>>, vector<2x32xf32>
    tpu.vector_store %arg12[%c4, %c0_41], %157 {strides = array<i32>} : memref<16x64xf32, #tpu.memory_space<vmem>>, vector<2x32xf32>,
    %c10 = arith.constant 10 : index
    %c32_42 = arith.constant 32 : index
    %187 = vector.load %arg12[%c10, %c32_42] : memref<16x64xf32, #tpu.memory_space<vmem>>, vector<2x32xf32>
    tpu.vector_store %arg12[%c10, %c32_42], %185 {strides = array<i32>} : memref<16x64xf32, #tpu.memory_space<vmem>>, vector<2x32xf32>,
    %188 = vector.extract_strided_slice %6 {offsets = [6, 0], sizes = [2, 128], strides = [1, 1]} : vector<16x128xf32> to vector<2x128xf32>
    %cst_43 = arith.constant dense<0.000000e+00> : vector<2x128xf32>
    %189 = tpu.matmul %157, %12, %cst_43 {dimension_numbers = #tpu.dot_dimension_numbers<[1], [0], [0], [1], [0, 0, 1, 1], [], []>} : vector<2x32xf32>, vector<32x128xf32>, vector<2x128xf32> -> vector<2x128xf32>
    %190 = arith.addf %188, %189 : vector<2x128xf32>
    %191 = vector.extract_strided_slice %190 {offsets = [0, 0], sizes = [2, 32], strides = [1, 1]} : vector<2x128xf32> to vector<2x32xf32>
    %192 = arith.negf %191 : vector<2x32xf32>
    %193 = math.exp %192 : vector<2x32xf32>
    %cst_44 = arith.constant 1.000000e+00 : f32
    %194 = vector.broadcast %cst_44 : f32 to vector<2x32xf32>
    %195 = arith.addf %194, %193 : vector<2x32xf32>
    %196 = arith.divf %194, %195 : vector<2x32xf32>
    %197 = vector.extract_strided_slice %190 {offsets = [0, 32], sizes = [2, 32], strides = [1, 1]} : vector<2x128xf32> to vector<2x32xf32>
    %198 = arith.negf %197 : vector<2x32xf32>
    %199 = math.exp %198 : vector<2x32xf32>
    %cst_45 = arith.constant 1.000000e+00 : f32
    %200 = vector.broadcast %cst_45 : f32 to vector<2x32xf32>
    %201 = arith.addf %200, %199 : vector<2x32xf32>
    %202 = arith.divf %200, %201 : vector<2x32xf32>
    %203 = vector.extract_strided_slice %190 {offsets = [0, 64], sizes = [2, 32], strides = [1, 1]} : vector<2x128xf32> to vector<2x32xf32>
    %204 = math.tanh %203 : vector<2x32xf32>
    %205 = vector.extract_strided_slice %190 {offsets = [0, 96], sizes = [2, 32], strides = [1, 1]} : vector<2x128xf32> to vector<2x32xf32>
    %206 = arith.negf %205 : vector<2x32xf32>
    %207 = math.exp %206 : vector<2x32xf32>
    %cst_46 = arith.constant 1.000000e+00 : f32
    %208 = vector.broadcast %cst_46 : f32 to vector<2x32xf32>
    %209 = arith.addf %208, %207 : vector<2x32xf32>
    %210 = arith.divf %208, %209 : vector<2x32xf32>
    %211 = arith.mulf %202, %155 : vector<2x32xf32>
    %212 = arith.mulf %196, %204 : vector<2x32xf32>
    %213 = arith.addf %211, %212 : vector<2x32xf32>
    %214 = math.tanh %213 : vector<2x32xf32>
    %215 = arith.mulf %210, %214 : vector<2x32xf32>
    %216 = vector.extract_strided_slice %7 {offsets = [8, 0], sizes = [2, 128], strides = [1, 1]} : vector<16x128xf32> to vector<2x128xf32>
    %cst_47 = arith.constant dense<0.000000e+00> : vector<2x128xf32>
    %217 = tpu.matmul %185, %13, %cst_47 {dimension_numbers = #tpu.dot_dimension_numbers<[1], [0], [0], [1], [0, 0, 1, 1], [], []>} : vector<2x32xf32>, vector<32x128xf32>, vector<2x128xf32> -> vector<2x128xf32>
    %218 = arith.addf %216, %217 : vector<2x128xf32>
    %219 = vector.extract_strided_slice %218 {offsets = [0, 0], sizes = [2, 32], strides = [1, 1]} : vector<2x128xf32> to vector<2x32xf32>
    %220 = arith.negf %219 : vector<2x32xf32>
    %221 = math.exp %220 : vector<2x32xf32>
    %cst_48 = arith.constant 1.000000e+00 : f32
    %222 = vector.broadcast %cst_48 : f32 to vector<2x32xf32>
    %223 = arith.addf %222, %221 : vector<2x32xf32>
    %224 = arith.divf %222, %223 : vector<2x32xf32>
    %225 = vector.extract_strided_slice %218 {offsets = [0, 32], sizes = [2, 32], strides = [1, 1]} : vector<2x128xf32> to vector<2x32xf32>
    %226 = arith.negf %225 : vector<2x32xf32>
    %227 = math.exp %226 : vector<2x32xf32>
    %cst_49 = arith.constant 1.000000e+00 : f32
    %228 = vector.broadcast %cst_49 : f32 to vector<2x32xf32>
    %229 = arith.addf %228, %227 : vector<2x32xf32>
    %230 = arith.divf %228, %229 : vector<2x32xf32>
    %231 = vector.extract_strided_slice %218 {offsets = [0, 64], sizes = [2, 32], strides = [1, 1]} : vector<2x128xf32> to vector<2x32xf32>
    %232 = math.tanh %231 : vector<2x32xf32>
    %233 = vector.extract_strided_slice %218 {offsets = [0, 96], sizes = [2, 32], strides = [1, 1]} : vector<2x128xf32> to vector<2x32xf32>
    %234 = arith.negf %233 : vector<2x32xf32>
    %235 = math.exp %234 : vector<2x32xf32>
    %cst_50 = arith.constant 1.000000e+00 : f32
    %236 = vector.broadcast %cst_50 : f32 to vector<2x32xf32>
    %237 = arith.addf %236, %235 : vector<2x32xf32>
    %238 = arith.divf %236, %237 : vector<2x32xf32>
    %239 = arith.mulf %230, %183 : vector<2x32xf32>
    %240 = arith.mulf %224, %232 : vector<2x32xf32>
    %241 = arith.addf %239, %240 : vector<2x32xf32>
    %242 = math.tanh %241 : vector<2x32xf32>
    %243 = arith.mulf %238, %242 : vector<2x32xf32>
    %c6 = arith.constant 6 : index
    %c0_51 = arith.constant 0 : index
    %244 = vector.load %arg12[%c6, %c0_51] : memref<16x64xf32, #tpu.memory_space<vmem>>, vector<2x32xf32>
    tpu.vector_store %arg12[%c6, %c0_51], %215 {strides = array<i32>} : memref<16x64xf32, #tpu.memory_space<vmem>>, vector<2x32xf32>,
    %c8 = arith.constant 8 : index
    %c32_52 = arith.constant 32 : index
    %245 = vector.load %arg12[%c8, %c32_52] : memref<16x64xf32, #tpu.memory_space<vmem>>, vector<2x32xf32>
    tpu.vector_store %arg12[%c8, %c32_52], %243 {strides = array<i32>} : memref<16x64xf32, #tpu.memory_space<vmem>>, vector<2x32xf32>,
    %246 = vector.extract_strided_slice %6 {offsets = [8, 0], sizes = [2, 128], strides = [1, 1]} : vector<16x128xf32> to vector<2x128xf32>
    %cst_53 = arith.constant dense<0.000000e+00> : vector<2x128xf32>
    %247 = tpu.matmul %215, %12, %cst_53 {dimension_numbers = #tpu.dot_dimension_numbers<[1], [0], [0], [1], [0, 0, 1, 1], [], []>} : vector<2x32xf32>, vector<32x128xf32>, vector<2x128xf32> -> vector<2x128xf32>
    %248 = arith.addf %246, %247 : vector<2x128xf32>
    %249 = vector.extract_strided_slice %248 {offsets = [0, 0], sizes = [2, 32], strides = [1, 1]} : vector<2x128xf32> to vector<2x32xf32>
    %250 = arith.negf %249 : vector<2x32xf32>
    %251 = math.exp %250 : vector<2x32xf32>
    %cst_54 = arith.constant 1.000000e+00 : f32
    %252 = vector.broadcast %cst_54 : f32 to vector<2x32xf32>
    %253 = arith.addf %252, %251 : vector<2x32xf32>
    %254 = arith.divf %252, %253 : vector<2x32xf32>
    %255 = vector.extract_strided_slice %248 {offsets = [0, 32], sizes = [2, 32], strides = [1, 1]} : vector<2x128xf32> to vector<2x32xf32>
    %256 = arith.negf %255 : vector<2x32xf32>
    %257 = math.exp %256 : vector<2x32xf32>
    %cst_55 = arith.constant 1.000000e+00 : f32
    %258 = vector.broadcast %cst_55 : f32 to vector<2x32xf32>
    %259 = arith.addf %258, %257 : vector<2x32xf32>
    %260 = arith.divf %258, %259 : vector<2x32xf32>
    %261 = vector.extract_strided_slice %248 {offsets = [0, 64], sizes = [2, 32], strides = [1, 1]} : vector<2x128xf32> to vector<2x32xf32>
    %262 = math.tanh %261 : vector<2x32xf32>
    %263 = vector.extract_strided_slice %248 {offsets = [0, 96], sizes = [2, 32], strides = [1, 1]} : vector<2x128xf32> to vector<2x32xf32>
    %264 = arith.negf %263 : vector<2x32xf32>
    %265 = math.exp %264 : vector<2x32xf32>
    %cst_56 = arith.constant 1.000000e+00 : f32
    %266 = vector.broadcast %cst_56 : f32 to vector<2x32xf32>
    %267 = arith.addf %266, %265 : vector<2x32xf32>
    %268 = arith.divf %266, %267 : vector<2x32xf32>
    %269 = arith.mulf %260, %213 : vector<2x32xf32>
    %270 = arith.mulf %254, %262 : vector<2x32xf32>
    %271 = arith.addf %269, %270 : vector<2x32xf32>
    %272 = math.tanh %271 : vector<2x32xf32>
    %273 = arith.mulf %268, %272 : vector<2x32xf32>
    %274 = vector.extract_strided_slice %7 {offsets = [6, 0], sizes = [2, 128], strides = [1, 1]} : vector<16x128xf32> to vector<2x128xf32>
    %cst_57 = arith.constant dense<0.000000e+00> : vector<2x128xf32>
    %275 = tpu.matmul %243, %13, %cst_57 {dimension_numbers = #tpu.dot_dimension_numbers<[1], [0], [0], [1], [0, 0, 1, 1], [], []>} : vector<2x32xf32>, vector<32x128xf32>, vector<2x128xf32> -> vector<2x128xf32>
    %276 = arith.addf %274, %275 : vector<2x128xf32>
    %277 = vector.extract_strided_slice %276 {offsets = [0, 0], sizes = [2, 32], strides = [1, 1]} : vector<2x128xf32> to vector<2x32xf32>
    %278 = arith.negf %277 : vector<2x32xf32>
    %279 = math.exp %278 : vector<2x32xf32>
    %cst_58 = arith.constant 1.000000e+00 : f32
    %280 = vector.broadcast %cst_58 : f32 to vector<2x32xf32>
    %281 = arith.addf %280, %279 : vector<2x32xf32>
    %282 = arith.divf %280, %281 : vector<2x32xf32>
    %283 = vector.extract_strided_slice %276 {offsets = [0, 32], sizes = [2, 32], strides = [1, 1]} : vector<2x128xf32> to vector<2x32xf32>
    %284 = arith.negf %283 : vector<2x32xf32>
    %285 = math.exp %284 : vector<2x32xf32>
    %cst_59 = arith.constant 1.000000e+00 : f32
    %286 = vector.broadcast %cst_59 : f32 to vector<2x32xf32>
    %287 = arith.addf %286, %285 : vector<2x32xf32>
    %288 = arith.divf %286, %287 : vector<2x32xf32>
    %289 = vector.extract_strided_slice %276 {offsets = [0, 64], sizes = [2, 32], strides = [1, 1]} : vector<2x128xf32> to vector<2x32xf32>
    %290 = math.tanh %289 : vector<2x32xf32>
    %291 = vector.extract_strided_slice %276 {offsets = [0, 96], sizes = [2, 32], strides = [1, 1]} : vector<2x128xf32> to vector<2x32xf32>
    %292 = arith.negf %291 : vector<2x32xf32>
    %293 = math.exp %292 : vector<2x32xf32>
    %cst_60 = arith.constant 1.000000e+00 : f32
    %294 = vector.broadcast %cst_60 : f32 to vector<2x32xf32>
    %295 = arith.addf %294, %293 : vector<2x32xf32>
    %296 = arith.divf %294, %295 : vector<2x32xf32>
    %297 = arith.mulf %288, %241 : vector<2x32xf32>
    %298 = arith.mulf %282, %290 : vector<2x32xf32>
    %299 = arith.addf %297, %298 : vector<2x32xf32>
    %300 = math.tanh %299 : vector<2x32xf32>
    %301 = arith.mulf %296, %300 : vector<2x32xf32>
    %c8_61 = arith.constant 8 : index
    %c0_62 = arith.constant 0 : index
    %302 = vector.load %arg12[%c8_61, %c0_62] : memref<16x64xf32, #tpu.memory_space<vmem>>, vector<2x32xf32>
    tpu.vector_store %arg12[%c8_61, %c0_62], %273 {strides = array<i32>} : memref<16x64xf32, #tpu.memory_space<vmem>>, vector<2x32xf32>,
    %c6_63 = arith.constant 6 : index
    %c32_64 = arith.constant 32 : index
    %303 = vector.load %arg12[%c6_63, %c32_64] : memref<16x64xf32, #tpu.memory_space<vmem>>, vector<2x32xf32>
    tpu.vector_store %arg12[%c6_63, %c32_64], %301 {strides = array<i32>} : memref<16x64xf32, #tpu.memory_space<vmem>>, vector<2x32xf32>,
    %304 = vector.extract_strided_slice %6 {offsets = [10, 0], sizes = [2, 128], strides = [1, 1]} : vector<16x128xf32> to vector<2x128xf32>
    %cst_65 = arith.constant dense<0.000000e+00> : vector<2x128xf32>
    %305 = tpu.matmul %273, %12, %cst_65 {dimension_numbers = #tpu.dot_dimension_numbers<[1], [0], [0], [1], [0, 0, 1, 1], [], []>} : vector<2x32xf32>, vector<32x128xf32>, vector<2x128xf32> -> vector<2x128xf32>
    %306 = arith.addf %304, %305 : vector<2x128xf32>
    %307 = vector.extract_strided_slice %306 {offsets = [0, 0], sizes = [2, 32], strides = [1, 1]} : vector<2x128xf32> to vector<2x32xf32>
    %308 = arith.negf %307 : vector<2x32xf32>
    %309 = math.exp %308 : vector<2x32xf32>
    %cst_66 = arith.constant 1.000000e+00 : f32
    %310 = vector.broadcast %cst_66 : f32 to vector<2x32xf32>
    %311 = arith.addf %310, %309 : vector<2x32xf32>
    %312 = arith.divf %310, %311 : vector<2x32xf32>
    %313 = vector.extract_strided_slice %306 {offsets = [0, 32], sizes = [2, 32], strides = [1, 1]} : vector<2x128xf32> to vector<2x32xf32>
    %314 = arith.negf %313 : vector<2x32xf32>
    %315 = math.exp %314 : vector<2x32xf32>
    %cst_67 = arith.constant 1.000000e+00 : f32
    %316 = vector.broadcast %cst_67 : f32 to vector<2x32xf32>
    %317 = arith.addf %316, %315 : vector<2x32xf32>
    %318 = arith.divf %316, %317 : vector<2x32xf32>
    %319 = vector.extract_strided_slice %306 {offsets = [0, 64], sizes = [2, 32], strides = [1, 1]} : vector<2x128xf32> to vector<2x32xf32>
    %320 = math.tanh %319 : vector<2x32xf32>
    %321 = vector.extract_strided_slice %306 {offsets = [0, 96], sizes = [2, 32], strides = [1, 1]} : vector<2x128xf32> to vector<2x32xf32>
    %322 = arith.negf %321 : vector<2x32xf32>
    %323 = math.exp %322 : vector<2x32xf32>
    %cst_68 = arith.constant 1.000000e+00 : f32
    %324 = vector.broadcast %cst_68 : f32 to vector<2x32xf32>
    %325 = arith.addf %324, %323 : vector<2x32xf32>
    %326 = arith.divf %324, %325 : vector<2x32xf32>
    %327 = arith.mulf %318, %271 : vector<2x32xf32>
    %328 = arith.mulf %312, %320 : vector<2x32xf32>
    %329 = arith.addf %327, %328 : vector<2x32xf32>
    %330 = math.tanh %329 : vector<2x32xf32>
    %331 = arith.mulf %326, %330 : vector<2x32xf32>
    %332 = vector.extract_strided_slice %7 {offsets = [4, 0], sizes = [2, 128], strides = [1, 1]} : vector<16x128xf32> to vector<2x128xf32>
    %cst_69 = arith.constant dense<0.000000e+00> : vector<2x128xf32>
    %333 = tpu.matmul %301, %13, %cst_69 {dimension_numbers = #tpu.dot_dimension_numbers<[1], [0], [0], [1], [0, 0, 1, 1], [], []>} : vector<2x32xf32>, vector<32x128xf32>, vector<2x128xf32> -> vector<2x128xf32>
    %334 = arith.addf %332, %333 : vector<2x128xf32>
    %335 = vector.extract_strided_slice %334 {offsets = [0, 0], sizes = [2, 32], strides = [1, 1]} : vector<2x128xf32> to vector<2x32xf32>
    %336 = arith.negf %335 : vector<2x32xf32>
    %337 = math.exp %336 : vector<2x32xf32>
    %cst_70 = arith.constant 1.000000e+00 : f32
    %338 = vector.broadcast %cst_70 : f32 to vector<2x32xf32>
    %339 = arith.addf %338, %337 : vector<2x32xf32>
    %340 = arith.divf %338, %339 : vector<2x32xf32>
    %341 = vector.extract_strided_slice %334 {offsets = [0, 32], sizes = [2, 32], strides = [1, 1]} : vector<2x128xf32> to vector<2x32xf32>
    %342 = arith.negf %341 : vector<2x32xf32>
    %343 = math.exp %342 : vector<2x32xf32>
    %cst_71 = arith.constant 1.000000e+00 : f32
    %344 = vector.broadcast %cst_71 : f32 to vector<2x32xf32>
    %345 = arith.addf %344, %343 : vector<2x32xf32>
    %346 = arith.divf %344, %345 : vector<2x32xf32>
    %347 = vector.extract_strided_slice %334 {offsets = [0, 64], sizes = [2, 32], strides = [1, 1]} : vector<2x128xf32> to vector<2x32xf32>
    %348 = math.tanh %347 : vector<2x32xf32>
    %349 = vector.extract_strided_slice %334 {offsets = [0, 96], sizes = [2, 32], strides = [1, 1]} : vector<2x128xf32> to vector<2x32xf32>
    %350 = arith.negf %349 : vector<2x32xf32>
    %351 = math.exp %350 : vector<2x32xf32>
    %cst_72 = arith.constant 1.000000e+00 : f32
    %352 = vector.broadcast %cst_72 : f32 to vector<2x32xf32>
    %353 = arith.addf %352, %351 : vector<2x32xf32>
    %354 = arith.divf %352, %353 : vector<2x32xf32>
    %355 = arith.mulf %346, %299 : vector<2x32xf32>
    %356 = arith.mulf %340, %348 : vector<2x32xf32>
    %357 = arith.addf %355, %356 : vector<2x32xf32>
    %358 = math.tanh %357 : vector<2x32xf32>
    %359 = arith.mulf %354, %358 : vector<2x32xf32>
    %c10_73 = arith.constant 10 : index
    %c0_74 = arith.constant 0 : index
    %360 = vector.load %arg12[%c10_73, %c0_74] : memref<16x64xf32, #tpu.memory_space<vmem>>, vector<2x32xf32>
    tpu.vector_store %arg12[%c10_73, %c0_74], %331 {strides = array<i32>} : memref<16x64xf32, #tpu.memory_space<vmem>>, vector<2x32xf32>,
    %c4_75 = arith.constant 4 : index
    %c32_76 = arith.constant 32 : index
    %361 = vector.load %arg12[%c4_75, %c32_76] : memref<16x64xf32, #tpu.memory_space<vmem>>, vector<2x32xf32>
    tpu.vector_store %arg12[%c4_75, %c32_76], %359 {strides = array<i32>} : memref<16x64xf32, #tpu.memory_space<vmem>>, vector<2x32xf32>,
    %362 = vector.extract_strided_slice %6 {offsets = [12, 0], sizes = [2, 128], strides = [1, 1]} : vector<16x128xf32> to vector<2x128xf32>
    %cst_77 = arith.constant dense<0.000000e+00> : vector<2x128xf32>
    %363 = tpu.matmul %331, %12, %cst_77 {dimension_numbers = #tpu.dot_dimension_numbers<[1], [0], [0], [1], [0, 0, 1, 1], [], []>} : vector<2x32xf32>, vector<32x128xf32>, vector<2x128xf32> -> vector<2x128xf32>
    %364 = arith.addf %362, %363 : vector<2x128xf32>
    %365 = vector.extract_strided_slice %364 {offsets = [0, 0], sizes = [2, 32], strides = [1, 1]} : vector<2x128xf32> to vector<2x32xf32>
    %366 = arith.negf %365 : vector<2x32xf32>
    %367 = math.exp %366 : vector<2x32xf32>
    %cst_78 = arith.constant 1.000000e+00 : f32
    %368 = vector.broadcast %cst_78 : f32 to vector<2x32xf32>
    %369 = arith.addf %368, %367 : vector<2x32xf32>
    %370 = arith.divf %368, %369 : vector<2x32xf32>
    %371 = vector.extract_strided_slice %364 {offsets = [0, 32], sizes = [2, 32], strides = [1, 1]} : vector<2x128xf32> to vector<2x32xf32>
    %372 = arith.negf %371 : vector<2x32xf32>
    %373 = math.exp %372 : vector<2x32xf32>
    %cst_79 = arith.constant 1.000000e+00 : f32
    %374 = vector.broadcast %cst_79 : f32 to vector<2x32xf32>
    %375 = arith.addf %374, %373 : vector<2x32xf32>
    %376 = arith.divf %374, %375 : vector<2x32xf32>
    %377 = vector.extract_strided_slice %364 {offsets = [0, 64], sizes = [2, 32], strides = [1, 1]} : vector<2x128xf32> to vector<2x32xf32>
    %378 = math.tanh %377 : vector<2x32xf32>
    %379 = vector.extract_strided_slice %364 {offsets = [0, 96], sizes = [2, 32], strides = [1, 1]} : vector<2x128xf32> to vector<2x32xf32>
    %380 = arith.negf %379 : vector<2x32xf32>
    %381 = math.exp %380 : vector<2x32xf32>
    %cst_80 = arith.constant 1.000000e+00 : f32
    %382 = vector.broadcast %cst_80 : f32 to vector<2x32xf32>
    %383 = arith.addf %382, %381 : vector<2x32xf32>
    %384 = arith.divf %382, %383 : vector<2x32xf32>
    %385 = arith.mulf %376, %329 : vector<2x32xf32>
    %386 = arith.mulf %370, %378 : vector<2x32xf32>
    %387 = arith.addf %385, %386 : vector<2x32xf32>
    %388 = math.tanh %387 : vector<2x32xf32>
    %389 = arith.mulf %384, %388 : vector<2x32xf32>
    %390 = vector.extract_strided_slice %7 {offsets = [2, 0], sizes = [2, 128], strides = [1, 1]} : vector<16x128xf32> to vector<2x128xf32>
    %cst_81 = arith.constant dense<0.000000e+00> : vector<2x128xf32>
    %391 = tpu.matmul %359, %13, %cst_81 {dimension_numbers = #tpu.dot_dimension_numbers<[1], [0], [0], [1], [0, 0, 1, 1], [], []>} : vector<2x32xf32>, vector<32x128xf32>, vector<2x128xf32> -> vector<2x128xf32>
    %392 = arith.addf %390, %391 : vector<2x128xf32>
    %393 = vector.extract_strided_slice %392 {offsets = [0, 0], sizes = [2, 32], strides = [1, 1]} : vector<2x128xf32> to vector<2x32xf32>
    %394 = arith.negf %393 : vector<2x32xf32>
    %395 = math.exp %394 : vector<2x32xf32>
    %cst_82 = arith.constant 1.000000e+00 : f32
    %396 = vector.broadcast %cst_82 : f32 to vector<2x32xf32>
    %397 = arith.addf %396, %395 : vector<2x32xf32>
    %398 = arith.divf %396, %397 : vector<2x32xf32>
    %399 = vector.extract_strided_slice %392 {offsets = [0, 32], sizes = [2, 32], strides = [1, 1]} : vector<2x128xf32> to vector<2x32xf32>
    %400 = arith.negf %399 : vector<2x32xf32>
    %401 = math.exp %400 : vector<2x32xf32>
    %cst_83 = arith.constant 1.000000e+00 : f32
    %402 = vector.broadcast %cst_83 : f32 to vector<2x32xf32>
    %403 = arith.addf %402, %401 : vector<2x32xf32>
    %404 = arith.divf %402, %403 : vector<2x32xf32>
    %405 = vector.extract_strided_slice %392 {offsets = [0, 64], sizes = [2, 32], strides = [1, 1]} : vector<2x128xf32> to vector<2x32xf32>
    %406 = math.tanh %405 : vector<2x32xf32>
    %407 = vector.extract_strided_slice %392 {offsets = [0, 96], sizes = [2, 32], strides = [1, 1]} : vector<2x128xf32> to vector<2x32xf32>
    %408 = arith.negf %407 : vector<2x32xf32>
    %409 = math.exp %408 : vector<2x32xf32>
    %cst_84 = arith.constant 1.000000e+00 : f32
    %410 = vector.broadcast %cst_84 : f32 to vector<2x32xf32>
    %411 = arith.addf %410, %409 : vector<2x32xf32>
    %412 = arith.divf %410, %411 : vector<2x32xf32>
    %413 = arith.mulf %404, %357 : vector<2x32xf32>
    %414 = arith.mulf %398, %406 : vector<2x32xf32>
    %415 = arith.addf %413, %414 : vector<2x32xf32>
    %416 = math.tanh %415 : vector<2x32xf32>
    %417 = arith.mulf %412, %416 : vector<2x32xf32>
    %c12_85 = arith.constant 12 : index
    %c0_86 = arith.constant 0 : index
    %418 = vector.load %arg12[%c12_85, %c0_86] : memref<16x64xf32, #tpu.memory_space<vmem>>, vector<2x32xf32>
    tpu.vector_store %arg12[%c12_85, %c0_86], %389 {strides = array<i32>} : memref<16x64xf32, #tpu.memory_space<vmem>>, vector<2x32xf32>,
    %c2_87 = arith.constant 2 : index
    %c32_88 = arith.constant 32 : index
    %419 = vector.load %arg12[%c2_87, %c32_88] : memref<16x64xf32, #tpu.memory_space<vmem>>, vector<2x32xf32>
    tpu.vector_store %arg12[%c2_87, %c32_88], %417 {strides = array<i32>} : memref<16x64xf32, #tpu.memory_space<vmem>>, vector<2x32xf32>,
    %420 = vector.extract_strided_slice %6 {offsets = [14, 0], sizes = [2, 128], strides = [1, 1]} : vector<16x128xf32> to vector<2x128xf32>
    %cst_89 = arith.constant dense<0.000000e+00> : vector<2x128xf32>
    %421 = tpu.matmul %389, %12, %cst_89 {dimension_numbers = #tpu.dot_dimension_numbers<[1], [0], [0], [1], [0, 0, 1, 1], [], []>} : vector<2x32xf32>, vector<32x128xf32>, vector<2x128xf32> -> vector<2x128xf32>
    %422 = arith.addf %420, %421 : vector<2x128xf32>
    %423 = vector.extract_strided_slice %422 {offsets = [0, 0], sizes = [2, 32], strides = [1, 1]} : vector<2x128xf32> to vector<2x32xf32>
    %424 = arith.negf %423 : vector<2x32xf32>
    %425 = math.exp %424 : vector<2x32xf32>
    %cst_90 = arith.constant 1.000000e+00 : f32
    %426 = vector.broadcast %cst_90 : f32 to vector<2x32xf32>
    %427 = arith.addf %426, %425 : vector<2x32xf32>
    %428 = arith.divf %426, %427 : vector<2x32xf32>
    %429 = vector.extract_strided_slice %422 {offsets = [0, 32], sizes = [2, 32], strides = [1, 1]} : vector<2x128xf32> to vector<2x32xf32>
    %430 = arith.negf %429 : vector<2x32xf32>
    %431 = math.exp %430 : vector<2x32xf32>
    %cst_91 = arith.constant 1.000000e+00 : f32
    %432 = vector.broadcast %cst_91 : f32 to vector<2x32xf32>
    %433 = arith.addf %432, %431 : vector<2x32xf32>
    %434 = arith.divf %432, %433 : vector<2x32xf32>
    %435 = vector.extract_strided_slice %422 {offsets = [0, 64], sizes = [2, 32], strides = [1, 1]} : vector<2x128xf32> to vector<2x32xf32>
    %436 = math.tanh %435 : vector<2x32xf32>
    %437 = vector.extract_strided_slice %422 {offsets = [0, 96], sizes = [2, 32], strides = [1, 1]} : vector<2x128xf32> to vector<2x32xf32>
    %438 = arith.negf %437 : vector<2x32xf32>
    %439 = math.exp %438 : vector<2x32xf32>
    %cst_92 = arith.constant 1.000000e+00 : f32
    %440 = vector.broadcast %cst_92 : f32 to vector<2x32xf32>
    %441 = arith.addf %440, %439 : vector<2x32xf32>
    %442 = arith.divf %440, %441 : vector<2x32xf32>
    %443 = arith.mulf %434, %387 : vector<2x32xf32>
    %444 = arith.mulf %428, %436 : vector<2x32xf32>
    %445 = arith.addf %443, %444 : vector<2x32xf32>
    %446 = math.tanh %445 : vector<2x32xf32>
    %447 = arith.mulf %442, %446 : vector<2x32xf32>
    %448 = vector.extract_strided_slice %7 {offsets = [0, 0], sizes = [2, 128], strides = [1, 1]} : vector<16x128xf32> to vector<2x128xf32>
    %cst_93 = arith.constant dense<0.000000e+00> : vector<2x128xf32>
    %449 = tpu.matmul %417, %13, %cst_93 {dimension_numbers = #tpu.dot_dimension_numbers<[1], [0], [0], [1], [0, 0, 1, 1], [], []>} : vector<2x32xf32>, vector<32x128xf32>, vector<2x128xf32> -> vector<2x128xf32>
    %450 = arith.addf %448, %449 : vector<2x128xf32>
    %451 = vector.extract_strided_slice %450 {offsets = [0, 0], sizes = [2, 32], strides = [1, 1]} : vector<2x128xf32> to vector<2x32xf32>
    %452 = arith.negf %451 : vector<2x32xf32>
    %453 = math.exp %452 : vector<2x32xf32>
    %cst_94 = arith.constant 1.000000e+00 : f32
    %454 = vector.broadcast %cst_94 : f32 to vector<2x32xf32>
    %455 = arith.addf %454, %453 : vector<2x32xf32>
    %456 = arith.divf %454, %455 : vector<2x32xf32>
    %457 = vector.extract_strided_slice %450 {offsets = [0, 32], sizes = [2, 32], strides = [1, 1]} : vector<2x128xf32> to vector<2x32xf32>
    %458 = arith.negf %457 : vector<2x32xf32>
    %459 = math.exp %458 : vector<2x32xf32>
    %cst_95 = arith.constant 1.000000e+00 : f32
    %460 = vector.broadcast %cst_95 : f32 to vector<2x32xf32>
    %461 = arith.addf %460, %459 : vector<2x32xf32>
    %462 = arith.divf %460, %461 : vector<2x32xf32>
    %463 = vector.extract_strided_slice %450 {offsets = [0, 64], sizes = [2, 32], strides = [1, 1]} : vector<2x128xf32> to vector<2x32xf32>
    %464 = math.tanh %463 : vector<2x32xf32>
    %465 = vector.extract_strided_slice %450 {offsets = [0, 96], sizes = [2, 32], strides = [1, 1]} : vector<2x128xf32> to vector<2x32xf32>
    %466 = arith.negf %465 : vector<2x32xf32>
    %467 = math.exp %466 : vector<2x32xf32>
    %cst_96 = arith.constant 1.000000e+00 : f32
    %468 = vector.broadcast %cst_96 : f32 to vector<2x32xf32>
    %469 = arith.addf %468, %467 : vector<2x32xf32>
    %470 = arith.divf %468, %469 : vector<2x32xf32>
    %471 = arith.mulf %462, %415 : vector<2x32xf32>
    %472 = arith.mulf %456, %464 : vector<2x32xf32>
    %473 = arith.addf %471, %472 : vector<2x32xf32>
    %474 = math.tanh %473 : vector<2x32xf32>
    %475 = arith.mulf %470, %474 : vector<2x32xf32>
    %c14_97 = arith.constant 14 : index
    %c0_98 = arith.constant 0 : index
    %476 = vector.load %arg12[%c14_97, %c0_98] : memref<16x64xf32, #tpu.memory_space<vmem>>, vector<2x32xf32>
    tpu.vector_store %arg12[%c14_97, %c0_98], %447 {strides = array<i32>} : memref<16x64xf32, #tpu.memory_space<vmem>>, vector<2x32xf32>,
    %c0_99 = arith.constant 0 : index
    %c32_100 = arith.constant 32 : index
    %477 = vector.load %arg12[%c0_99, %c32_100] : memref<16x64xf32, #tpu.memory_space<vmem>>, vector<2x32xf32>
    tpu.vector_store %arg12[%c0_99, %c32_100], %475 {strides = array<i32>} : memref<16x64xf32, #tpu.memory_space<vmem>>, vector<2x32xf32>,
    %c0_101 = arith.constant 0 : index
    %c0_102 = arith.constant 0 : index
    %478 = vector.load %arg12[%c0_101, %c0_102] : memref<16x64xf32, #tpu.memory_space<vmem>>, vector<16x64xf32>
    %c0_103 = arith.constant 0 : index
    %c0_104 = arith.constant 0 : index
    %479 = vector.load %arg5[%c0_103, %c0_104] : memref<64x256xf32, #tpu.memory_space<vmem>>, vector<64x256xf32>
    %cst_105 = arith.constant dense<0.000000e+00> : vector<16x256xf32>
    %480 = tpu.matmul %478, %479, %cst_105 {dimension_numbers = #tpu.dot_dimension_numbers<[1], [0], [0], [1], [0, 0, 1, 1], [], []>} : vector<16x64xf32>, vector<64x256xf32>, vector<16x256xf32> -> vector<16x256xf32>
    %c0_106 = arith.constant 0 : index
    %c0_107 = arith.constant 0 : index
    %481 = vector.load %arg8[%c0_106, %c0_107] : memref<1x256xf32, #tpu.memory_space<vmem>>, vector<1x256xf32>
    %482 = vector.broadcast %481 : vector<1x256xf32> to vector<16x256xf32>
    %483 = arith.addf %480, %482 : vector<16x256xf32>
    %484 = vector.extract_strided_slice %483 {offsets = [0, 0], sizes = [16, 128], strides = [1, 1]} : vector<16x256xf32> to vector<16x128xf32>
    %485 = vector.extract_strided_slice %483 {offsets = [0, 128], sizes = [16, 128], strides = [1, 1]} : vector<16x256xf32> to vector<16x128xf32>
    %cst_108 = arith.constant 0.000000e+00 : f32
    %486 = vector.broadcast %cst_108 : f32 to vector<2x32xf32>
    %cst_109 = arith.constant 0.000000e+00 : f32
    %487 = vector.broadcast %cst_109 : f32 to vector<2x32xf32>
    %cst_110 = arith.constant 0.000000e+00 : f32
    %488 = vector.broadcast %cst_110 : f32 to vector<2x32xf32>
    %cst_111 = arith.constant 0.000000e+00 : f32
    %489 = vector.broadcast %cst_111 : f32 to vector<2x32xf32>
    %c0_112 = arith.constant 0 : index
    %c0_113 = arith.constant 0 : index
    %490 = vector.load %arg6[%c0_112, %c0_113] : memref<32x128xf32, #tpu.memory_space<vmem>>, vector<32x128xf32>
    %c0_114 = arith.constant 0 : index
    %c0_115 = arith.constant 0 : index
    %491 = vector.load %arg7[%c0_114, %c0_115] : memref<32x128xf32, #tpu.memory_space<vmem>>, vector<32x128xf32>
    %492 = vector.extract_strided_slice %484 {offsets = [0, 0], sizes = [2, 128], strides = [1, 1]} : vector<16x128xf32> to vector<2x128xf32>
    %cst_116 = arith.constant dense<0.000000e+00> : vector<2x128xf32>
    %493 = tpu.matmul %486, %490, %cst_116 {dimension_numbers = #tpu.dot_dimension_numbers<[1], [0], [0], [1], [0, 0, 1, 1], [], []>} : vector<2x32xf32>, vector<32x128xf32>, vector<2x128xf32> -> vector<2x128xf32>
    %494 = arith.addf %492, %493 : vector<2x128xf32>
    %495 = vector.extract_strided_slice %494 {offsets = [0, 0], sizes = [2, 32], strides = [1, 1]} : vector<2x128xf32> to vector<2x32xf32>
    %496 = arith.negf %495 : vector<2x32xf32>
    %497 = math.exp %496 : vector<2x32xf32>
    %cst_117 = arith.constant 1.000000e+00 : f32
    %498 = vector.broadcast %cst_117 : f32 to vector<2x32xf32>
    %499 = arith.addf %498, %497 : vector<2x32xf32>
    %500 = arith.divf %498, %499 : vector<2x32xf32>
    %501 = vector.extract_strided_slice %494 {offsets = [0, 32], sizes = [2, 32], strides = [1, 1]} : vector<2x128xf32> to vector<2x32xf32>
    %502 = arith.negf %501 : vector<2x32xf32>
    %503 = math.exp %502 : vector<2x32xf32>
    %cst_118 = arith.constant 1.000000e+00 : f32
    %504 = vector.broadcast %cst_118 : f32 to vector<2x32xf32>
    %505 = arith.addf %504, %503 : vector<2x32xf32>
    %506 = arith.divf %504, %505 : vector<2x32xf32>
    %507 = vector.extract_strided_slice %494 {offsets = [0, 64], sizes = [2, 32], strides = [1, 1]} : vector<2x128xf32> to vector<2x32xf32>
    %508 = math.tanh %507 : vector<2x32xf32>
    %509 = vector.extract_strided_slice %494 {offsets = [0, 96], sizes = [2, 32], strides = [1, 1]} : vector<2x128xf32> to vector<2x32xf32>
    %510 = arith.negf %509 : vector<2x32xf32>
    %511 = math.exp %510 : vector<2x32xf32>
    %cst_119 = arith.constant 1.000000e+00 : f32
    %512 = vector.broadcast %cst_119 : f32 to vector<2x32xf32>
    %513 = arith.addf %512, %511 : vector<2x32xf32>
    %514 = arith.divf %512, %513 : vector<2x32xf32>
    %515 = arith.mulf %506, %487 : vector<2x32xf32>
    %516 = arith.mulf %500, %508 : vector<2x32xf32>
    %517 = arith.addf %515, %516 : vector<2x32xf32>
    %518 = math.tanh %517 : vector<2x32xf32>
    %519 = arith.mulf %514, %518 : vector<2x32xf32>
    %520 = vector.extract_strided_slice %485 {offsets = [14, 0], sizes = [2, 128], strides = [1, 1]} : vector<16x128xf32> to vector<2x128xf32>
    %cst_120 = arith.constant dense<0.000000e+00> : vector<2x128xf32>
    %521 = tpu.matmul %488, %491, %cst_120 {dimension_numbers = #tpu.dot_dimension_numbers<[1], [0], [0], [1], [0, 0, 1, 1], [], []>} : vector<2x32xf32>, vector<32x128xf32>, vector<2x128xf32> -> vector<2x128xf32>
    %522 = arith.addf %520, %521 : vector<2x128xf32>
    %523 = vector.extract_strided_slice %522 {offsets = [0, 0], sizes = [2, 32], strides = [1, 1]} : vector<2x128xf32> to vector<2x32xf32>
    %524 = arith.negf %523 : vector<2x32xf32>
    %525 = math.exp %524 : vector<2x32xf32>
    %cst_121 = arith.constant 1.000000e+00 : f32
    %526 = vector.broadcast %cst_121 : f32 to vector<2x32xf32>
    %527 = arith.addf %526, %525 : vector<2x32xf32>
    %528 = arith.divf %526, %527 : vector<2x32xf32>
    %529 = vector.extract_strided_slice %522 {offsets = [0, 32], sizes = [2, 32], strides = [1, 1]} : vector<2x128xf32> to vector<2x32xf32>
    %530 = arith.negf %529 : vector<2x32xf32>
    %531 = math.exp %530 : vector<2x32xf32>
    %cst_122 = arith.constant 1.000000e+00 : f32
    %532 = vector.broadcast %cst_122 : f32 to vector<2x32xf32>
    %533 = arith.addf %532, %531 : vector<2x32xf32>
    %534 = arith.divf %532, %533 : vector<2x32xf32>
    %535 = vector.extract_strided_slice %522 {offsets = [0, 64], sizes = [2, 32], strides = [1, 1]} : vector<2x128xf32> to vector<2x32xf32>
    %536 = math.tanh %535 : vector<2x32xf32>
    %537 = vector.extract_strided_slice %522 {offsets = [0, 96], sizes = [2, 32], strides = [1, 1]} : vector<2x128xf32> to vector<2x32xf32>
    %538 = arith.negf %537 : vector<2x32xf32>
    %539 = math.exp %538 : vector<2x32xf32>
    %cst_123 = arith.constant 1.000000e+00 : f32
    %540 = vector.broadcast %cst_123 : f32 to vector<2x32xf32>
    %541 = arith.addf %540, %539 : vector<2x32xf32>
    %542 = arith.divf %540, %541 : vector<2x32xf32>
    %543 = arith.mulf %534, %489 : vector<2x32xf32>
    %544 = arith.mulf %528, %536 : vector<2x32xf32>
    %545 = arith.addf %543, %544 : vector<2x32xf32>
    %546 = math.tanh %545 : vector<2x32xf32>
    %547 = arith.mulf %542, %546 : vector<2x32xf32>
    %548 = vector.extract_strided_slice %484 {offsets = [2, 0], sizes = [2, 128], strides = [1, 1]} : vector<16x128xf32> to vector<2x128xf32>
    %cst_124 = arith.constant dense<0.000000e+00> : vector<2x128xf32>
    %549 = tpu.matmul %519, %490, %cst_124 {dimension_numbers = #tpu.dot_dimension_numbers<[1], [0], [0], [1], [0, 0, 1, 1], [], []>} : vector<2x32xf32>, vector<32x128xf32>, vector<2x128xf32> -> vector<2x128xf32>
    %550 = arith.addf %548, %549 : vector<2x128xf32>
    %551 = vector.extract_strided_slice %550 {offsets = [0, 0], sizes = [2, 32], strides = [1, 1]} : vector<2x128xf32> to vector<2x32xf32>
    %552 = arith.negf %551 : vector<2x32xf32>
    %553 = math.exp %552 : vector<2x32xf32>
    %cst_125 = arith.constant 1.000000e+00 : f32
    %554 = vector.broadcast %cst_125 : f32 to vector<2x32xf32>
    %555 = arith.addf %554, %553 : vector<2x32xf32>
    %556 = arith.divf %554, %555 : vector<2x32xf32>
    %557 = vector.extract_strided_slice %550 {offsets = [0, 32], sizes = [2, 32], strides = [1, 1]} : vector<2x128xf32> to vector<2x32xf32>
    %558 = arith.negf %557 : vector<2x32xf32>
    %559 = math.exp %558 : vector<2x32xf32>
    %cst_126 = arith.constant 1.000000e+00 : f32
    %560 = vector.broadcast %cst_126 : f32 to vector<2x32xf32>
    %561 = arith.addf %560, %559 : vector<2x32xf32>
    %562 = arith.divf %560, %561 : vector<2x32xf32>
    %563 = vector.extract_strided_slice %550 {offsets = [0, 64], sizes = [2, 32], strides = [1, 1]} : vector<2x128xf32> to vector<2x32xf32>
    %564 = math.tanh %563 : vector<2x32xf32>
    %565 = vector.extract_strided_slice %550 {offsets = [0, 96], sizes = [2, 32], strides = [1, 1]} : vector<2x128xf32> to vector<2x32xf32>
    %566 = arith.negf %565 : vector<2x32xf32>
    %567 = math.exp %566 : vector<2x32xf32>
    %cst_127 = arith.constant 1.000000e+00 : f32
    %568 = vector.broadcast %cst_127 : f32 to vector<2x32xf32>
    %569 = arith.addf %568, %567 : vector<2x32xf32>
    %570 = arith.divf %568, %569 : vector<2x32xf32>
    %571 = arith.mulf %562, %517 : vector<2x32xf32>
    %572 = arith.mulf %556, %564 : vector<2x32xf32>
    %573 = arith.addf %571, %572 : vector<2x32xf32>
    %574 = math.tanh %573 : vector<2x32xf32>
    %575 = arith.mulf %570, %574 : vector<2x32xf32>
    %576 = vector.extract_strided_slice %484 {offsets = [4, 0], sizes = [2, 128], strides = [1, 1]} : vector<16x128xf32> to vector<2x128xf32>
    %cst_128 = arith.constant dense<0.000000e+00> : vector<2x128xf32>
    %577 = tpu.matmul %575, %490, %cst_128 {dimension_numbers = #tpu.dot_dimension_numbers<[1], [0], [0], [1], [0, 0, 1, 1], [], []>} : vector<2x32xf32>, vector<32x128xf32>, vector<2x128xf32> -> vector<2x128xf32>
    %578 = arith.addf %576, %577 : vector<2x128xf32>
    %579 = vector.extract_strided_slice %578 {offsets = [0, 0], sizes = [2, 32], strides = [1, 1]} : vector<2x128xf32> to vector<2x32xf32>
    %580 = arith.negf %579 : vector<2x32xf32>
    %581 = math.exp %580 : vector<2x32xf32>
    %cst_129 = arith.constant 1.000000e+00 : f32
    %582 = vector.broadcast %cst_129 : f32 to vector<2x32xf32>
    %583 = arith.addf %582, %581 : vector<2x32xf32>
    %584 = arith.divf %582, %583 : vector<2x32xf32>
    %585 = vector.extract_strided_slice %578 {offsets = [0, 32], sizes = [2, 32], strides = [1, 1]} : vector<2x128xf32> to vector<2x32xf32>
    %586 = arith.negf %585 : vector<2x32xf32>
    %587 = math.exp %586 : vector<2x32xf32>
    %cst_130 = arith.constant 1.000000e+00 : f32
    %588 = vector.broadcast %cst_130 : f32 to vector<2x32xf32>
    %589 = arith.addf %588, %587 : vector<2x32xf32>
    %590 = arith.divf %588, %589 : vector<2x32xf32>
    %591 = vector.extract_strided_slice %578 {offsets = [0, 64], sizes = [2, 32], strides = [1, 1]} : vector<2x128xf32> to vector<2x32xf32>
    %592 = math.tanh %591 : vector<2x32xf32>
    %593 = vector.extract_strided_slice %578 {offsets = [0, 96], sizes = [2, 32], strides = [1, 1]} : vector<2x128xf32> to vector<2x32xf32>
    %594 = arith.negf %593 : vector<2x32xf32>
    %595 = math.exp %594 : vector<2x32xf32>
    %cst_131 = arith.constant 1.000000e+00 : f32
    %596 = vector.broadcast %cst_131 : f32 to vector<2x32xf32>
    %597 = arith.addf %596, %595 : vector<2x32xf32>
    %598 = arith.divf %596, %597 : vector<2x32xf32>
    %599 = arith.mulf %590, %573 : vector<2x32xf32>
    %600 = arith.mulf %584, %592 : vector<2x32xf32>
    %601 = arith.addf %599, %600 : vector<2x32xf32>
    %602 = math.tanh %601 : vector<2x32xf32>
    %603 = arith.mulf %598, %602 : vector<2x32xf32>
    %604 = vector.extract_strided_slice %484 {offsets = [6, 0], sizes = [2, 128], strides = [1, 1]} : vector<16x128xf32> to vector<2x128xf32>
    %cst_132 = arith.constant dense<0.000000e+00> : vector<2x128xf32>
    %605 = tpu.matmul %603, %490, %cst_132 {dimension_numbers = #tpu.dot_dimension_numbers<[1], [0], [0], [1], [0, 0, 1, 1], [], []>} : vector<2x32xf32>, vector<32x128xf32>, vector<2x128xf32> -> vector<2x128xf32>
    %606 = arith.addf %604, %605 : vector<2x128xf32>
    %607 = vector.extract_strided_slice %606 {offsets = [0, 0], sizes = [2, 32], strides = [1, 1]} : vector<2x128xf32> to vector<2x32xf32>
    %608 = arith.negf %607 : vector<2x32xf32>
    %609 = math.exp %608 : vector<2x32xf32>
    %cst_133 = arith.constant 1.000000e+00 : f32
    %610 = vector.broadcast %cst_133 : f32 to vector<2x32xf32>
    %611 = arith.addf %610, %609 : vector<2x32xf32>
    %612 = arith.divf %610, %611 : vector<2x32xf32>
    %613 = vector.extract_strided_slice %606 {offsets = [0, 32], sizes = [2, 32], strides = [1, 1]} : vector<2x128xf32> to vector<2x32xf32>
    %614 = arith.negf %613 : vector<2x32xf32>
    %615 = math.exp %614 : vector<2x32xf32>
    %cst_134 = arith.constant 1.000000e+00 : f32
    %616 = vector.broadcast %cst_134 : f32 to vector<2x32xf32>
    %617 = arith.addf %616, %615 : vector<2x32xf32>
    %618 = arith.divf %616, %617 : vector<2x32xf32>
    %619 = vector.extract_strided_slice %606 {offsets = [0, 64], sizes = [2, 32], strides = [1, 1]} : vector<2x128xf32> to vector<2x32xf32>
    %620 = math.tanh %619 : vector<2x32xf32>
    %621 = vector.extract_strided_slice %606 {offsets = [0, 96], sizes = [2, 32], strides = [1, 1]} : vector<2x128xf32> to vector<2x32xf32>
    %622 = arith.negf %621 : vector<2x32xf32>
    %623 = math.exp %622 : vector<2x32xf32>
    %cst_135 = arith.constant 1.000000e+00 : f32
    %624 = vector.broadcast %cst_135 : f32 to vector<2x32xf32>
    %625 = arith.addf %624, %623 : vector<2x32xf32>
    %626 = arith.divf %624, %625 : vector<2x32xf32>
    %627 = arith.mulf %618, %601 : vector<2x32xf32>
    %628 = arith.mulf %612, %620 : vector<2x32xf32>
    %629 = arith.addf %627, %628 : vector<2x32xf32>
    %630 = math.tanh %629 : vector<2x32xf32>
    %631 = arith.mulf %626, %630 : vector<2x32xf32>
    %632 = vector.extract_strided_slice %484 {offsets = [8, 0], sizes = [2, 128], strides = [1, 1]} : vector<16x128xf32> to vector<2x128xf32>
    %cst_136 = arith.constant dense<0.000000e+00> : vector<2x128xf32>
    %633 = tpu.matmul %631, %490, %cst_136 {dimension_numbers = #tpu.dot_dimension_numbers<[1], [0], [0], [1], [0, 0, 1, 1], [], []>} : vector<2x32xf32>, vector<32x128xf32>, vector<2x128xf32> -> vector<2x128xf32>
    %634 = arith.addf %632, %633 : vector<2x128xf32>
    %635 = vector.extract_strided_slice %634 {offsets = [0, 0], sizes = [2, 32], strides = [1, 1]} : vector<2x128xf32> to vector<2x32xf32>
    %636 = arith.negf %635 : vector<2x32xf32>
    %637 = math.exp %636 : vector<2x32xf32>
    %cst_137 = arith.constant 1.000000e+00 : f32
    %638 = vector.broadcast %cst_137 : f32 to vector<2x32xf32>
    %639 = arith.addf %638, %637 : vector<2x32xf32>
    %640 = arith.divf %638, %639 : vector<2x32xf32>
    %641 = vector.extract_strided_slice %634 {offsets = [0, 32], sizes = [2, 32], strides = [1, 1]} : vector<2x128xf32> to vector<2x32xf32>
    %642 = arith.negf %641 : vector<2x32xf32>
    %643 = math.exp %642 : vector<2x32xf32>
    %cst_138 = arith.constant 1.000000e+00 : f32
    %644 = vector.broadcast %cst_138 : f32 to vector<2x32xf32>
    %645 = arith.addf %644, %643 : vector<2x32xf32>
    %646 = arith.divf %644, %645 : vector<2x32xf32>
    %647 = vector.extract_strided_slice %634 {offsets = [0, 64], sizes = [2, 32], strides = [1, 1]} : vector<2x128xf32> to vector<2x32xf32>
    %648 = math.tanh %647 : vector<2x32xf32>
    %649 = vector.extract_strided_slice %634 {offsets = [0, 96], sizes = [2, 32], strides = [1, 1]} : vector<2x128xf32> to vector<2x32xf32>
    %650 = arith.negf %649 : vector<2x32xf32>
    %651 = math.exp %650 : vector<2x32xf32>
    %cst_139 = arith.constant 1.000000e+00 : f32
    %652 = vector.broadcast %cst_139 : f32 to vector<2x32xf32>
    %653 = arith.addf %652, %651 : vector<2x32xf32>
    %654 = arith.divf %652, %653 : vector<2x32xf32>
    %655 = arith.mulf %646, %629 : vector<2x32xf32>
    %656 = arith.mulf %640, %648 : vector<2x32xf32>
    %657 = arith.addf %655, %656 : vector<2x32xf32>
    %658 = math.tanh %657 : vector<2x32xf32>
    %659 = arith.mulf %654, %658 : vector<2x32xf32>
    %660 = vector.extract_strided_slice %484 {offsets = [10, 0], sizes = [2, 128], strides = [1, 1]} : vector<16x128xf32> to vector<2x128xf32>
    %cst_140 = arith.constant dense<0.000000e+00> : vector<2x128xf32>
    %661 = tpu.matmul %659, %490, %cst_140 {dimension_numbers = #tpu.dot_dimension_numbers<[1], [0], [0], [1], [0, 0, 1, 1], [], []>} : vector<2x32xf32>, vector<32x128xf32>, vector<2x128xf32> -> vector<2x128xf32>
    %662 = arith.addf %660, %661 : vector<2x128xf32>
    %663 = vector.extract_strided_slice %662 {offsets = [0, 0], sizes = [2, 32], strides = [1, 1]} : vector<2x128xf32> to vector<2x32xf32>
    %664 = arith.negf %663 : vector<2x32xf32>
    %665 = math.exp %664 : vector<2x32xf32>
    %cst_141 = arith.constant 1.000000e+00 : f32
    %666 = vector.broadcast %cst_141 : f32 to vector<2x32xf32>
    %667 = arith.addf %666, %665 : vector<2x32xf32>
    %668 = arith.divf %666, %667 : vector<2x32xf32>
    %669 = vector.extract_strided_slice %662 {offsets = [0, 32], sizes = [2, 32], strides = [1, 1]} : vector<2x128xf32> to vector<2x32xf32>
    %670 = arith.negf %669 : vector<2x32xf32>
    %671 = math.exp %670 : vector<2x32xf32>
    %cst_142 = arith.constant 1.000000e+00 : f32
    %672 = vector.broadcast %cst_142 : f32 to vector<2x32xf32>
    %673 = arith.addf %672, %671 : vector<2x32xf32>
    %674 = arith.divf %672, %673 : vector<2x32xf32>
    %675 = vector.extract_strided_slice %662 {offsets = [0, 64], sizes = [2, 32], strides = [1, 1]} : vector<2x128xf32> to vector<2x32xf32>
    %676 = math.tanh %675 : vector<2x32xf32>
    %677 = vector.extract_strided_slice %662 {offsets = [0, 96], sizes = [2, 32], strides = [1, 1]} : vector<2x128xf32> to vector<2x32xf32>
    %678 = arith.negf %677 : vector<2x32xf32>
    %679 = math.exp %678 : vector<2x32xf32>
    %cst_143 = arith.constant 1.000000e+00 : f32
    %680 = vector.broadcast %cst_143 : f32 to vector<2x32xf32>
    %681 = arith.addf %680, %679 : vector<2x32xf32>
    %682 = arith.divf %680, %681 : vector<2x32xf32>
    %683 = arith.mulf %674, %657 : vector<2x32xf32>
    %684 = arith.mulf %668, %676 : vector<2x32xf32>
    %685 = arith.addf %683, %684 : vector<2x32xf32>
    %686 = math.tanh %685 : vector<2x32xf32>
    %687 = arith.mulf %682, %686 : vector<2x32xf32>
    %688 = vector.extract_strided_slice %484 {offsets = [12, 0], sizes = [2, 128], strides = [1, 1]} : vector<16x128xf32> to vector<2x128xf32>
    %cst_144 = arith.constant dense<0.000000e+00> : vector<2x128xf32>
    %689 = tpu.matmul %687, %490, %cst_144 {dimension_numbers = #tpu.dot_dimension_numbers<[1], [0], [0], [1], [0, 0, 1, 1], [], []>} : vector<2x32xf32>, vector<32x128xf32>, vector<2x128xf32> -> vector<2x128xf32>
    %690 = arith.addf %688, %689 : vector<2x128xf32>
    %691 = vector.extract_strided_slice %690 {offsets = [0, 0], sizes = [2, 32], strides = [1, 1]} : vector<2x128xf32> to vector<2x32xf32>
    %692 = arith.negf %691 : vector<2x32xf32>
    %693 = math.exp %692 : vector<2x32xf32>
    %cst_145 = arith.constant 1.000000e+00 : f32
    %694 = vector.broadcast %cst_145 : f32 to vector<2x32xf32>
    %695 = arith.addf %694, %693 : vector<2x32xf32>
    %696 = arith.divf %694, %695 : vector<2x32xf32>
    %697 = vector.extract_strided_slice %690 {offsets = [0, 32], sizes = [2, 32], strides = [1, 1]} : vector<2x128xf32> to vector<2x32xf32>
    %698 = arith.negf %697 : vector<2x32xf32>
    %699 = math.exp %698 : vector<2x32xf32>
    %cst_146 = arith.constant 1.000000e+00 : f32
    %700 = vector.broadcast %cst_146 : f32 to vector<2x32xf32>
    %701 = arith.addf %700, %699 : vector<2x32xf32>
    %702 = arith.divf %700, %701 : vector<2x32xf32>
    %703 = vector.extract_strided_slice %690 {offsets = [0, 64], sizes = [2, 32], strides = [1, 1]} : vector<2x128xf32> to vector<2x32xf32>
    %704 = math.tanh %703 : vector<2x32xf32>
    %705 = vector.extract_strided_slice %690 {offsets = [0, 96], sizes = [2, 32], strides = [1, 1]} : vector<2x128xf32> to vector<2x32xf32>
    %706 = arith.negf %705 : vector<2x32xf32>
    %707 = math.exp %706 : vector<2x32xf32>
    %cst_147 = arith.constant 1.000000e+00 : f32
    %708 = vector.broadcast %cst_147 : f32 to vector<2x32xf32>
    %709 = arith.addf %708, %707 : vector<2x32xf32>
    %710 = arith.divf %708, %709 : vector<2x32xf32>
    %711 = arith.mulf %702, %685 : vector<2x32xf32>
    %712 = arith.mulf %696, %704 : vector<2x32xf32>
    %713 = arith.addf %711, %712 : vector<2x32xf32>
    %714 = math.tanh %713 : vector<2x32xf32>
    %715 = arith.mulf %710, %714 : vector<2x32xf32>
    %716 = vector.extract_strided_slice %484 {offsets = [14, 0], sizes = [2, 128], strides = [1, 1]} : vector<16x128xf32> to vector<2x128xf32>
    %cst_148 = arith.constant dense<0.000000e+00> : vector<2x128xf32>
    %717 = tpu.matmul %715, %490, %cst_148 {dimension_numbers = #tpu.dot_dimension_numbers<[1], [0], [0], [1], [0, 0, 1, 1], [], []>} : vector<2x32xf32>, vector<32x128xf32>, vector<2x128xf32> -> vector<2x128xf32>
    %718 = arith.addf %716, %717 : vector<2x128xf32>
    %719 = vector.extract_strided_slice %718 {offsets = [0, 0], sizes = [2, 32], strides = [1, 1]} : vector<2x128xf32> to vector<2x32xf32>
    %720 = arith.negf %719 : vector<2x32xf32>
    %721 = math.exp %720 : vector<2x32xf32>
    %cst_149 = arith.constant 1.000000e+00 : f32
    %722 = vector.broadcast %cst_149 : f32 to vector<2x32xf32>
    %723 = arith.addf %722, %721 : vector<2x32xf32>
    %724 = arith.divf %722, %723 : vector<2x32xf32>
    %725 = vector.extract_strided_slice %718 {offsets = [0, 32], sizes = [2, 32], strides = [1, 1]} : vector<2x128xf32> to vector<2x32xf32>
    %726 = arith.negf %725 : vector<2x32xf32>
    %727 = math.exp %726 : vector<2x32xf32>
    %cst_150 = arith.constant 1.000000e+00 : f32
    %728 = vector.broadcast %cst_150 : f32 to vector<2x32xf32>
    %729 = arith.addf %728, %727 : vector<2x32xf32>
    %730 = arith.divf %728, %729 : vector<2x32xf32>
    %731 = vector.extract_strided_slice %718 {offsets = [0, 64], sizes = [2, 32], strides = [1, 1]} : vector<2x128xf32> to vector<2x32xf32>
    %732 = math.tanh %731 : vector<2x32xf32>
    %733 = vector.extract_strided_slice %718 {offsets = [0, 96], sizes = [2, 32], strides = [1, 1]} : vector<2x128xf32> to vector<2x32xf32>
    %734 = arith.negf %733 : vector<2x32xf32>
    %735 = math.exp %734 : vector<2x32xf32>
    %cst_151 = arith.constant 1.000000e+00 : f32
    %736 = vector.broadcast %cst_151 : f32 to vector<2x32xf32>
    %737 = arith.addf %736, %735 : vector<2x32xf32>
    %738 = arith.divf %736, %737 : vector<2x32xf32>
    %739 = arith.mulf %730, %713 : vector<2x32xf32>
    %740 = arith.mulf %724, %732 : vector<2x32xf32>
    %741 = arith.addf %739, %740 : vector<2x32xf32>
    %742 = math.tanh %741 : vector<2x32xf32>
    %743 = arith.mulf %738, %742 : vector<2x32xf32>
    %c0_152 = arith.constant 0 : index
    %c0_153 = arith.constant 0 : index
    %744 = vector.load %arg9[%c0_152, %c0_153] : memref<64x4xf32, #tpu.memory_space<vmem>>, vector<32x4xf32>
    %cst_154 = arith.constant dense<0.000000e+00> : vector<2x4xf32>
    %745 = tpu.matmul %743, %744, %cst_154 {dimension_numbers = #tpu.dot_dimension_numbers<[1], [0], [0], [1], [0, 0, 1, 1], [], []>} : vector<2x32xf32>, vector<32x4xf32>, vector<2x4xf32> -> vector<2x4xf32>
    %c32_155 = arith.constant 32 : index
    %c0_156 = arith.constant 0 : index
    %746 = vector.load %arg9[%c32_155, %c0_156] : memref<64x4xf32, #tpu.memory_space<vmem>>, vector<32x4xf32>
    %cst_157 = arith.constant dense<0.000000e+00> : vector<2x4xf32>
    %747 = tpu.matmul %547, %746, %cst_157 {dimension_numbers = #tpu.dot_dimension_numbers<[1], [0], [0], [1], [0, 0, 1, 1], [], []>} : vector<2x32xf32>, vector<32x4xf32>, vector<2x4xf32> -> vector<2x4xf32>
    %748 = arith.addf %745, %747 : vector<2x4xf32>
    %c0_158 = arith.constant 0 : index
    %c0_159 = arith.constant 0 : index
    %749 = vector.load %arg10[%c0_158, %c0_159] : memref<1x4xf32, #tpu.memory_space<vmem>>, vector<1x4xf32>
    %750 = vector.broadcast %749 : vector<1x4xf32> to vector<2x4xf32>
    %751 = arith.addf %748, %750 : vector<2x4xf32>
    %cst_160 = arith.constant dense<0xFF800000> : vector<2xf32>
    %752 = vector.multi_reduction <maximumf>, %751, %cst_160 [1] : vector<2x4xf32> to vector<2xf32>
    %753 = vector.shape_cast %752 : vector<2xf32> to vector<2x1xf32>
    %754 = vector.broadcast %753 : vector<2x1xf32> to vector<2x4xf32>
    %755 = arith.subf %751, %754 : vector<2x4xf32>
    %756 = math.exp %755 : vector<2x4xf32>
    %cst_161 = arith.constant dense<0.000000e+00> : vector<2xf32>
    %757 = vector.multi_reduction <add>, %756, %cst_161 [1] : vector<2x4xf32> to vector<2xf32>
    %758 = vector.shape_cast %757 : vector<2xf32> to vector<2x1xf32>
    %759 = tpu.reciprocal %758 {approx = true} : vector<2x1xf32> -> vector<2x1xf32>
    %760 = vector.broadcast %759 : vector<2x1xf32> to vector<2x4xf32>
    %761 = arith.mulf %756, %760 : vector<2x4xf32>
    %c0_162 = arith.constant 0 : index
    %c0_163 = arith.constant 0 : index
    %762 = vector.load %arg11[%c0_162, %c0_163] : memref<2x4xf32, #tpu.memory_space<vmem>>, vector<2x4xf32>
    tpu.vector_store %arg11[%c0_162, %c0_163], %761 {strides = array<i32>} : memref<2x4xf32, #tpu.memory_space<vmem>>, vector<2x4xf32>,
    return
  }
}

</mosaic_0001>

<llo_original>
// kernel: tpu_custom_call.1
$region0: #{tpu_custom_call.1}
  #allocation0 [shape = 'u32[]', space=smem, size = 0x4, offset = 0x4, fixed_abs, tag = 'smem constant byte address 0x4 - core index']
  #allocation1 [shape = 'u32[144,128]{1,0:T(1,128)}', space=vmem, size = 0x12000, scoped, tag = 'internal scratch']
  #allocation2 [shape = 'f32[16,64]{1,0:T(8,128)}', space=vmem, size = 0x2000, scoped, tag = 'scratch operand']
  %s0 = inlined_call_operand.hbm [shape: f32[16,16], index: 0, kind: input, shape index: {}]
  %s1 = inlined_call_operand.vmem [shape: f32[16,256], index: 1, kind: input, shape index: {}]
  %s2 = inlined_call_operand.vmem [shape: f32[32,128], index: 2, kind: input, shape index: {}]
  %s3 = inlined_call_operand.hbm [shape: f32[32,128], index: 3, kind: input, shape index: {}]
  %s4 = inlined_call_operand.vmem [shape: f32[1,256], index: 4, kind: input, shape index: {}]
  %s5 = inlined_call_operand.hbm [shape: f32[64,256], index: 5, kind: input, shape index: {}]
  %s6 = inlined_call_operand.hbm [shape: f32[32,128], index: 6, kind: input, shape index: {}]
  %s7 = inlined_call_operand.hbm [shape: f32[32,128], index: 7, kind: input, shape index: {}]
  %s8 = inlined_call_operand.vmem [shape: f32[1,256], index: 8, kind: input, shape index: {}]
  %s9 = inlined_call_operand.vmem [shape: f32[64,4], index: 9, kind: input, shape index: {}]
  %s10 = inlined_call_operand.vmem [shape: f32[1,4], index: 10, kind: input, shape index: {}]
  %s11 = inlined_call_operand.hbm [shape: f32[2,4], index: 11, kind: output, shape index: {}]
  %s12 = sld [smem:[#allocation0]]
  $region74: #{tpu_custom_call.1} parent=0
    _
  %s14 = ssub.s32 1, %s12
  %s15 = scalar_select 0, %s14, %s12
  $region1: #{tpu_custom_call.1} parent=0
    #allocation3 [shape = 'u8[8192]{0}', space=vmem, size = 0x2000, scoped, tag = 'input window, operand 0, single buffered']
    #allocation4 [shape = 's32[1]{0}', space=sflag, size = 0x4, scoped, tag = 'scoped memory for tpu_custom_call.1']
    #allocation5 [shape = 's32[1]{0}', space=sflag, size = 0x4, scoped, tag = 'scoped memory for tpu_custom_call.1']
    #allocation6 [shape = 'u8[16384]{0}', space=vmem, size = 0x4000, scoped, tag = 'input window, operand 3, single buffered']
    #allocation7 [shape = 's32[1]{0}', space=sflag, size = 0x4, scoped, tag = 'scoped memory for tpu_custom_call.1']
    #allocation8 [shape = 'u8[65536]{0}', space=vmem, size = 0x10000, scoped, tag = 'input window, operand 5, single buffered']
    #allocation9 [shape = 'u8[16384]{0}', space=vmem, size = 0x4000, scoped, tag = 'input window, operand 6, single buffered']
    #allocation10 [shape = 's32[1]{0}', space=sflag, size = 0x4, scoped, tag = 'scoped memory for tpu_custom_call.1']
    #allocation11 [shape = 'u8[16384]{0}', space=vmem, size = 0x4000, scoped, tag = 'input window, operand 7, single buffered']
    #allocation12 [shape = 'u8[1024]{0}', space=vmem, size = 0x400, scoped, tag = 'output window, operand 0, single buffered']
    %16 = vsyncpa [#allocation4], 0
    %17 = vsyncpa [#allocation7], 0
    %18 = vsyncpa [#allocation10], 0
    %19 = vsyncpa [#allocation5], 0
    // Predicated region
    $region2: #{tpu_custom_call.1} parent=1 // pred_check
      _
    $region3: #{tpu_custom_call.1} parent=1 // pred_check_branch
      %21 = sbr.rel (0) target = $region5
    $region4: #{tpu_custom_call.1} parent=1 // pred_region
      %s23 = ssub.s32 256, 256
      %24 = vsyncadd [#allocation4], %s23
      %s25 = sshll.u32 [#allocation3], 4
      %s26 = int_to_ptr.vmem [resolvable:$true] %s25
      %31 = dma.hbm_to_vmem [thread:$0]  %s0, 256, %s26, [#allocation4], 128, 128, 8
    $region5: #{tpu_custom_call.1} parent=1 // pred_fallthru
      _
    // Predicated region
    $region6: #{tpu_custom_call.1} parent=1 // pred_check
      _
    $region7: #{tpu_custom_call.1} parent=1 // pred_check_branch
      %33 = sbr.rel (0) target = $region9
    $region8: #{tpu_custom_call.1} parent=1 // pred_region
      _
    $region9: #{tpu_custom_call.1} parent=1 // pred_fallthru
      _
    // Predicated region
    $region10: #{tpu_custom_call.1} parent=1 // pred_check
      _
    $region11: #{tpu_custom_call.1} parent=1 // pred_check_branch
      %35 = sbr.rel (0) target = $region13
    $region12: #{tpu_custom_call.1} parent=1 // pred_region
      _
    $region13: #{tpu_custom_call.1} parent=1 // pred_fallthru
      _
    // Predicated region
    $region14: #{tpu_custom_call.1} parent=1 // pred_check
      _
    $region15: #{tpu_custom_call.1} parent=1 // pred_check_branch
      %37 = sbr.rel (0) target = $region17
    $region16: #{tpu_custom_call.1} parent=1 // pred_region
      %s39 = ssub.s32 512, 512
      %40 = vsyncadd [#allocation7], %s39
      %s41 = sshll.u32 [#allocation6], 4
      %s42 = int_to_ptr.vmem [resolvable:$true] %s41
      %47 = dma.hbm_to_vmem [thread:$0]  %s3, 512, %s42, [#allocation7], 128, 128, 8
    $region17: #{tpu_custom_call.1} parent=1 // pred_fallthru
      _
    // Predicated region
    $region18: #{tpu_custom_call.1} parent=1 // pred_check
      _
    $region19: #{tpu_custom_call.1} parent=1 // pred_check_branch
      %49 = sbr.rel (0) target = $region21
    $region20: #{tpu_custom_call.1} parent=1 // pred_region
      _
    $region21: #{tpu_custom_call.1} parent=1 // pred_fallthru
      _
    // Predicated region
    $region22: #{tpu_custom_call.1} parent=1 // pred_check
      _
    $region23: #{tpu_custom_call.1} parent=1 // pred_check_branch
      %51 = sbr.rel (0) target = $region25
    $region24: #{tpu_custom_call.1} parent=1 // pred_region
      %s53 = ssub.s32 2048, 2048
      %54 = vsyncadd [#allocation7], %s53
      %s55 = sshll.u32 [#allocation8], 4
      %s56 = int_to_ptr.vmem [resolvable:$true] %s55
      %61 = dma.hbm_to_vmem [thread:$0]  %s5, 2048, %s56, [#allocation7], 256, 256, 16
    $region25: #{tpu_custom_call.1} parent=1 // pred_fallthru
      _
    // Predicated region
    $region26: #{tpu_custom_call.1} parent=1 // pred_check
      _
    $region27: #{tpu_custom_call.1} parent=1 // pred_check_branch
      %63 = sbr.rel (0) target = $region29
    $region28: #{tpu_custom_call.1} parent=1 // pred_region
      %s65 = ssub.s32 512, 512
      %66 = vsyncadd [#allocation10], %s65
      %s67 = sshll.u32 [#allocation9], 4
      %s68 = int_to_ptr.vmem [resolvable:$true] %s67
      %73 = dma.hbm_to_vmem [thread:$0]  %s6, 512, %s68, [#allocation10], 128, 128, 8
    $region29: #{tpu_custom_call.1} parent=1 // pred_fallthru
      _
    // Predicated region
    $region30: #{tpu_custom_call.1} parent=1 // pred_check
      _
    $region31: #{tpu_custom_call.1} parent=1 // pred_check_branch
      %75 = sbr.rel (0) target = $region33
    $region32: #{tpu_custom_call.1} parent=1 // pred_region
      %s77 = ssub.s32 512, 512
      %78 = vsyncadd [#allocation10], %s77
      %s79 = sshll.u32 [#allocation11], 4
      %s80 = int_to_ptr.vmem [resolvable:$true] %s79
      %85 = dma.hbm_to_vmem [thread:$0]  %s7, 512, %s80, [#allocation10], 128, 128, 8
    $region33: #{tpu_custom_call.1} parent=1 // pred_fallthru
      _
    // Predicated region
    $region34: #{tpu_custom_call.1} parent=1 // pred_check
      _
    $region35: #{tpu_custom_call.1} parent=1 // pred_check_branch
      %87 = sbr.rel (0) target = $region37
    $region36: #{tpu_custom_call.1} parent=1 // pred_region
      _
    $region37: #{tpu_custom_call.1} parent=1 // pred_fallthru
      _
    // Predicated region
    $region38: #{tpu_custom_call.1} parent=1 // pred_check
      _
    $region39: #{tpu_custom_call.1} parent=1 // pred_check_branch
      %89 = sbr.rel (0) target = $region41
    $region40: #{tpu_custom_call.1} parent=1 // pred_region
      _
    $region41: #{tpu_custom_call.1} parent=1 // pred_fallthru
      _
    // Predicated region
    $region42: #{tpu_custom_call.1} parent=1 // pred_check
      _
    $region43: #{tpu_custom_call.1} parent=1 // pred_check_branch
      %91 = sbr.rel (0) target = $region45
    $region44: #{tpu_custom_call.1} parent=1 // pred_region
      _
    $region45: #{tpu_custom_call.1} parent=1 // pred_fallthru
      _
    // Predicated region
    $region46: #{tpu_custom_call.1} parent=1 // pred_check
      _
    $region47: #{tpu_custom_call.1} parent=1 // pred_check_branch
      %93 = sbr.rel (0) target = $region49
    $region48: #{tpu_custom_call.1} parent=1 // pred_region
      %94 = dma.done [#allocation4], 256
    $region49: #{tpu_custom_call.1} parent=1 // pred_fallthru
      _
    // Predicated region
    $region50: #{tpu_custom_call.1} parent=1 // pred_check
      _
    $region51: #{tpu_custom_call.1} parent=1 // pred_check_branch
      %96 = sbr.rel (0) target = $region53
    $region52: #{tpu_custom_call.1} parent=1 // pred_region
      %97 = dma.done [#allocation7], 512
    $region53: #{tpu_custom_call.1} parent=1 // pred_fallthru
      _
    // Predicated region
    $region54: #{tpu_custom_call.1} parent=1 // pred_check
      _
    $region55: #{tpu_custom_call.1} parent=1 // pred_check_branch
      %99 = sbr.rel (0) target = $region57
    $region56: #{tpu_custom_call.1} parent=1 // pred_region
      %100 = dma.done [#allocation7], 2048
    $region57: #{tpu_custom_call.1} parent=1 // pred_fallthru
      _
    // Predicated region
    $region58: #{tpu_custom_call.1} parent=1 // pred_check
      _
    $region59: #{tpu_custom_call.1} parent=1 // pred_check_branch
      %102 = sbr.rel (0) target = $region61
    $region60: #{tpu_custom_call.1} parent=1 // pred_region
      %103 = dma.done [#allocation10], 512
    $region61: #{tpu_custom_call.1} parent=1 // pred_fallthru
      _
    // Predicated region
    $region62: #{tpu_custom_call.1} parent=1 // pred_check
      _
    $region63: #{tpu_custom_call.1} parent=1 // pred_check_branch
      %105 = sbr.rel (0) target = $region65
    $region64: #{tpu_custom_call.1} parent=1 // pred_region
      %106 = dma.done [#allocation10], 512
    $region65: #{tpu_custom_call.1} parent=1 // pred_fallthru
      _
    %v107 = vld [vmem:[#allocation3] sm:$0xff]
    %v108 = vld [vmem:[#allocation3 + $0x8] sm:$0xff]
    %v109 = vld [vmem:[%s1] sm:$0xff]
    %v110 = vld [vmem:[%s1 + $0x8] sm:$0xff]
    %v111 = vld [vmem:[%s1 + $0x10] sm:$0xff]
    %v112 = vld [vmem:[%s1 + $0x18] sm:$0xff]
    %v113 = vld [vmem:[%s4] sm:$0x3]
    %v115 = vlaneseq
    %v116 = vshrl.u32 %v115, 7
    %v117 = vsub.s32 0, %v116
    %v118 = vrot.slane %v113, %v117
    %v119 = vlaneseq
    %v120 = vshrl.u32 %v119, 7
    %v121 = vsub.s32 1, %v120
    %v122 = vrot.slane %v113, %v121
    %vm125 = vcmask 130048
    %v127 = vsel %vm125, %v107, 0
    %v130 = vsel %vm125, %v108, 0
    %132 = vmatprep.subr.mxu0 0.0
    %133 = vmatpush1.msra.mxu0 0.0
    %134 = vmatprep.subr.mxu0 0.0
    %135 = vmatpush1.msra.mxu0 0.0
    %136 = vmatprep.subr.mxu0 0.0
    %137 = vmatpush1.msra.mxu0 0.0
    %138 = vmatprep.subr.mxu0 0.0
    %139 = vmatpush1.msra.mxu0 0.0
    %140 = vmatprep.subr.mxu0 0.0
    %141 = vmatpush1.msra.mxu0 0.0
    %142 = vmatprep.subr.mxu0 0.0
    %143 = vmatpush1.msra.mxu0 0.0
    %144 = vmatprep.subr.mxu0 0.0
    %145 = vmatpush1.msra.mxu0 0.0
    %146 = vmatprep.subr.mxu0 0.0
    %147 = vmatpush1.msra.mxu0 0.0
    %148 = vmatprep.subr.mxu0 0.0
    %149 = vmatpush1.msra.mxu0 0.0
    %150 = vmatprep.subr.mxu0 0.0
    %151 = vmatpush1.msra.mxu0 0.0
    %152 = vmatprep.subr.mxu0 0.0
    %153 = vmatpush1.msra.mxu0 0.0
    %154 = vmatprep.subr.mxu0 0.0
    %155 = vmatpush1.msra.mxu0 0.0
    %156 = vmatprep.subr.mxu0 0.0
    %157 = vmatpush1.msra.mxu0 0.0
    %158 = vmatprep.subr.mxu0 0.0
    %159 = vmatpush1.msra.mxu0 0.0
    %160 = vmatprep.subr.mxu0 %v112
    %161 = vmatpush1.msra.mxu0 %v111
    %162 = vmatprep.subr.mxu0 %v110
    %163 = vmatpush1.msra.mxu0 %v109
    %164 = vmatprep.subr.mxu0 0.0
    %165 = vmatpush2.msra.mxu0 0.0
    %166 = vmatprep.subr.mxu0 0.0
    %167 = vmatpush2.msra.mxu0 0.0
    %168 = vmatprep.subr.mxu0 0.0
    %169 = vmatpush2.msra.mxu0 0.0
    %170 = vmatprep.subr.mxu0 0.0
    %171 = vmatpush2.msra.mxu0 0.0
    %172 = vmatprep.subr.mxu0 0.0
    %173 = vmatpush2.msra.mxu0 0.0
    %174 = vmatprep.subr.mxu0 0.0
    %175 = vmatpush2.msra.mxu0 0.0
    %176 = vmatprep.subr.mxu0 0.0
    %177 = vmatpush2.msra.mxu0 0.0
    %178 = vmatprep.subr.mxu0 0.0
    %179 = vmatpush2.msra.mxu0 0.0
    %180 = vmatprep.subr.mxu0 0.0
    %181 = vmatpush2.msra.mxu0 0.0
    %182 = vmatprep.subr.mxu0 0.0
    %183 = vmatpush2.msra.mxu0 0.0
    %184 = vmatprep.subr.mxu0 0.0
    %185 = vmatpush2.msra.mxu0 0.0
    %186 = vmatprep.subr.mxu0 0.0
    %187 = vmatpush2.msra.mxu0 0.0
    %188 = vmatprep.subr.mxu0 0.0
    %189 = vmatpush2.msra.mxu0 0.0
    %190 = vmatprep.subr.mxu0 0.0
    %191 = vmatpush2.msra.mxu0 0.0
    %192 = vmatprep.subr.mxu0 0.0
    %193 = vmatpush2.msra.mxu0 0.0
    %194 = vmatprep.subr.mxu0 0.0
    %195 = vmatpush2.msra.mxu0 0.0
    %196 = vmatprep.mubr.f32.mxu0 0.0
    %197 = vmatmul.mubr.f32.gmra.mxu0 %v127
    %v198 = vpop.f32.mrf.mxu0
    %v199 = vadd.f32 %v118, %v198
    %v200 = vpop.f32.mrf.mxu0
    %v201 = vadd.f32 %v122, %v200
    %202 = vmatprep.mubr.f32.mxu0 0.0
    %203 = vmatmul.mubr.f32.gmra.mxu0 %v130
    %v204 = vpop.f32.mrf.mxu0
    %v205 = vadd.f32 %v118, %v204
    %v206 = vpop.f32.mrf.mxu0
    %v207 = vadd.f32 %v122, %v206
    %208 = vdwg.mxu0
    %v209 = vld [vmem:[%s2] sm:$0xff]
    %v210 = vld [vmem:[%s2 + $0x8] sm:$0xff]
    %v211 = vld [vmem:[%s2 + $0x10] sm:$0xff]
    %v212 = vld [vmem:[%s2 + $0x18] sm:$0xff]
    %v213 = vld [vmem:[#allocation6] sm:$0xff]
    %v214 = vld [vmem:[#allocation6 + $0x8] sm:$0xff]
    %v215 = vld [vmem:[#allocation6 + $0x10] sm:$0xff]
    %v216 = vld [vmem:[#allocation6 + $0x18] sm:$0xff]
    %vm217 = vcmask 261120
    %v219 = vsel %vm217, 0.0, 0
    %221 = vmatprep.subr.mxu0 0.0
    %222 = vmatpush1.msra.mxu0 0.0
    %223 = vmatprep.subr.mxu0 0.0
    %224 = vmatpush1.msra.mxu0 0.0
    %225 = vmatprep.subr.mxu0 0.0
    %226 = vmatpush1.msra.mxu0 0.0
    %227 = vmatprep.subr.mxu0 0.0
    %228 = vmatpush1.msra.mxu0 0.0
    %229 = vmatprep.subr.mxu0 0.0
    %230 = vmatpush1.msra.mxu0 0.0
    %231 = vmatprep.subr.mxu0 0.0
    %232 = vmatpush1.msra.mxu0 0.0
    %233 = vmatprep.subr.mxu0 0.0
    %234 = vmatpush1.msra.mxu0 0.0
    %235 = vmatprep.subr.mxu0 0.0
    %236 = vmatpush1.msra.mxu0 0.0
    %237 = vmatprep.subr.mxu0 0.0
    %238 = vmatpush1.msra.mxu0 0.0
    %239 = vmatprep.subr.mxu0 0.0
    %240 = vmatpush1.msra.mxu0 0.0
    %241 = vmatprep.subr.mxu0 0.0
    %242 = vmatpush1.msra.mxu0 0.0
    %243 = vmatprep.subr.mxu0 0.0
    %244 = vmatpush1.msra.mxu0 0.0
    %245 = vmatprep.subr.mxu0 0.0
    %246 = vmatpush1.msra.mxu0 %v212
    %247 = vmatprep.subr.mxu0 0.0
    %248 = vmatpush1.msra.mxu0 %v211
    %249 = vmatprep.subr.mxu0 0.0
    %250 = vmatpush1.msra.mxu0 %v210
    %251 = vmatprep.subr.mxu0 0.0
    %252 = vmatpush1.msra.mxu0 %v209
    %253 = vmatprep.subr.mxu0 0.0
    %254 = vmatpush2.msra.mxu0 0.0
    %255 = vmatprep.subr.mxu0 0.0
    %256 = vmatpush2.msra.mxu0 0.0
    %257 = vmatprep.subr.mxu0 0.0
    %258 = vmatpush2.msra.mxu0 0.0
    %259 = vmatprep.subr.mxu0 0.0
    %260 = vmatpush2.msra.mxu0 0.0
    %261 = vmatprep.subr.mxu0 0.0
    %262 = vmatpush2.msra.mxu0 0.0
    %263 = vmatprep.subr.mxu0 0.0
    %264 = vmatpush2.msra.mxu0 0.0
    %265 = vmatprep.subr.mxu0 0.0
    %266 = vmatpush2.msra.mxu0 0.0
    %267 = vmatprep.subr.mxu0 0.0
    %268 = vmatpush2.msra.mxu0 0.0
    %269 = vmatprep.subr.mxu0 0.0
    %270 = vmatpush2.msra.mxu0 0.0
    %271 = vmatprep.subr.mxu0 0.0
    %272 = vmatpush2.msra.mxu0 0.0
    %273 = vmatprep.subr.mxu0 0.0
    %274 = vmatpush2.msra.mxu0 0.0
    %275 = vmatprep.subr.mxu0 0.0
    %276 = vmatpush2.msra.mxu0 0.0
    %277 = vmatprep.subr.mxu0 0.0
    %278 = vmatpush2.msra.mxu0 0.0
    %279 = vmatprep.subr.mxu0 0.0
    %280 = vmatpush2.msra.mxu0 0.0
    %281 = vmatprep.subr.mxu0 0.0
    %282 = vmatpush2.msra.mxu0 0.0
    %283 = vmatprep.subr.mxu0 0.0
    %284 = vmatpush2.msra.mxu0 0.0
    %285 = vmatprep.mubr.f32.mxu0 0.0
    %286 = vmatmul.mubr.f32.gmra.mxu0 %v219
    %v287 = vpop.f32.mrf.mxu0
    %v288 = vadd.f32 0.0, %v287
    %v289 = vpop.f32.mrf.mxu0
    %290 = vdwg.mxu0
    %v291 = vadd.f32 %v199, %v288
    %v292 = vxor.u32 %v291, 2147483648
    %v293 = vmul.f32 %v292, 1.442695
    %v294 = vpow.pop %v293
    %v295 = vadd.f32 %v294, 1.0
    %v296 = vrcp.pop %v295
    %v297 = vmul.f32 1.0, %v296
    %v298 = vtanh.pop %v291
    %v299 = vmul.f32 %v297, 0.0
    %301 = vrot.lane.b32.xlu0 %v298, 64
    %v302 = vpop.permute.xlu0 %301
    %v304 = vmul.f32 %v297, %v302
    %306 = vrot.lane.b32.xlu0 %v304, 32
    %v307 = vpop.permute.xlu0 %306
    %v309 = vadd.f32 %v299, %v307
    %v310 = vtanh.pop %v309
    %312 = vrot.lane.b32.xlu0 %v310, 64
    %v313 = vpop.permute.xlu0 %312
    %v315 = vmul.f32 %v297, %v313
    %316 = vmatprep.subr.mxu0 0.0
    %317 = vmatpush1.msra.mxu0 0.0
    %318 = vmatprep.subr.mxu0 0.0
    %319 = vmatpush1.msra.mxu0 0.0
    %320 = vmatprep.subr.mxu0 0.0
    %321 = vmatpush1.msra.mxu0 0.0
    %322 = vmatprep.subr.mxu0 0.0
    %323 = vmatpush1.msra.mxu0 0.0
    %324 = vmatprep.subr.mxu0 0.0
    %325 = vmatpush1.msra.mxu0 0.0
    %326 = vmatprep.subr.mxu0 0.0
    %327 = vmatpush1.msra.mxu0 0.0
    %328 = vmatprep.subr.mxu0 0.0
    %329 = vmatpush1.msra.mxu0 0.0
    %330 = vmatprep.subr.mxu0 0.0
    %331 = vmatpush1.msra.mxu0 0.0
    %332 = vmatprep.subr.mxu0 0.0
    %333 = vmatpush1.msra.mxu0 0.0
    %334 = vmatprep.subr.mxu0 0.0
    %335 = vmatpush1.msra.mxu0 0.0
    %336 = vmatprep.subr.mxu0 0.0
    %337 = vmatpush1.msra.mxu0 0.0
    %338 = vmatprep.subr.mxu0 0.0
    %339 = vmatpush1.msra.mxu0 0.0
    %340 = vmatprep.subr.mxu0 0.0
    %341 = vmatpush1.msra.mxu0 %v216
    %342 = vmatprep.subr.mxu0 0.0
    %343 = vmatpush1.msra.mxu0 %v215
    %344 = vmatprep.subr.mxu0 0.0
    %345 = vmatpush1.msra.mxu0 %v214
    %346 = vmatprep.subr.mxu0 0.0
    %347 = vmatpush1.msra.mxu0 %v213
    %348 = vmatprep.subr.mxu0 0.0
    %349 = vmatpush2.msra.mxu0 0.0
    %350 = vmatprep.subr.mxu0 0.0
    %351 = vmatpush2.msra.mxu0 0.0
    %352 = vmatprep.subr.mxu0 0.0
    %353 = vmatpush2.msra.mxu0 0.0
    %354 = vmatprep.subr.mxu0 0.0
    %355 = vmatpush2.msra.mxu0 0.0
    %356 = vmatprep.subr.mxu0 0.0
    %357 = vmatpush2.msra.mxu0 0.0
    %358 = vmatprep.subr.mxu0 0.0
    %359 = vmatpush2.msra.mxu0 0.0
    %360 = vmatprep.subr.mxu0 0.0
    %361 = vmatpush2.msra.mxu0 0.0
    %362 = vmatprep.subr.mxu0 0.0
    %363 = vmatpush2.msra.mxu0 0.0
    %364 = vmatprep.subr.mxu0 0.0
    %365 = vmatpush2.msra.mxu0 0.0
    %366 = vmatprep.subr.mxu0 0.0
    %367 = vmatpush2.msra.mxu0 0.0
    %368 = vmatprep.subr.mxu0 0.0
    %369 = vmatpush2.msra.mxu0 0.0
    %370 = vmatprep.subr.mxu0 0.0
    %371 = vmatpush2.msra.mxu0 0.0
    %372 = vmatprep.subr.mxu0 0.0
    %373 = vmatpush2.msra.mxu0 0.0
    %374 = vmatprep.subr.mxu0 0.0
    %375 = vmatpush2.msra.mxu0 0.0
    %376 = vmatprep.subr.mxu0 0.0
    %377 = vmatpush2.msra.mxu0 0.0
    %378 = vmatprep.subr.mxu0 0.0
    %379 = vmatpush2.msra.mxu0 0.0
    %380 = vmatprep.mubr.f32.mxu0 0.0
    %381 = vmatmul.mubr.f32.gmra.mxu0 %v219
    %v382 = vpop.f32.mrf.mxu0
    %v383 = vadd.f32 0.0, %v382
    %v384 = vpop.f32.mrf.mxu0
    %385 = vdwg.mxu0
    %v387 = vrot.slane %v383, 2
    %v389 = vadd.f32 %v207, %v387
    %v390 = vxor.u32 %v389, 2147483648
    %v391 = vmul.f32 %v390, 1.442695
    %v392 = vpow.pop %v391
    %v393 = vadd.f32 %v392, 1.0
    %v394 = vrcp.pop %v393
    %v395 = vmul.f32 1.0, %v394
    %v396 = vtanh.pop %v389
    %v397 = vmul.f32 %v395, 0.0
    %399 = vrot.lane.b32.xlu0 %v396, 64
    %v400 = vpop.permute.xlu0 %399
    %v402 = vmul.f32 %v395, %v400
    %404 = vrot.lane.b32.xlu0 %v402, 32
    %v405 = vpop.permute.xlu0 %404
    %v407 = vadd.f32 %v397, %v405
    %v408 = vtanh.pop %v407
    %410 = vrot.lane.b32.xlu0 %v408, 64
    %v411 = vpop.permute.xlu0 %410
    %v413 = vmul.f32 %v395, %v411
    %415 = vrot.lane.b32.xlu0 %v315, 32
    %v416 = vpop.permute.xlu0 %415
    %vm418 = vcmask 254976
    %419 = vst.msk [vmem:[#allocation2] sm:$0x3] %vm418, %v416
    %421 = vrot.lane.b32.xlu0 %v413, 64
    %v422 = vpop.permute.xlu0 %421
    %vm424 = vcmask 523526
    %425 = vst.msk [vmem:[#allocation2 + $0x8] sm:$0xc0] %vm424, %v422
    %v426 = vsel %vm217, %v416, 0
    %428 = vmatprep.subr.mxu0 0.0
    %429 = vmatpush1.msra.mxu0 0.0
    %430 = vmatprep.subr.mxu0 0.0
    %431 = vmatpush1.msra.mxu0 0.0
    %432 = vmatprep.subr.mxu0 0.0
    %433 = vmatpush1.msra.mxu0 0.0
    %434 = vmatprep.subr.mxu0 0.0
    %435 = vmatpush1.msra.mxu0 0.0
    %436 = vmatprep.subr.mxu0 0.0
    %437 = vmatpush1.msra.mxu0 0.0
    %438 = vmatprep.subr.mxu0 0.0
    %439 = vmatpush1.msra.mxu0 0.0
    %440 = vmatprep.subr.mxu0 0.0
    %441 = vmatpush1.msra.mxu0 0.0
    %442 = vmatprep.subr.mxu0 0.0
    %443 = vmatpush1.msra.mxu0 0.0
    %444 = vmatprep.subr.mxu0 0.0
    %445 = vmatpush1.msra.mxu0 0.0
    %446 = vmatprep.subr.mxu0 0.0
    %447 = vmatpush1.msra.mxu0 0.0
    %448 = vmatprep.subr.mxu0 0.0
    %449 = vmatpush1.msra.mxu0 0.0
    %450 = vmatprep.subr.mxu0 0.0
    %451 = vmatpush1.msra.mxu0 0.0
    %452 = vmatprep.subr.mxu0 0.0
    %453 = vmatpush1.msra.mxu0 %v212
    %454 = vmatprep.subr.mxu0 0.0
    %455 = vmatpush1.msra.mxu0 %v211
    %456 = vmatprep.subr.mxu0 0.0
    %457 = vmatpush1.msra.mxu0 %v210
    %458 = vmatprep.subr.mxu0 0.0
    %459 = vmatpush1.msra.mxu0 %v209
    %460 = vmatprep.subr.mxu0 0.0
    %461 = vmatpush2.msra.mxu0 0.0
    %462 = vmatprep.subr.mxu0 0.0
    %463 = vmatpush2.msra.mxu0 0.0
    %464 = vmatprep.subr.mxu0 0.0
    %465 = vmatpush2.msra.mxu0 0.0
    %466 = vmatprep.subr.mxu0 0.0
    %467 = vmatpush2.msra.mxu0 0.0
    %468 = vmatprep.subr.mxu0 0.0
    %469 = vmatpush2.msra.mxu0 0.0
    %470 = vmatprep.subr.mxu0 0.0
    %471 = vmatpush2.msra.mxu0 0.0
    %472 = vmatprep.subr.mxu0 0.0
    %473 = vmatpush2.msra.mxu0 0.0
    %474 = vmatprep.subr.mxu0 0.0
    %475 = vmatpush2.msra.mxu0 0.0
    %476 = vmatprep.subr.mxu0 0.0
    %477 = vmatpush2.msra.mxu0 0.0
    %478 = vmatprep.subr.mxu0 0.0
    %479 = vmatpush2.msra.mxu0 0.0
    %480 = vmatprep.subr.mxu0 0.0
    %481 = vmatpush2.msra.mxu0 0.0
    %482 = vmatprep.subr.mxu0 0.0
    %483 = vmatpush2.msra.mxu0 0.0
    %484 = vmatprep.subr.mxu0 0.0
    %485 = vmatpush2.msra.mxu0 0.0
    %486 = vmatprep.subr.mxu0 0.0
    %487 = vmatpush2.msra.mxu0 0.0
    %488 = vmatprep.subr.mxu0 0.0
    %489 = vmatpush2.msra.mxu0 0.0
    %490 = vmatprep.subr.mxu0 0.0
    %491 = vmatpush2.msra.mxu0 0.0
    %492 = vmatprep.mubr.f32.mxu0 0.0
    %493 = vmatmul.mubr.f32.gmra.mxu0 %v426
    %v494 = vpop.f32.mrf.mxu0
    %v495 = vadd.f32 0.0, %v494
    %v496 = vpop.f32.mrf.mxu0
    %497 = vdwg.mxu0
    %v499 = vrot.slane %v495, 6
    %v501 = vadd.f32 %v199, %v499
    %v502 = vxor.u32 %v501, 2147483648
    %v503 = vmul.f32 %v502, 1.442695
    %v504 = vpow.pop %v503
    %v505 = vadd.f32 %v504, 1.0
    %v506 = vrcp.pop %v505
    %v507 = vmul.f32 1.0, %v506
    %v508 = vtanh.pop %v501
    %v510 = vrot.slane %v309, 6
    %v512 = vmul.f32 %v507, %v510
    %514 = vrot.lane.b32.xlu0 %v508, 64
    %v515 = vpop.permute.xlu0 %514
    %v517 = vmul.f32 %v507, %v515
    %519 = vrot.lane.b32.xlu0 %v517, 32
    %v520 = vpop.permute.xlu0 %519
    %v522 = vadd.f32 %v512, %v520
    %v523 = vtanh.pop %v522
    %525 = vrot.lane.b32.xlu0 %v523, 64
    %v526 = vpop.permute.xlu0 %525
    %v528 = vmul.f32 %v507, %v526
    %v529 = vrot.slane %v413, 6
    %530 = vrot.lane.b32.xlu0 %v529, 32
    %v531 = vpop.permute.xlu0 %530
    %v532 = vsel %vm217, %v531, 0
    %534 = vmatprep.subr.mxu0 0.0
    %535 = vmatpush1.msra.mxu0 0.0
    %536 = vmatprep.subr.mxu0 0.0
    %537 = vmatpush1.msra.mxu0 0.0
    %538 = vmatprep.subr.mxu0 0.0
    %539 = vmatpush1.msra.mxu0 0.0
    %540 = vmatprep.subr.mxu0 0.0
    %541 = vmatpush1.msra.mxu0 0.0
    %542 = vmatprep.subr.mxu0 0.0
    %543 = vmatpush1.msra.mxu0 0.0
    %544 = vmatprep.subr.mxu0 0.0
    %545 = vmatpush1.msra.mxu0 0.0
    %546 = vmatprep.subr.mxu0 0.0
    %547 = vmatpush1.msra.mxu0 0.0
    %548 = vmatprep.subr.mxu0 0.0
    %549 = vmatpush1.msra.mxu0 0.0
    %550 = vmatprep.subr.mxu0 0.0
    %551 = vmatpush1.msra.mxu0 0.0
    %552 = vmatprep.subr.mxu0 0.0
    %553 = vmatpush1.msra.mxu0 0.0
    %554 = vmatprep.subr.mxu0 0.0
    %555 = vmatpush1.msra.mxu0 0.0
    %556 = vmatprep.subr.mxu0 0.0
    %557 = vmatpush1.msra.mxu0 0.0
    %558 = vmatprep.subr.mxu0 0.0
    %559 = vmatpush1.msra.mxu0 %v216
    %560 = vmatprep.subr.mxu0 0.0
    %561 = vmatpush1.msra.mxu0 %v215
    %562 = vmatprep.subr.mxu0 0.0
    %563 = vmatpush1.msra.mxu0 %v214
    %564 = vmatprep.subr.mxu0 0.0
    %565 = vmatpush1.msra.mxu0 %v213
    %566 = vmatprep.subr.mxu0 0.0
    %567 = vmatpush2.msra.mxu0 0.0
    %568 = vmatprep.subr.mxu0 0.0
    %569 = vmatpush2.msra.mxu0 0.0
    %570 = vmatprep.subr.mxu0 0.0
    %571 = vmatpush2.msra.mxu0 0.0
    %572 = vmatprep.subr.mxu0 0.0
    %573 = vmatpush2.msra.mxu0 0.0
    %574 = vmatprep.subr.mxu0 0.0
    %575 = vmatpush2.msra.mxu0 0.0
    %576 = vmatprep.subr.mxu0 0.0
    %577 = vmatpush2.msra.mxu0 0.0
    %578 = vmatprep.subr.mxu0 0.0
    %579 = vmatpush2.msra.mxu0 0.0
    %580 = vmatprep.subr.mxu0 0.0
    %581 = vmatpush2.msra.mxu0 0.0
    %582 = vmatprep.subr.mxu0 0.0
    %583 = vmatpush2.msra.mxu0 0.0
    %584 = vmatprep.subr.mxu0 0.0
    %585 = vmatpush2.msra.mxu0 0.0
    %586 = vmatprep.subr.mxu0 0.0
    %587 = vmatpush2.msra.mxu0 0.0
    %588 = vmatprep.subr.mxu0 0.0
    %589 = vmatpush2.msra.mxu0 0.0
    %590 = vmatprep.subr.mxu0 0.0
    %591 = vmatpush2.msra.mxu0 0.0
    %592 = vmatprep.subr.mxu0 0.0
    %593 = vmatpush2.msra.mxu0 0.0
    %594 = vmatprep.subr.mxu0 0.0
    %595 = vmatpush2.msra.mxu0 0.0
    %596 = vmatprep.subr.mxu0 0.0
    %597 = vmatpush2.msra.mxu0 0.0
    %598 = vmatprep.mubr.f32.mxu0 0.0
    %599 = vmatmul.mubr.f32.gmra.mxu0 %v532
    %v600 = vpop.f32.mrf.mxu0
    %v601 = vadd.f32 0.0, %v600
    %v602 = vpop.f32.mrf.mxu0
    %603 = vdwg.mxu0
    %v605 = vrot.slane %v601, 4
    %v607 = vadd.f32 %v207, %v605
    %v608 = vxor.u32 %v607, 2147483648
    %v609 = vmul.f32 %v608, 1.442695
    %v610 = vpow.pop %v609
    %v611 = vadd.f32 %v610, 1.0
    %v612 = vrcp.pop %v611
    %v613 = vmul.f32 1.0, %v612
    %v614 = vtanh.pop %v607
    %v616 = vrot.slane %v407, 2
    %v618 = vmul.f32 %v613, %v616
    %620 = vrot.lane.b32.xlu0 %v614, 64
    %v621 = vpop.permute.xlu0 %620
    %v623 = vmul.f32 %v613, %v621
    %625 = vrot.lane.b32.xlu0 %v623, 32
    %v626 = vpop.permute.xlu0 %625
    %v628 = vadd.f32 %v618, %v626
    %v629 = vtanh.pop %v628
    %631 = vrot.lane.b32.xlu0 %v629, 64
    %v632 = vpop.permute.xlu0 %631
    %v634 = vmul.f32 %v613, %v632
    %636 = vrot.lane.b32.xlu0 %v528, 32
    %v637 = vpop.permute.xlu0 %636
    %vm639 = vcmask 257026
    %640 = vst.msk [vmem:[#allocation2] sm:$0xc] %vm639, %v637
    %642 = vrot.lane.b32.xlu0 %v634, 64
    %v643 = vpop.permute.xlu0 %642
    %vm645 = vcmask 521476
    %646 = vst.msk [vmem:[#allocation2 + $0x8] sm:$0x30] %vm645, %v643
    %v647 = vrot.slane %v528, 2
    %648 = vrot.lane.b32.xlu0 %v647, 32
    %v649 = vpop.permute.xlu0 %648
    %v650 = vsel %vm217, %v649, 0
    %652 = vmatprep.subr.mxu0 0.0
    %653 = vmatpush1.msra.mxu0 0.0
    %654 = vmatprep.subr.mxu0 0.0
    %655 = vmatpush1.msra.mxu0 0.0
    %656 = vmatprep.subr.mxu0 0.0
    %657 = vmatpush1.msra.mxu0 0.0
    %658 = vmatprep.subr.mxu0 0.0
    %659 = vmatpush1.msra.mxu0 0.0
    %660 = vmatprep.subr.mxu0 0.0
    %661 = vmatpush1.msra.mxu0 0.0
    %662 = vmatprep.subr.mxu0 0.0
    %663 = vmatpush1.msra.mxu0 0.0
    %664 = vmatprep.subr.mxu0 0.0
    %665 = vmatpush1.msra.mxu0 0.0
    %666 = vmatprep.subr.mxu0 0.0
    %667 = vmatpush1.msra.mxu0 0.0
    %668 = vmatprep.subr.mxu0 0.0
    %669 = vmatpush1.msra.mxu0 0.0
    %670 = vmatprep.subr.mxu0 0.0
    %671 = vmatpush1.msra.mxu0 0.0
    %672 = vmatprep.subr.mxu0 0.0
    %673 = vmatpush1.msra.mxu0 0.0
    %674 = vmatprep.subr.mxu0 0.0
    %675 = vmatpush1.msra.mxu0 0.0
    %676 = vmatprep.subr.mxu0 0.0
    %677 = vmatpush1.msra.mxu0 %v212
    %678 = vmatprep.subr.mxu0 0.0
    %679 = vmatpush1.msra.mxu0 %v211
    %680 = vmatprep.subr.mxu0 0.0
    %681 = vmatpush1.msra.mxu0 %v210
    %682 = vmatprep.subr.mxu0 0.0
    %683 = vmatpush1.msra.mxu0 %v209
    %684 = vmatprep.subr.mxu0 0.0
    %685 = vmatpush2.msra.mxu0 0.0
    %686 = vmatprep.subr.mxu0 0.0
    %687 = vmatpush2.msra.mxu0 0.0
    %688 = vmatprep.subr.mxu0 0.0
    %689 = vmatpush2.msra.mxu0 0.0
    %690 = vmatprep.subr.mxu0 0.0
    %691 = vmatpush2.msra.mxu0 0.0
    %692 = vmatprep.subr.mxu0 0.0
    %693 = vmatpush2.msra.mxu0 0.0
    %694 = vmatprep.subr.mxu0 0.0
    %695 = vmatpush2.msra.mxu0 0.0
    %696 = vmatprep.subr.mxu0 0.0
    %697 = vmatpush2.msra.mxu0 0.0
    %698 = vmatprep.subr.mxu0 0.0
    %699 = vmatpush2.msra.mxu0 0.0
    %700 = vmatprep.subr.mxu0 0.0
    %701 = vmatpush2.msra.mxu0 0.0
    %702 = vmatprep.subr.mxu0 0.0
    %703 = vmatpush2.msra.mxu0 0.0
    %704 = vmatprep.subr.mxu0 0.0
    %705 = vmatpush2.msra.mxu0 0.0
    %706 = vmatprep.subr.mxu0 0.0
    %707 = vmatpush2.msra.mxu0 0.0
    %708 = vmatprep.subr.mxu0 0.0
    %709 = vmatpush2.msra.mxu0 0.0
    %710 = vmatprep.subr.mxu0 0.0
    %711 = vmatpush2.msra.mxu0 0.0
    %712 = vmatprep.subr.mxu0 0.0
    %713 = vmatpush2.msra.mxu0 0.0
    %714 = vmatprep.subr.mxu0 0.0
    %715 = vmatpush2.msra.mxu0 0.0
    %716 = vmatprep.mubr.f32.mxu0 0.0
    %717 = vmatmul.mubr.f32.gmra.mxu0 %v650
    %v718 = vpop.f32.mrf.mxu0
    %v719 = vadd.f32 0.0, %v718
    %v720 = vpop.f32.mrf.mxu0
    %721 = vdwg.mxu0
    %v723 = vrot.slane %v719, 4
    %v725 = vadd.f32 %v199, %v723
    %v726 = vxor.u32 %v725, 2147483648
    %v727 = vmul.f32 %v726, 1.442695
    %v728 = vpow.pop %v727
    %v729 = vadd.f32 %v728, 1.0
    %v730 = vrcp.pop %v729
    %v731 = vmul.f32 1.0, %v730
    %v732 = vtanh.pop %v725
    %v734 = vrot.slane %v522, 6
    %v736 = vmul.f32 %v731, %v734
    %738 = vrot.lane.b32.xlu0 %v732, 64
    %v739 = vpop.permute.xlu0 %738
    %v741 = vmul.f32 %v731, %v739
    %743 = vrot.lane.b32.xlu0 %v741, 32
    %v744 = vpop.permute.xlu0 %743
    %v746 = vadd.f32 %v736, %v744
    %v747 = vtanh.pop %v746
    %749 = vrot.lane.b32.xlu0 %v747, 64
    %v750 = vpop.permute.xlu0 %749
    %v752 = vmul.f32 %v731, %v750
    %v753 = vrot.slane %v634, 4
    %754 = vrot.lane.b32.xlu0 %v753, 32
    %v755 = vpop.permute.xlu0 %754
    %v756 = vsel %vm217, %v755, 0
    %758 = vmatprep.subr.mxu0 0.0
    %759 = vmatpush1.msra.mxu0 0.0
    %760 = vmatprep.subr.mxu0 0.0
    %761 = vmatpush1.msra.mxu0 0.0
    %762 = vmatprep.subr.mxu0 0.0
    %763 = vmatpush1.msra.mxu0 0.0
    %764 = vmatprep.subr.mxu0 0.0
    %765 = vmatpush1.msra.mxu0 0.0
    %766 = vmatprep.subr.mxu0 0.0
    %767 = vmatpush1.msra.mxu0 0.0
    %768 = vmatprep.subr.mxu0 0.0
    %769 = vmatpush1.msra.mxu0 0.0
    %770 = vmatprep.subr.mxu0 0.0
    %771 = vmatpush1.msra.mxu0 0.0
    %772 = vmatprep.subr.mxu0 0.0
    %773 = vmatpush1.msra.mxu0 0.0
    %774 = vmatprep.subr.mxu0 0.0
    %775 = vmatpush1.msra.mxu0 0.0
    %776 = vmatprep.subr.mxu0 0.0
    %777 = vmatpush1.msra.mxu0 0.0
    %778 = vmatprep.subr.mxu0 0.0
    %779 = vmatpush1.msra.mxu0 0.0
    %780 = vmatprep.subr.mxu0 0.0
    %781 = vmatpush1.msra.mxu0 0.0
    %782 = vmatprep.subr.mxu0 0.0
    %783 = vmatpush1.msra.mxu0 %v216
    %784 = vmatprep.subr.mxu0 0.0
    %785 = vmatpush1.msra.mxu0 %v215
    %786 = vmatprep.subr.mxu0 0.0
    %787 = vmatpush1.msra.mxu0 %v214
    %788 = vmatprep.subr.mxu0 0.0
    %789 = vmatpush1.msra.mxu0 %v213
    %790 = vmatprep.subr.mxu0 0.0
    %791 = vmatpush2.msra.mxu0 0.0
    %792 = vmatprep.subr.mxu0 0.0
    %793 = vmatpush2.msra.mxu0 0.0
    %794 = vmatprep.subr.mxu0 0.0
    %795 = vmatpush2.msra.mxu0 0.0
    %796 = vmatprep.subr.mxu0 0.0
    %797 = vmatpush2.msra.mxu0 0.0
    %798 = vmatprep.subr.mxu0 0.0
    %799 = vmatpush2.msra.mxu0 0.0
    %800 = vmatprep.subr.mxu0 0.0
    %801 = vmatpush2.msra.mxu0 0.0
    %802 = vmatprep.subr.mxu0 0.0
    %803 = vmatpush2.msra.mxu0 0.0
    %804 = vmatprep.subr.mxu0 0.0
    %805 = vmatpush2.msra.mxu0 0.0
    %806 = vmatprep.subr.mxu0 0.0
    %807 = vmatpush2.msra.mxu0 0.0
    %808 = vmatprep.subr.mxu0 0.0
    %809 = vmatpush2.msra.mxu0 0.0
    %810 = vmatprep.subr.mxu0 0.0
    %811 = vmatpush2.msra.mxu0 0.0
    %812 = vmatprep.subr.mxu0 0.0
    %813 = vmatpush2.msra.mxu0 0.0
    %814 = vmatprep.subr.mxu0 0.0
    %815 = vmatpush2.msra.mxu0 0.0
    %816 = vmatprep.subr.mxu0 0.0
    %817 = vmatpush2.msra.mxu0 0.0
    %818 = vmatprep.subr.mxu0 0.0
    %819 = vmatpush2.msra.mxu0 0.0
    %820 = vmatprep.subr.mxu0 0.0
    %821 = vmatpush2.msra.mxu0 0.0
    %822 = vmatprep.mubr.f32.mxu0 0.0
    %823 = vmatmul.mubr.f32.gmra.mxu0 %v756
    %v824 = vpop.f32.mrf.mxu0
    %v825 = vadd.f32 0.0, %v824
    %v826 = vpop.f32.mrf.mxu0
    %827 = vdwg.mxu0
    %v829 = vrot.slane %v825, 6
    %v831 = vadd.f32 %v207, %v829
    %v832 = vxor.u32 %v831, 2147483648
    %v833 = vmul.f32 %v832, 1.442695
    %v834 = vpow.pop %v833
    %v835 = vadd.f32 %v834, 1.0
    %v836 = vrcp.pop %v835
    %v837 = vmul.f32 1.0, %v836
    %v838 = vtanh.pop %v831
    %v840 = vrot.slane %v628, 2
    %v842 = vmul.f32 %v837, %v840
    %844 = vrot.lane.b32.xlu0 %v838, 64
    %v845 = vpop.permute.xlu0 %844
    %v847 = vmul.f32 %v837, %v845
    %849 = vrot.lane.b32.xlu0 %v847, 32
    %v850 = vpop.permute.xlu0 %849
    %v852 = vadd.f32 %v842, %v850
    %v853 = vtanh.pop %v852
    %855 = vrot.lane.b32.xlu0 %v853, 64
    %v856 = vpop.permute.xlu0 %855
    %v858 = vmul.f32 %v837, %v856
    %860 = vrot.lane.b32.xlu0 %v752, 32
    %v861 = vpop.permute.xlu0 %860
    %vm863 = vcmask 259076
    %864 = vst.msk [vmem:[#allocation2] sm:$0x30] %vm863, %v861
    %866 = vrot.lane.b32.xlu0 %v858, 64
    %v867 = vpop.permute.xlu0 %866
    %vm869 = vcmask 519426
    %870 = vst.msk [vmem:[#allocation2 + $0x8] sm:$0xc] %vm869, %v867
    %v871 = vrot.slane %v752, 4
    %872 = vrot.lane.b32.xlu0 %v871, 32
    %v873 = vpop.permute.xlu0 %872
    %v874 = vsel %vm217, %v873, 0
    %876 = vmatprep.subr.mxu0 0.0
    %877 = vmatpush1.msra.mxu0 0.0
    %878 = vmatprep.subr.mxu0 0.0
    %879 = vmatpush1.msra.mxu0 0.0
    %880 = vmatprep.subr.mxu0 0.0
    %881 = vmatpush1.msra.mxu0 0.0
    %882 = vmatprep.subr.mxu0 0.0
    %883 = vmatpush1.msra.mxu0 0.0
    %884 = vmatprep.subr.mxu0 0.0
    %885 = vmatpush1.msra.mxu0 0.0
    %886 = vmatprep.subr.mxu0 0.0
    %887 = vmatpush1.msra.mxu0 0.0
    %888 = vmatprep.subr.mxu0 0.0
    %889 = vmatpush1.msra.mxu0 0.0
    %890 = vmatprep.subr.mxu0 0.0
    %891 = vmatpush1.msra.mxu0 0.0
    %892 = vmatprep.subr.mxu0 0.0
    %893 = vmatpush1.msra.mxu0 0.0
    %894 = vmatprep.subr.mxu0 0.0
    %895 = vmatpush1.msra.mxu0 0.0
    %896 = vmatprep.subr.mxu0 0.0
    %897 = vmatpush1.msra.mxu0 0.0
    %898 = vmatprep.subr.mxu0 0.0
    %899 = vmatpush1.msra.mxu0 0.0
    %900 = vmatprep.subr.mxu0 0.0
    %901 = vmatpush1.msra.mxu0 %v212
    %902 = vmatprep.subr.mxu0 0.0
    %903 = vmatpush1.msra.mxu0 %v211
    %904 = vmatprep.subr.mxu0 0.0
    %905 = vmatpush1.msra.mxu0 %v210
    %906 = vmatprep.subr.mxu0 0.0
    %907 = vmatpush1.msra.mxu0 %v209
    %908 = vmatprep.subr.mxu0 0.0
    %909 = vmatpush2.msra.mxu0 0.0
    %910 = vmatprep.subr.mxu0 0.0
    %911 = vmatpush2.msra.mxu0 0.0
    %912 = vmatprep.subr.mxu0 0.0
    %913 = vmatpush2.msra.mxu0 0.0
    %914 = vmatprep.subr.mxu0 0.0
    %915 = vmatpush2.msra.mxu0 0.0
    %916 = vmatprep.subr.mxu0 0.0
    %917 = vmatpush2.msra.mxu0 0.0
    %918 = vmatprep.subr.mxu0 0.0
    %919 = vmatpush2.msra.mxu0 0.0
    %920 = vmatprep.subr.mxu0 0.0
    %921 = vmatpush2.msra.mxu0 0.0
    %922 = vmatprep.subr.mxu0 0.0
    %923 = vmatpush2.msra.mxu0 0.0
    %924 = vmatprep.subr.mxu0 0.0
    %925 = vmatpush2.msra.mxu0 0.0
    %926 = vmatprep.subr.mxu0 0.0
    %927 = vmatpush2.msra.mxu0 0.0
    %928 = vmatprep.subr.mxu0 0.0
    %929 = vmatpush2.msra.mxu0 0.0
    %930 = vmatprep.subr.mxu0 0.0
    %931 = vmatpush2.msra.mxu0 0.0
    %932 = vmatprep.subr.mxu0 0.0
    %933 = vmatpush2.msra.mxu0 0.0
    %934 = vmatprep.subr.mxu0 0.0
    %935 = vmatpush2.msra.mxu0 0.0
    %936 = vmatprep.subr.mxu0 0.0
    %937 = vmatpush2.msra.mxu0 0.0
    %938 = vmatprep.subr.mxu0 0.0
    %939 = vmatpush2.msra.mxu0 0.0
    %940 = vmatprep.mubr.f32.mxu0 0.0
    %941 = vmatmul.mubr.f32.gmra.mxu0 %v874
    %v942 = vpop.f32.mrf.mxu0
    %v943 = vadd.f32 0.0, %v942
    %v944 = vpop.f32.mrf.mxu0
    %945 = vdwg.mxu0
    %v947 = vrot.slane %v943, 2
    %v949 = vadd.f32 %v199, %v947
    %v950 = vxor.u32 %v949, 2147483648
    %v951 = vmul.f32 %v950, 1.442695
    %v952 = vpow.pop %v951
    %v953 = vadd.f32 %v952, 1.0
    %v954 = vrcp.pop %v953
    %v955 = vmul.f32 1.0, %v954
    %v956 = vtanh.pop %v949
    %v958 = vrot.slane %v746, 6
    %v960 = vmul.f32 %v955, %v958
    %962 = vrot.lane.b32.xlu0 %v956, 64
    %v963 = vpop.permute.xlu0 %962
    %v965 = vmul.f32 %v955, %v963
    %967 = vrot.lane.b32.xlu0 %v965, 32
    %v968 = vpop.permute.xlu0 %967
    %v970 = vadd.f32 %v960, %v968
    %v971 = vtanh.pop %v970
    %973 = vrot.lane.b32.xlu0 %v971, 64
    %v974 = vpop.permute.xlu0 %973
    %v976 = vmul.f32 %v955, %v974
    %v977 = vrot.slane %v858, 2
    %978 = vrot.lane.b32.xlu0 %v977, 32
    %v979 = vpop.permute.xlu0 %978
    %v980 = vsel %vm217, %v979, 0
    %982 = vmatprep.subr.mxu0 0.0
    %983 = vmatpush1.msra.mxu0 0.0
    %984 = vmatprep.subr.mxu0 0.0
    %985 = vmatpush1.msra.mxu0 0.0
    %986 = vmatprep.subr.mxu0 0.0
    %987 = vmatpush1.msra.mxu0 0.0
    %988 = vmatprep.subr.mxu0 0.0
    %989 = vmatpush1.msra.mxu0 0.0
    %990 = vmatprep.subr.mxu0 0.0
    %991 = vmatpush1.msra.mxu0 0.0
    %992 = vmatprep.subr.mxu0 0.0
    %993 = vmatpush1.msra.mxu0 0.0
    %994 = vmatprep.subr.mxu0 0.0
    %995 = vmatpush1.msra.mxu0 0.0
    %996 = vmatprep.subr.mxu0 0.0
    %997 = vmatpush1.msra.mxu0 0.0
    %998 = vmatprep.subr.mxu0 0.0
    %999 = vmatpush1.msra.mxu0 0.0
    %1000 = vmatprep.subr.mxu0 0.0
    %1001 = vmatpush1.msra.mxu0 0.0
    %1002 = vmatprep.subr.mxu0 0.0
    %1003 = vmatpush1.msra.mxu0 0.0
    %1004 = vmatprep.subr.mxu0 0.0
    %1005 = vmatpush1.msra.mxu0 0.0
    %1006 = vmatprep.subr.mxu0 0.0
    %1007 = vmatpush1.msra.mxu0 %v216
    %1008 = vmatprep.subr.mxu0 0.0
    %1009 = vmatpush1.msra.mxu0 %v215
    %1010 = vmatprep.subr.mxu0 0.0
    %1011 = vmatpush1.msra.mxu0 %v214
    %1012 = vmatprep.subr.mxu0 0.0
    %1013 = vmatpush1.msra.mxu0 %v213
    %1014 = vmatprep.subr.mxu0 0.0
    %1015 = vmatpush2.msra.mxu0 0.0
    %1016 = vmatprep.subr.mxu0 0.0
    %1017 = vmatpush2.msra.mxu0 0.0
    %1018 = vmatprep.subr.mxu0 0.0
    %1019 = vmatpush2.msra.mxu0 0.0
    %1020 = vmatprep.subr.mxu0 0.0
    %1021 = vmatpush2.msra.mxu0 0.0
    %1022 = vmatprep.subr.mxu0 0.0
    %1023 = vmatpush2.msra.mxu0 0.0
    %1024 = vmatprep.subr.mxu0 0.0
    %1025 = vmatpush2.msra.mxu0 0.0
    %1026 = vmatprep.subr.mxu0 0.0
    %1027 = vmatpush2.msra.mxu0 0.0
    %1028 = vmatprep.subr.mxu0 0.0
    %1029 = vmatpush2.msra.mxu0 0.0
    %1030 = vmatprep.subr.mxu0 0.0
    %1031 = vmatpush2.msra.mxu0 0.0
    %1032 = vmatprep.subr.mxu0 0.0
    %1033 = vmatpush2.msra.mxu0 0.0
    %1034 = vmatprep.subr.mxu0 0.0
    %1035 = vmatpush2.msra.mxu0 0.0
    %1036 = vmatprep.subr.mxu0 0.0
    %1037 = vmatpush2.msra.mxu0 0.0
    %1038 = vmatprep.subr.mxu0 0.0
    %1039 = vmatpush2.msra.mxu0 0.0
    %1040 = vmatprep.subr.mxu0 0.0
    %1041 = vmatpush2.msra.mxu0 0.0
    %1042 = vmatprep.subr.mxu0 0.0
    %1043 = vmatpush2.msra.mxu0 0.0
    %1044 = vmatprep.subr.mxu0 0.0
    %1045 = vmatpush2.msra.mxu0 0.0
    %1046 = vmatprep.mubr.f32.mxu0 0.0
    %1047 = vmatmul.mubr.f32.gmra.mxu0 %v980
    %v1048 = vpop.f32.mrf.mxu0
    %v1049 = vadd.f32 0.0, %v1048
    %v1050 = vpop.f32.mrf.mxu0
    %1051 = vdwg.mxu0
    %v1052 = vadd.f32 %v207, %v1049
    %v1053 = vxor.u32 %v1052, 2147483648
    %v1054 = vmul.f32 %v1053, 1.442695
    %v1055 = vpow.pop %v1054
    %v1056 = vadd.f32 %v1055, 1.0
    %v1057 = vrcp.pop %v1056
    %v1058 = vmul.f32 1.0, %v1057
    %v1059 = vtanh.pop %v1052
    %v1061 = vrot.slane %v852, 2
    %v1063 = vmul.f32 %v1058, %v1061
    %1065 = vrot.lane.b32.xlu0 %v1059, 64
    %v1066 = vpop.permute.xlu0 %1065
    %v1068 = vmul.f32 %v1058, %v1066
    %1070 = vrot.lane.b32.xlu0 %v1068, 32
    %v1071 = vpop.permute.xlu0 %1070
    %v1073 = vadd.f32 %v1063, %v1071
    %v1074 = vtanh.pop %v1073
    %1076 = vrot.lane.b32.xlu0 %v1074, 64
    %v1077 = vpop.permute.xlu0 %1076
    %v1079 = vmul.f32 %v1058, %v1077
    %1081 = vrot.lane.b32.xlu0 %v976, 32
    %v1082 = vpop.permute.xlu0 %1081
    %vm1084 = vcmask 261126
    %1085 = vst.msk [vmem:[#allocation2] sm:$0xc0] %vm1084, %v1082
    %1087 = vrot.lane.b32.xlu0 %v1079, 64
    %v1088 = vpop.permute.xlu0 %1087
    %vm1090 = vcmask 517376
    %1091 = vst.msk [vmem:[#allocation2 + $0x8] sm:$0x3] %vm1090, %v1088
    %v1092 = vrot.slane %v976, 6
    %1093 = vrot.lane.b32.xlu0 %v1092, 32
    %v1094 = vpop.permute.xlu0 %1093
    %v1095 = vsel %vm217, %v1094, 0
    %1097 = vmatprep.subr.mxu0 0.0
    %1098 = vmatpush1.msra.mxu0 0.0
    %1099 = vmatprep.subr.mxu0 0.0
    %1100 = vmatpush1.msra.mxu0 0.0
    %1101 = vmatprep.subr.mxu0 0.0
    %1102 = vmatpush1.msra.mxu0 0.0
    %1103 = vmatprep.subr.mxu0 0.0
    %1104 = vmatpush1.msra.mxu0 0.0
    %1105 = vmatprep.subr.mxu0 0.0
    %1106 = vmatpush1.msra.mxu0 0.0
    %1107 = vmatprep.subr.mxu0 0.0
    %1108 = vmatpush1.msra.mxu0 0.0
    %1109 = vmatprep.subr.mxu0 0.0
    %1110 = vmatpush1.msra.mxu0 0.0
    %1111 = vmatprep.subr.mxu0 0.0
    %1112 = vmatpush1.msra.mxu0 0.0
    %1113 = vmatprep.subr.mxu0 0.0
    %1114 = vmatpush1.msra.mxu0 0.0
    %1115 = vmatprep.subr.mxu0 0.0
    %1116 = vmatpush1.msra.mxu0 0.0
    %1117 = vmatprep.subr.mxu0 0.0
    %1118 = vmatpush1.msra.mxu0 0.0
    %1119 = vmatprep.subr.mxu0 0.0
    %1120 = vmatpush1.msra.mxu0 0.0
    %1121 = vmatprep.subr.mxu0 0.0
    %1122 = vmatpush1.msra.mxu0 %v212
    %1123 = vmatprep.subr.mxu0 0.0
    %1124 = vmatpush1.msra.mxu0 %v211
    %1125 = vmatprep.subr.mxu0 0.0
    %1126 = vmatpush1.msra.mxu0 %v210
    %1127 = vmatprep.subr.mxu0 0.0
    %1128 = vmatpush1.msra.mxu0 %v209
    %1129 = vmatprep.subr.mxu0 0.0
    %1130 = vmatpush2.msra.mxu0 0.0
    %1131 = vmatprep.subr.mxu0 0.0
    %1132 = vmatpush2.msra.mxu0 0.0
    %1133 = vmatprep.subr.mxu0 0.0
    %1134 = vmatpush2.msra.mxu0 0.0
    %1135 = vmatprep.subr.mxu0 0.0
    %1136 = vmatpush2.msra.mxu0 0.0
    %1137 = vmatprep.subr.mxu0 0.0
    %1138 = vmatpush2.msra.mxu0 0.0
    %1139 = vmatprep.subr.mxu0 0.0
    %1140 = vmatpush2.msra.mxu0 0.0
    %1141 = vmatprep.subr.mxu0 0.0
    %1142 = vmatpush2.msra.mxu0 0.0
    %1143 = vmatprep.subr.mxu0 0.0
    %1144 = vmatpush2.msra.mxu0 0.0
    %1145 = vmatprep.subr.mxu0 0.0
    %1146 = vmatpush2.msra.mxu0 0.0
    %1147 = vmatprep.subr.mxu0 0.0
    %1148 = vmatpush2.msra.mxu0 0.0
    %1149 = vmatprep.subr.mxu0 0.0
    %1150 = vmatpush2.msra.mxu0 0.0
    %1151 = vmatprep.subr.mxu0 0.0
    %1152 = vmatpush2.msra.mxu0 0.0
    %1153 = vmatprep.subr.mxu0 0.0
    %1154 = vmatpush2.msra.mxu0 0.0
    %1155 = vmatprep.subr.mxu0 0.0
    %1156 = vmatpush2.msra.mxu0 0.0
    %1157 = vmatprep.subr.mxu0 0.0
    %1158 = vmatpush2.msra.mxu0 0.0
    %1159 = vmatprep.subr.mxu0 0.0
    %1160 = vmatpush2.msra.mxu0 0.0
    %1161 = vmatprep.mubr.f32.mxu0 0.0
    %1162 = vmatmul.mubr.f32.gmra.mxu0 %v1095
    %v1163 = vpop.f32.mrf.mxu0
    %v1164 = vadd.f32 0.0, %v1163
    %v1165 = vpop.f32.mrf.mxu0
    %1166 = vdwg.mxu0
    %v1167 = vadd.f32 %v205, %v1164
    %v1168 = vxor.u32 %v1167, 2147483648
    %v1169 = vmul.f32 %v1168, 1.442695
    %v1170 = vpow.pop %v1169
    %v1171 = vadd.f32 %v1170, 1.0
    %v1172 = vrcp.pop %v1171
    %v1173 = vmul.f32 1.0, %v1172
    %v1174 = vtanh.pop %v1167
    %v1176 = vrot.slane %v970, 6
    %v1178 = vmul.f32 %v1173, %v1176
    %1180 = vrot.lane.b32.xlu0 %v1174, 64
    %v1181 = vpop.permute.xlu0 %1180
    %v1183 = vmul.f32 %v1173, %v1181
    %1185 = vrot.lane.b32.xlu0 %v1183, 32
    %v1186 = vpop.permute.xlu0 %1185
    %v1188 = vadd.f32 %v1178, %v1186
    %v1189 = vtanh.pop %v1188
    %1191 = vrot.lane.b32.xlu0 %v1189, 64
    %v1192 = vpop.permute.xlu0 %1191
    %v1194 = vmul.f32 %v1173, %v1192
    %1195 = vrot.lane.b32.xlu0 %v1079, 32
    %v1196 = vpop.permute.xlu0 %1195
    %v1197 = vsel %vm217, %v1196, 0
    %1199 = vmatprep.subr.mxu0 0.0
    %1200 = vmatpush1.msra.mxu0 0.0
    %1201 = vmatprep.subr.mxu0 0.0
    %1202 = vmatpush1.msra.mxu0 0.0
    %1203 = vmatprep.subr.mxu0 0.0
    %1204 = vmatpush1.msra.mxu0 0.0
    %1205 = vmatprep.subr.mxu0 0.0
    %1206 = vmatpush1.msra.mxu0 0.0
    %1207 = vmatprep.subr.mxu0 0.0
    %1208 = vmatpush1.msra.mxu0 0.0
    %1209 = vmatprep.subr.mxu0 0.0
    %1210 = vmatpush1.msra.mxu0 0.0
    %1211 = vmatprep.subr.mxu0 0.0
    %1212 = vmatpush1.msra.mxu0 0.0
    %1213 = vmatprep.subr.mxu0 0.0
    %1214 = vmatpush1.msra.mxu0 0.0
    %1215 = vmatprep.subr.mxu0 0.0
    %1216 = vmatpush1.msra.mxu0 0.0
    %1217 = vmatprep.subr.mxu0 0.0
    %1218 = vmatpush1.msra.mxu0 0.0
    %1219 = vmatprep.subr.mxu0 0.0
    %1220 = vmatpush1.msra.mxu0 0.0
    %1221 = vmatprep.subr.mxu0 0.0
    %1222 = vmatpush1.msra.mxu0 0.0
    %1223 = vmatprep.subr.mxu0 0.0
    %1224 = vmatpush1.msra.mxu0 %v216
    %1225 = vmatprep.subr.mxu0 0.0
    %1226 = vmatpush1.msra.mxu0 %v215
    %1227 = vmatprep.subr.mxu0 0.0
    %1228 = vmatpush1.msra.mxu0 %v214
    %1229 = vmatprep.subr.mxu0 0.0
    %1230 = vmatpush1.msra.mxu0 %v213
    %1231 = vmatprep.subr.mxu0 0.0
    %1232 = vmatpush2.msra.mxu0 0.0
    %1233 = vmatprep.subr.mxu0 0.0
    %1234 = vmatpush2.msra.mxu0 0.0
    %1235 = vmatprep.subr.mxu0 0.0
    %1236 = vmatpush2.msra.mxu0 0.0
    %1237 = vmatprep.subr.mxu0 0.0
    %1238 = vmatpush2.msra.mxu0 0.0
    %1239 = vmatprep.subr.mxu0 0.0
    %1240 = vmatpush2.msra.mxu0 0.0
    %1241 = vmatprep.subr.mxu0 0.0
    %1242 = vmatpush2.msra.mxu0 0.0
    %1243 = vmatprep.subr.mxu0 0.0
    %1244 = vmatpush2.msra.mxu0 0.0
    %1245 = vmatprep.subr.mxu0 0.0
    %1246 = vmatpush2.msra.mxu0 0.0
    %1247 = vmatprep.subr.mxu0 0.0
    %1248 = vmatpush2.msra.mxu0 0.0
    %1249 = vmatprep.subr.mxu0 0.0
    %1250 = vmatpush2.msra.mxu0 0.0
    %1251 = vmatprep.subr.mxu0 0.0
    %1252 = vmatpush2.msra.mxu0 0.0
    %1253 = vmatprep.subr.mxu0 0.0
    %1254 = vmatpush2.msra.mxu0 0.0
    %1255 = vmatprep.subr.mxu0 0.0
    %1256 = vmatpush2.msra.mxu0 0.0
    %1257 = vmatprep.subr.mxu0 0.0
    %1258 = vmatpush2.msra.mxu0 0.0
    %1259 = vmatprep.subr.mxu0 0.0
    %1260 = vmatpush2.msra.mxu0 0.0
    %1261 = vmatprep.subr.mxu0 0.0
    %1262 = vmatpush2.msra.mxu0 0.0
    %1263 = vmatprep.mubr.f32.mxu0 0.0
    %1264 = vmatmul.mubr.f32.gmra.mxu0 %v1197
    %v1265 = vpop.f32.mrf.mxu0
    %v1266 = vadd.f32 0.0, %v1265
    %v1267 = vpop.f32.mrf.mxu0
    %1268 = vdwg.mxu0
    %v1270 = vrot.slane %v1266, 2
    %v1272 = vadd.f32 %v201, %v1270
    %v1273 = vxor.u32 %v1272, 2147483648
    %v1274 = vmul.f32 %v1273, 1.442695
    %v1275 = vpow.pop %v1274
    %v1276 = vadd.f32 %v1275, 1.0
    %v1277 = vrcp.pop %v1276
    %v1278 = vmul.f32 1.0, %v1277
    %v1279 = vtanh.pop %v1272
    %v1281 = vrot.slane %v1073, 2
    %v1283 = vmul.f32 %v1278, %v1281
    %1285 = vrot.lane.b32.xlu0 %v1279, 64
    %v1286 = vpop.permute.xlu0 %1285
    %v1288 = vmul.f32 %v1278, %v1286
    %1290 = vrot.lane.b32.xlu0 %v1288, 32
    %v1291 = vpop.permute.xlu0 %1290
    %v1293 = vadd.f32 %v1283, %v1291
    %v1294 = vtanh.pop %v1293
    %1296 = vrot.lane.b32.xlu0 %v1294, 64
    %v1297 = vpop.permute.xlu0 %1296
    %v1299 = vmul.f32 %v1278, %v1297
    %1301 = vrot.lane.b32.xlu0 %v1194, 32
    %v1302 = vpop.permute.xlu0 %1301
    %1304 = vst.msk [vmem:[#allocation2 + $0x8] sm:$0x3] %vm418, %v1302
    %1306 = vrot.lane.b32.xlu0 %v1299, 64
    %v1307 = vpop.permute.xlu0 %1306
    %1309 = vst.msk [vmem:[#allocation2] sm:$0xc0] %vm424, %v1307
    %v1310 = vsel %vm217, %v1302, 0
    %1312 = vmatprep.subr.mxu0 0.0
    %1313 = vmatpush1.msra.mxu0 0.0
    %1314 = vmatprep.subr.mxu0 0.0
    %1315 = vmatpush1.msra.mxu0 0.0
    %1316 = vmatprep.subr.mxu0 0.0
    %1317 = vmatpush1.msra.mxu0 0.0
    %1318 = vmatprep.subr.mxu0 0.0
    %1319 = vmatpush1.msra.mxu0 0.0
    %1320 = vmatprep.subr.mxu0 0.0
    %1321 = vmatpush1.msra.mxu0 0.0
    %1322 = vmatprep.subr.mxu0 0.0
    %1323 = vmatpush1.msra.mxu0 0.0
    %1324 = vmatprep.subr.mxu0 0.0
    %1325 = vmatpush1.msra.mxu0 0.0
    %1326 = vmatprep.subr.mxu0 0.0
    %1327 = vmatpush1.msra.mxu0 0.0
    %1328 = vmatprep.subr.mxu0 0.0
    %1329 = vmatpush1.msra.mxu0 0.0
    %1330 = vmatprep.subr.mxu0 0.0
    %1331 = vmatpush1.msra.mxu0 0.0
    %1332 = vmatprep.subr.mxu0 0.0
    %1333 = vmatpush1.msra.mxu0 0.0
    %1334 = vmatprep.subr.mxu0 0.0
    %1335 = vmatpush1.msra.mxu0 0.0
    %1336 = vmatprep.subr.mxu0 0.0
    %1337 = vmatpush1.msra.mxu0 %v212
    %1338 = vmatprep.subr.mxu0 0.0
    %1339 = vmatpush1.msra.mxu0 %v211
    %1340 = vmatprep.subr.mxu0 0.0
    %1341 = vmatpush1.msra.mxu0 %v210
    %1342 = vmatprep.subr.mxu0 0.0
    %1343 = vmatpush1.msra.mxu0 %v209
    %1344 = vmatprep.subr.mxu0 0.0
    %1345 = vmatpush2.msra.mxu0 0.0
    %1346 = vmatprep.subr.mxu0 0.0
    %1347 = vmatpush2.msra.mxu0 0.0
    %1348 = vmatprep.subr.mxu0 0.0
    %1349 = vmatpush2.msra.mxu0 0.0
    %1350 = vmatprep.subr.mxu0 0.0
    %1351 = vmatpush2.msra.mxu0 0.0
    %1352 = vmatprep.subr.mxu0 0.0
    %1353 = vmatpush2.msra.mxu0 0.0
    %1354 = vmatprep.subr.mxu0 0.0
    %1355 = vmatpush2.msra.mxu0 0.0
    %1356 = vmatprep.subr.mxu0 0.0
    %1357 = vmatpush2.msra.mxu0 0.0
    %1358 = vmatprep.subr.mxu0 0.0
    %1359 = vmatpush2.msra.mxu0 0.0
    %1360 = vmatprep.subr.mxu0 0.0
    %1361 = vmatpush2.msra.mxu0 0.0
    %1362 = vmatprep.subr.mxu0 0.0
    %1363 = vmatpush2.msra.mxu0 0.0
    %1364 = vmatprep.subr.mxu0 0.0
    %1365 = vmatpush2.msra.mxu0 0.0
    %1366 = vmatprep.subr.mxu0 0.0
    %1367 = vmatpush2.msra.mxu0 0.0
    %1368 = vmatprep.subr.mxu0 0.0
    %1369 = vmatpush2.msra.mxu0 0.0
    %1370 = vmatprep.subr.mxu0 0.0
    %1371 = vmatpush2.msra.mxu0 0.0
    %1372 = vmatprep.subr.mxu0 0.0
    %1373 = vmatpush2.msra.mxu0 0.0
    %1374 = vmatprep.subr.mxu0 0.0
    %1375 = vmatpush2.msra.mxu0 0.0
    %1376 = vmatprep.mubr.f32.mxu0 0.0
    %1377 = vmatmul.mubr.f32.gmra.mxu0 %v1310
    %v1378 = vpop.f32.mrf.mxu0
    %v1379 = vadd.f32 0.0, %v1378
    %v1380 = vpop.f32.mrf.mxu0
    %1381 = vdwg.mxu0
    %v1383 = vrot.slane %v1379, 6
    %v1385 = vadd.f32 %v205, %v1383
    %v1386 = vxor.u32 %v1385, 2147483648
    %v1387 = vmul.f32 %v1386, 1.442695
    %v1388 = vpow.pop %v1387
    %v1389 = vadd.f32 %v1388, 1.0
    %v1390 = vrcp.pop %v1389
    %v1391 = vmul.f32 1.0, %v1390
    %v1392 = vtanh.pop %v1385
    %v1394 = vrot.slane %v1188, 6
    %v1396 = vmul.f32 %v1391, %v1394
    %1398 = vrot.lane.b32.xlu0 %v1392, 64
    %v1399 = vpop.permute.xlu0 %1398
    %v1401 = vmul.f32 %v1391, %v1399
    %1403 = vrot.lane.b32.xlu0 %v1401, 32
    %v1404 = vpop.permute.xlu0 %1403
    %v1406 = vadd.f32 %v1396, %v1404
    %v1407 = vtanh.pop %v1406
    %1409 = vrot.lane.b32.xlu0 %v1407, 64
    %v1410 = vpop.permute.xlu0 %1409
    %v1412 = vmul.f32 %v1391, %v1410
    %v1413 = vrot.slane %v1299, 6
    %1414 = vrot.lane.b32.xlu0 %v1413, 32
    %v1415 = vpop.permute.xlu0 %1414
    %v1416 = vsel %vm217, %v1415, 0
    %1418 = vmatprep.subr.mxu0 0.0
    %1419 = vmatpush1.msra.mxu0 0.0
    %1420 = vmatprep.subr.mxu0 0.0
    %1421 = vmatpush1.msra.mxu0 0.0
    %1422 = vmatprep.subr.mxu0 0.0
    %1423 = vmatpush1.msra.mxu0 0.0
    %1424 = vmatprep.subr.mxu0 0.0
    %1425 = vmatpush1.msra.mxu0 0.0
    %1426 = vmatprep.subr.mxu0 0.0
    %1427 = vmatpush1.msra.mxu0 0.0
    %1428 = vmatprep.subr.mxu0 0.0
    %1429 = vmatpush1.msra.mxu0 0.0
    %1430 = vmatprep.subr.mxu0 0.0
    %1431 = vmatpush1.msra.mxu0 0.0
    %1432 = vmatprep.subr.mxu0 0.0
    %1433 = vmatpush1.msra.mxu0 0.0
    %1434 = vmatprep.subr.mxu0 0.0
    %1435 = vmatpush1.msra.mxu0 0.0
    %1436 = vmatprep.subr.mxu0 0.0
    %1437 = vmatpush1.msra.mxu0 0.0
    %1438 = vmatprep.subr.mxu0 0.0
    %1439 = vmatpush1.msra.mxu0 0.0
    %1440 = vmatprep.subr.mxu0 0.0
    %1441 = vmatpush1.msra.mxu0 0.0
    %1442 = vmatprep.subr.mxu0 0.0
    %1443 = vmatpush1.msra.mxu0 %v216
    %1444 = vmatprep.subr.mxu0 0.0
    %1445 = vmatpush1.msra.mxu0 %v215
    %1446 = vmatprep.subr.mxu0 0.0
    %1447 = vmatpush1.msra.mxu0 %v214
    %1448 = vmatprep.subr.mxu0 0.0
    %1449 = vmatpush1.msra.mxu0 %v213
    %1450 = vmatprep.subr.mxu0 0.0
    %1451 = vmatpush2.msra.mxu0 0.0
    %1452 = vmatprep.subr.mxu0 0.0
    %1453 = vmatpush2.msra.mxu0 0.0
    %1454 = vmatprep.subr.mxu0 0.0
    %1455 = vmatpush2.msra.mxu0 0.0
    %1456 = vmatprep.subr.mxu0 0.0
    %1457 = vmatpush2.msra.mxu0 0.0
    %1458 = vmatprep.subr.mxu0 0.0
    %1459 = vmatpush2.msra.mxu0 0.0
    %1460 = vmatprep.subr.mxu0 0.0
    %1461 = vmatpush2.msra.mxu0 0.0
    %1462 = vmatprep.subr.mxu0 0.0
    %1463 = vmatpush2.msra.mxu0 0.0
    %1464 = vmatprep.subr.mxu0 0.0
    %1465 = vmatpush2.msra.mxu0 0.0
    %1466 = vmatprep.subr.mxu0 0.0
    %1467 = vmatpush2.msra.mxu0 0.0
    %1468 = vmatprep.subr.mxu0 0.0
    %1469 = vmatpush2.msra.mxu0 0.0
    %1470 = vmatprep.subr.mxu0 0.0
    %1471 = vmatpush2.msra.mxu0 0.0
    %1472 = vmatprep.subr.mxu0 0.0
    %1473 = vmatpush2.msra.mxu0 0.0
    %1474 = vmatprep.subr.mxu0 0.0
    %1475 = vmatpush2.msra.mxu0 0.0
    %1476 = vmatprep.subr.mxu0 0.0
    %1477 = vmatpush2.msra.mxu0 0.0
    %1478 = vmatprep.subr.mxu0 0.0
    %1479 = vmatpush2.msra.mxu0 0.0
    %1480 = vmatprep.subr.mxu0 0.0
    %1481 = vmatpush2.msra.mxu0 0.0
    %1482 = vmatprep.mubr.f32.mxu0 0.0
    %1483 = vmatmul.mubr.f32.gmra.mxu0 %v1416
    %v1484 = vpop.f32.mrf.mxu0
    %v1485 = vadd.f32 0.0, %v1484
    %v1486 = vpop.f32.mrf.mxu0
    %1487 = vdwg.mxu0
    %v1489 = vrot.slane %v1485, 4
    %v1491 = vadd.f32 %v201, %v1489
    %v1492 = vxor.u32 %v1491, 2147483648
    %v1493 = vmul.f32 %v1492, 1.442695
    %v1494 = vpow.pop %v1493
    %v1495 = vadd.f32 %v1494, 1.0
    %v1496 = vrcp.pop %v1495
    %v1497 = vmul.f32 1.0, %v1496
    %v1498 = vtanh.pop %v1491
    %v1500 = vrot.slane %v1293, 2
    %v1502 = vmul.f32 %v1497, %v1500
    %1504 = vrot.lane.b32.xlu0 %v1498, 64
    %v1505 = vpop.permute.xlu0 %1504
    %v1507 = vmul.f32 %v1497, %v1505
    %1509 = vrot.lane.b32.xlu0 %v1507, 32
    %v1510 = vpop.permute.xlu0 %1509
    %v1512 = vadd.f32 %v1502, %v1510
    %v1513 = vtanh.pop %v1512
    %1515 = vrot.lane.b32.xlu0 %v1513, 64
    %v1516 = vpop.permute.xlu0 %1515
    %v1518 = vmul.f32 %v1497, %v1516
    %1520 = vrot.lane.b32.xlu0 %v1412, 32
    %v1521 = vpop.permute.xlu0 %1520
    %1523 = vst.msk [vmem:[#allocation2 + $0x8] sm:$0xc] %vm639, %v1521
    %1525 = vrot.lane.b32.xlu0 %v1518, 64
    %v1526 = vpop.permute.xlu0 %1525
    %1528 = vst.msk [vmem:[#allocation2] sm:$0x30] %vm645, %v1526
    %v1529 = vrot.slane %v1412, 2
    %1530 = vrot.lane.b32.xlu0 %v1529, 32
    %v1531 = vpop.permute.xlu0 %1530
    %v1532 = vsel %vm217, %v1531, 0
    %1534 = vmatprep.subr.mxu0 0.0
    %1535 = vmatpush1.msra.mxu0 0.0
    %1536 = vmatprep.subr.mxu0 0.0
    %1537 = vmatpush1.msra.mxu0 0.0
    %1538 = vmatprep.subr.mxu0 0.0
    %1539 = vmatpush1.msra.mxu0 0.0
    %1540 = vmatprep.subr.mxu0 0.0
    %1541 = vmatpush1.msra.mxu0 0.0
    %1542 = vmatprep.subr.mxu0 0.0
    %1543 = vmatpush1.msra.mxu0 0.0
    %1544 = vmatprep.subr.mxu0 0.0
    %1545 = vmatpush1.msra.mxu0 0.0
    %1546 = vmatprep.subr.mxu0 0.0
    %1547 = vmatpush1.msra.mxu0 0.0
    %1548 = vmatprep.subr.mxu0 0.0
    %1549 = vmatpush1.msra.mxu0 0.0
    %1550 = vmatprep.subr.mxu0 0.0
    %1551 = vmatpush1.msra.mxu0 0.0
    %1552 = vmatprep.subr.mxu0 0.0
    %1553 = vmatpush1.msra.mxu0 0.0
    %1554 = vmatprep.subr.mxu0 0.0
    %1555 = vmatpush1.msra.mxu0 0.0
    %1556 = vmatprep.subr.mxu0 0.0
    %1557 = vmatpush1.msra.mxu0 0.0
    %1558 = vmatprep.subr.mxu0 0.0
    %1559 = vmatpush1.msra.mxu0 %v212
    %1560 = vmatprep.subr.mxu0 0.0
    %1561 = vmatpush1.msra.mxu0 %v211
    %1562 = vmatprep.subr.mxu0 0.0
    %1563 = vmatpush1.msra.mxu0 %v210
    %1564 = vmatprep.subr.mxu0 0.0
    %1565 = vmatpush1.msra.mxu0 %v209
    %1566 = vmatprep.subr.mxu0 0.0
    %1567 = vmatpush2.msra.mxu0 0.0
    %1568 = vmatprep.subr.mxu0 0.0
    %1569 = vmatpush2.msra.mxu0 0.0
    %1570 = vmatprep.subr.mxu0 0.0
    %1571 = vmatpush2.msra.mxu0 0.0
    %1572 = vmatprep.subr.mxu0 0.0
    %1573 = vmatpush2.msra.mxu0 0.0
    %1574 = vmatprep.subr.mxu0 0.0
    %1575 = vmatpush2.msra.mxu0 0.0
    %1576 = vmatprep.subr.mxu0 0.0
    %1577 = vmatpush2.msra.mxu0 0.0
    %1578 = vmatprep.subr.mxu0 0.0
    %1579 = vmatpush2.msra.mxu0 0.0
    %1580 = vmatprep.subr.mxu0 0.0
    %1581 = vmatpush2.msra.mxu0 0.0
    %1582 = vmatprep.subr.mxu0 0.0
    %1583 = vmatpush2.msra.mxu0 0.0
    %1584 = vmatprep.subr.mxu0 0.0
    %1585 = vmatpush2.msra.mxu0 0.0
    %1586 = vmatprep.subr.mxu0 0.0
    %1587 = vmatpush2.msra.mxu0 0.0
    %1588 = vmatprep.subr.mxu0 0.0
    %1589 = vmatpush2.msra.mxu0 0.0
    %1590 = vmatprep.subr.mxu0 0.0
    %1591 = vmatpush2.msra.mxu0 0.0
    %1592 = vmatprep.subr.mxu0 0.0
    %1593 = vmatpush2.msra.mxu0 0.0
    %1594 = vmatprep.subr.mxu0 0.0
    %1595 = vmatpush2.msra.mxu0 0.0
    %1596 = vmatprep.subr.mxu0 0.0
    %1597 = vmatpush2.msra.mxu0 0.0
    %1598 = vmatprep.mubr.f32.mxu0 0.0
    %1599 = vmatmul.mubr.f32.gmra.mxu0 %v1532
    %v1600 = vpop.f32.mrf.mxu0
    %v1601 = vadd.f32 0.0, %v1600
    %v1602 = vpop.f32.mrf.mxu0
    %1603 = vdwg.mxu0
    %v1605 = vrot.slane %v1601, 4
    %v1607 = vadd.f32 %v205, %v1605
    %v1608 = vxor.u32 %v1607, 2147483648
    %v1609 = vmul.f32 %v1608, 1.442695
    %v1610 = vpow.pop %v1609
    %v1611 = vadd.f32 %v1610, 1.0
    %v1612 = vrcp.pop %v1611
    %v1613 = vmul.f32 1.0, %v1612
    %v1614 = vtanh.pop %v1607
    %v1616 = vrot.slane %v1406, 6
    %v1618 = vmul.f32 %v1613, %v1616
    %1620 = vrot.lane.b32.xlu0 %v1614, 64
    %v1621 = vpop.permute.xlu0 %1620
    %v1623 = vmul.f32 %v1613, %v1621
    %1625 = vrot.lane.b32.xlu0 %v1623, 32
    %v1626 = vpop.permute.xlu0 %1625
    %v1628 = vadd.f32 %v1618, %v1626
    %v1629 = vtanh.pop %v1628
    %1631 = vrot.lane.b32.xlu0 %v1629, 64
    %v1632 = vpop.permute.xlu0 %1631
    %v1634 = vmul.f32 %v1613, %v1632
    %v1635 = vrot.slane %v1518, 4
    %1636 = vrot.lane.b32.xlu0 %v1635, 32
    %v1637 = vpop.permute.xlu0 %1636
    %v1638 = vsel %vm217, %v1637, 0
    %1640 = vmatprep.subr.mxu0 0.0
    %1641 = vmatpush1.msra.mxu0 0.0
    %1642 = vmatprep.subr.mxu0 0.0
    %1643 = vmatpush1.msra.mxu0 0.0
    %1644 = vmatprep.subr.mxu0 0.0
    %1645 = vmatpush1.msra.mxu0 0.0
    %1646 = vmatprep.subr.mxu0 0.0
    %1647 = vmatpush1.msra.mxu0 0.0
    %1648 = vmatprep.subr.mxu0 0.0
    %1649 = vmatpush1.msra.mxu0 0.0
    %1650 = vmatprep.subr.mxu0 0.0
    %1651 = vmatpush1.msra.mxu0 0.0
    %1652 = vmatprep.subr.mxu0 0.0
    %1653 = vmatpush1.msra.mxu0 0.0
    %1654 = vmatprep.subr.mxu0 0.0
    %1655 = vmatpush1.msra.mxu0 0.0
    %1656 = vmatprep.subr.mxu0 0.0
    %1657 = vmatpush1.msra.mxu0 0.0
    %1658 = vmatprep.subr.mxu0 0.0
    %1659 = vmatpush1.msra.mxu0 0.0
    %1660 = vmatprep.subr.mxu0 0.0
    %1661 = vmatpush1.msra.mxu0 0.0
    %1662 = vmatprep.subr.mxu0 0.0
    %1663 = vmatpush1.msra.mxu0 0.0
    %1664 = vmatprep.subr.mxu0 0.0
    %1665 = vmatpush1.msra.mxu0 %v216
    %1666 = vmatprep.subr.mxu0 0.0
    %1667 = vmatpush1.msra.mxu0 %v215
    %1668 = vmatprep.subr.mxu0 0.0
    %1669 = vmatpush1.msra.mxu0 %v214
    %1670 = vmatprep.subr.mxu0 0.0
    %1671 = vmatpush1.msra.mxu0 %v213
    %1672 = vmatprep.subr.mxu0 0.0
    %1673 = vmatpush2.msra.mxu0 0.0
    %1674 = vmatprep.subr.mxu0 0.0
    %1675 = vmatpush2.msra.mxu0 0.0
    %1676 = vmatprep.subr.mxu0 0.0
    %1677 = vmatpush2.msra.mxu0 0.0
    %1678 = vmatprep.subr.mxu0 0.0
    %1679 = vmatpush2.msra.mxu0 0.0
    %1680 = vmatprep.subr.mxu0 0.0
    %1681 = vmatpush2.msra.mxu0 0.0
    %1682 = vmatprep.subr.mxu0 0.0
    %1683 = vmatpush2.msra.mxu0 0.0
    %1684 = vmatprep.subr.mxu0 0.0
    %1685 = vmatpush2.msra.mxu0 0.0
    %1686 = vmatprep.subr.mxu0 0.0
    %1687 = vmatpush2.msra.mxu0 0.0
    %1688 = vmatprep.subr.mxu0 0.0
    %1689 = vmatpush2.msra.mxu0 0.0
    %1690 = vmatprep.subr.mxu0 0.0
    %1691 = vmatpush2.msra.mxu0 0.0
    %1692 = vmatprep.subr.mxu0 0.0
    %1693 = vmatpush2.msra.mxu0 0.0
    %1694 = vmatprep.subr.mxu0 0.0
    %1695 = vmatpush2.msra.mxu0 0.0
    %1696 = vmatprep.subr.mxu0 0.0
    %1697 = vmatpush2.msra.mxu0 0.0
    %1698 = vmatprep.subr.mxu0 0.0
    %1699 = vmatpush2.msra.mxu0 0.0
    %1700 = vmatprep.subr.mxu0 0.0
    %1701 = vmatpush2.msra.mxu0 0.0
    %1702 = vmatprep.subr.mxu0 0.0
    %1703 = vmatpush2.msra.mxu0 0.0
    %1704 = vmatprep.mubr.f32.mxu0 0.0
    %1705 = vmatmul.mubr.f32.gmra.mxu0 %v1638
    %v1706 = vpop.f32.mrf.mxu0
    %v1707 = vadd.f32 0.0, %v1706
    %v1708 = vpop.f32.mrf.mxu0
    %1709 = vdwg.mxu0
    %v1711 = vrot.slane %v1707, 6
    %v1713 = vadd.f32 %v201, %v1711
    %v1714 = vxor.u32 %v1713, 2147483648
    %v1715 = vmul.f32 %v1714, 1.442695
    %v1716 = vpow.pop %v1715
    %v1717 = vadd.f32 %v1716, 1.0
    %v1718 = vrcp.pop %v1717
    %v1719 = vmul.f32 1.0, %v1718
    %v1720 = vtanh.pop %v1713
    %v1722 = vrot.slane %v1512, 2
    %v1724 = vmul.f32 %v1719, %v1722
    %1726 = vrot.lane.b32.xlu0 %v1720, 64
    %v1727 = vpop.permute.xlu0 %1726
    %v1729 = vmul.f32 %v1719, %v1727
    %1731 = vrot.lane.b32.xlu0 %v1729, 32
    %v1732 = vpop.permute.xlu0 %1731
    %v1734 = vadd.f32 %v1724, %v1732
    %v1735 = vtanh.pop %v1734
    %1737 = vrot.lane.b32.xlu0 %v1735, 64
    %v1738 = vpop.permute.xlu0 %1737
    %v1740 = vmul.f32 %v1719, %v1738
    %1742 = vrot.lane.b32.xlu0 %v1634, 32
    %v1743 = vpop.permute.xlu0 %1742
    %1745 = vst.msk [vmem:[#allocation2 + $0x8] sm:$0x30] %vm863, %v1743
    %1747 = vrot.lane.b32.xlu0 %v1740, 64
    %v1748 = vpop.permute.xlu0 %1747
    %1750 = vst.msk [vmem:[#allocation2] sm:$0xc] %vm869, %v1748
    %v1751 = vrot.slane %v1634, 4
    %1752 = vrot.lane.b32.xlu0 %v1751, 32
    %v1753 = vpop.permute.xlu0 %1752
    %v1754 = vsel %vm217, %v1753, 0
    %1756 = vmatprep.subr.mxu0 0.0
    %1757 = vmatpush1.msra.mxu0 0.0
    %1758 = vmatprep.subr.mxu0 0.0
    %1759 = vmatpush1.msra.mxu0 0.0
    %1760 = vmatprep.subr.mxu0 0.0
    %1761 = vmatpush1.msra.mxu0 0.0
    %1762 = vmatprep.subr.mxu0 0.0
    %1763 = vmatpush1.msra.mxu0 0.0
    %1764 = vmatprep.subr.mxu0 0.0
    %1765 = vmatpush1.msra.mxu0 0.0
    %1766 = vmatprep.subr.mxu0 0.0
    %1767 = vmatpush1.msra.mxu0 0.0
    %1768 = vmatprep.subr.mxu0 0.0
    %1769 = vmatpush1.msra.mxu0 0.0
    %1770 = vmatprep.subr.mxu0 0.0
    %1771 = vmatpush1.msra.mxu0 0.0
    %1772 = vmatprep.subr.mxu0 0.0
    %1773 = vmatpush1.msra.mxu0 0.0
    %1774 = vmatprep.subr.mxu0 0.0
    %1775 = vmatpush1.msra.mxu0 0.0
    %1776 = vmatprep.subr.mxu0 0.0
    %1777 = vmatpush1.msra.mxu0 0.0
    %1778 = vmatprep.subr.mxu0 0.0
    %1779 = vmatpush1.msra.mxu0 0.0
    %1780 = vmatprep.subr.mxu0 0.0
    %1781 = vmatpush1.msra.mxu0 %v212
    %1782 = vmatprep.subr.mxu0 0.0
    %1783 = vmatpush1.msra.mxu0 %v211
    %1784 = vmatprep.subr.mxu0 0.0
    %1785 = vmatpush1.msra.mxu0 %v210
    %1786 = vmatprep.subr.mxu0 0.0
    %1787 = vmatpush1.msra.mxu0 %v209
    %1788 = vmatprep.subr.mxu0 0.0
    %1789 = vmatpush2.msra.mxu0 0.0
    %1790 = vmatprep.subr.mxu0 0.0
    %1791 = vmatpush2.msra.mxu0 0.0
    %1792 = vmatprep.subr.mxu0 0.0
    %1793 = vmatpush2.msra.mxu0 0.0
    %1794 = vmatprep.subr.mxu0 0.0
    %1795 = vmatpush2.msra.mxu0 0.0
    %1796 = vmatprep.subr.mxu0 0.0
    %1797 = vmatpush2.msra.mxu0 0.0
    %1798 = vmatprep.subr.mxu0 0.0
    %1799 = vmatpush2.msra.mxu0 0.0
    %1800 = vmatprep.subr.mxu0 0.0
    %1801 = vmatpush2.msra.mxu0 0.0
    %1802 = vmatprep.subr.mxu0 0.0
    %1803 = vmatpush2.msra.mxu0 0.0
    %1804 = vmatprep.subr.mxu0 0.0
    %1805 = vmatpush2.msra.mxu0 0.0
    %1806 = vmatprep.subr.mxu0 0.0
    %1807 = vmatpush2.msra.mxu0 0.0
    %1808 = vmatprep.subr.mxu0 0.0
    %1809 = vmatpush2.msra.mxu0 0.0
    %1810 = vmatprep.subr.mxu0 0.0
    %1811 = vmatpush2.msra.mxu0 0.0
    %1812 = vmatprep.subr.mxu0 0.0
    %1813 = vmatpush2.msra.mxu0 0.0
    %1814 = vmatprep.subr.mxu0 0.0
    %1815 = vmatpush2.msra.mxu0 0.0
    %1816 = vmatprep.subr.mxu0 0.0
    %1817 = vmatpush2.msra.mxu0 0.0
    %1818 = vmatprep.subr.mxu0 0.0
    %1819 = vmatpush2.msra.mxu0 0.0
    %1820 = vmatprep.mubr.f32.mxu0 0.0
    %1821 = vmatmul.mubr.f32.gmra.mxu0 %v1754
    %v1822 = vpop.f32.mrf.mxu0
    %v1823 = vadd.f32 0.0, %v1822
    %v1824 = vpop.f32.mrf.mxu0
    %1825 = vdwg.mxu0
    %v1827 = vrot.slane %v1823, 2
    %v1829 = vadd.f32 %v205, %v1827
    %v1830 = vxor.u32 %v1829, 2147483648
    %v1831 = vmul.f32 %v1830, 1.442695
    %v1832 = vpow.pop %v1831
    %v1833 = vadd.f32 %v1832, 1.0
    %v1834 = vrcp.pop %v1833
    %v1835 = vmul.f32 1.0, %v1834
    %v1836 = vtanh.pop %v1829
    %v1838 = vrot.slane %v1628, 6
    %v1840 = vmul.f32 %v1835, %v1838
    %1842 = vrot.lane.b32.xlu0 %v1836, 64
    %v1843 = vpop.permute.xlu0 %1842
    %v1845 = vmul.f32 %v1835, %v1843
    %1847 = vrot.lane.b32.xlu0 %v1845, 32
    %v1848 = vpop.permute.xlu0 %1847
    %v1850 = vadd.f32 %v1840, %v1848
    %v1851 = vtanh.pop %v1850
    %1853 = vrot.lane.b32.xlu0 %v1851, 64
    %v1854 = vpop.permute.xlu0 %1853
    %v1856 = vmul.f32 %v1835, %v1854
    %v1857 = vrot.slane %v1740, 2
    %1858 = vrot.lane.b32.xlu0 %v1857, 32
    %v1859 = vpop.permute.xlu0 %1858
    %v1860 = vsel %vm217, %v1859, 0
    %1862 = vmatprep.subr.mxu0 0.0
    %1863 = vmatpush1.msra.mxu0 0.0
    %1864 = vmatprep.subr.mxu0 0.0
    %1865 = vmatpush1.msra.mxu0 0.0
    %1866 = vmatprep.subr.mxu0 0.0
    %1867 = vmatpush1.msra.mxu0 0.0
    %1868 = vmatprep.subr.mxu0 0.0
    %1869 = vmatpush1.msra.mxu0 0.0
    %1870 = vmatprep.subr.mxu0 0.0
    %1871 = vmatpush1.msra.mxu0 0.0
    %1872 = vmatprep.subr.mxu0 0.0
    %1873 = vmatpush1.msra.mxu0 0.0
    %1874 = vmatprep.subr.mxu0 0.0
    %1875 = vmatpush1.msra.mxu0 0.0
    %1876 = vmatprep.subr.mxu0 0.0
    %1877 = vmatpush1.msra.mxu0 0.0
    %1878 = vmatprep.subr.mxu0 0.0
    %1879 = vmatpush1.msra.mxu0 0.0
    %1880 = vmatprep.subr.mxu0 0.0
    %1881 = vmatpush1.msra.mxu0 0.0
    %1882 = vmatprep.subr.mxu0 0.0
    %1883 = vmatpush1.msra.mxu0 0.0
    %1884 = vmatprep.subr.mxu0 0.0
    %1885 = vmatpush1.msra.mxu0 0.0
    %1886 = vmatprep.subr.mxu0 0.0
    %1887 = vmatpush1.msra.mxu0 %v216
    %1888 = vmatprep.subr.mxu0 0.0
    %1889 = vmatpush1.msra.mxu0 %v215
    %1890 = vmatprep.subr.mxu0 0.0
    %1891 = vmatpush1.msra.mxu0 %v214
    %1892 = vmatprep.subr.mxu0 0.0
    %1893 = vmatpush1.msra.mxu0 %v213
    %1894 = vmatprep.subr.mxu0 0.0
    %1895 = vmatpush2.msra.mxu0 0.0
    %1896 = vmatprep.subr.mxu0 0.0
    %1897 = vmatpush2.msra.mxu0 0.0
    %1898 = vmatprep.subr.mxu0 0.0
    %1899 = vmatpush2.msra.mxu0 0.0
    %1900 = vmatprep.subr.mxu0 0.0
    %1901 = vmatpush2.msra.mxu0 0.0
    %1902 = vmatprep.subr.mxu0 0.0
    %1903 = vmatpush2.msra.mxu0 0.0
    %1904 = vmatprep.subr.mxu0 0.0
    %1905 = vmatpush2.msra.mxu0 0.0
    %1906 = vmatprep.subr.mxu0 0.0
    %1907 = vmatpush2.msra.mxu0 0.0
    %1908 = vmatprep.subr.mxu0 0.0
    %1909 = vmatpush2.msra.mxu0 0.0
    %1910 = vmatprep.subr.mxu0 0.0
    %1911 = vmatpush2.msra.mxu0 0.0
    %1912 = vmatprep.subr.mxu0 0.0
    %1913 = vmatpush2.msra.mxu0 0.0
    %1914 = vmatprep.subr.mxu0 0.0
    %1915 = vmatpush2.msra.mxu0 0.0
    %1916 = vmatprep.subr.mxu0 0.0
    %1917 = vmatpush2.msra.mxu0 0.0
    %1918 = vmatprep.subr.mxu0 0.0
    %1919 = vmatpush2.msra.mxu0 0.0
    %1920 = vmatprep.subr.mxu0 0.0
    %1921 = vmatpush2.msra.mxu0 0.0
    %1922 = vmatprep.subr.mxu0 0.0
    %1923 = vmatpush2.msra.mxu0 0.0
    %1924 = vmatprep.subr.mxu0 0.0
    %1925 = vmatpush2.msra.mxu0 0.0
    %1926 = vmatprep.mubr.f32.mxu0 0.0
    %1927 = vmatmul.mubr.f32.gmra.mxu0 %v1860
    %v1928 = vpop.f32.mrf.mxu0
    %v1929 = vadd.f32 0.0, %v1928
    %v1930 = vpop.f32.mrf.mxu0
    %1931 = vdwg.mxu0
    %v1932 = vadd.f32 %v201, %v1929
    %v1933 = vxor.u32 %v1932, 2147483648
    %v1934 = vmul.f32 %v1933, 1.442695
    %v1935 = vpow.pop %v1934
    %v1936 = vadd.f32 %v1935, 1.0
    %v1937 = vrcp.pop %v1936
    %v1938 = vmul.f32 1.0, %v1937
    %v1939 = vtanh.pop %v1932
    %v1941 = vrot.slane %v1734, 2
    %v1943 = vmul.f32 %v1938, %v1941
    %1945 = vrot.lane.b32.xlu0 %v1939, 64
    %v1946 = vpop.permute.xlu0 %1945
    %v1948 = vmul.f32 %v1938, %v1946
    %1950 = vrot.lane.b32.xlu0 %v1948, 32
    %v1951 = vpop.permute.xlu0 %1950
    %v1953 = vadd.f32 %v1943, %v1951
    %v1954 = vtanh.pop %v1953
    %1956 = vrot.lane.b32.xlu0 %v1954, 64
    %v1957 = vpop.permute.xlu0 %1956
    %v1959 = vmul.f32 %v1938, %v1957
    %1961 = vrot.lane.b32.xlu0 %v1856, 32
    %v1962 = vpop.permute.xlu0 %1961
    %1964 = vst.msk [vmem:[#allocation2 + $0x8] sm:$0xc0] %vm1084, %v1962
    %1966 = vrot.lane.b32.xlu0 %v1959, 64
    %v1967 = vpop.permute.xlu0 %1966
    %1969 = vst.msk [vmem:[#allocation2] sm:$0x3] %vm1090, %v1967
    %v1970 = vld [vmem:[#allocation2] sm:$0xff]
    %v1971 = vld [vmem:[#allocation2 + $0x8] sm:$0xff]
    %v1972 = vld [vmem:[#allocation8] sm:$0xff]
    %v1973 = vld [vmem:[#allocation8 + $0x8] sm:$0xff]
    %v1974 = vld [vmem:[#allocation8 + $0x10] sm:$0xff]
    %v1975 = vld [vmem:[#allocation8 + $0x18] sm:$0xff]
    %v1976 = vld [vmem:[#allocation8 + $0x20] sm:$0xff]
    %v1977 = vld [vmem:[#allocation8 + $0x28] sm:$0xff]
    %v1978 = vld [vmem:[#allocation8 + $0x30] sm:$0xff]
    %v1979 = vld [vmem:[#allocation8 + $0x38] sm:$0xff]
    %v1980 = vld [vmem:[#allocation8 + $0x40] sm:$0xff]
    %v1981 = vld [vmem:[#allocation8 + $0x48] sm:$0xff]
    %v1982 = vld [vmem:[#allocation8 + $0x50] sm:$0xff]
    %v1983 = vld [vmem:[#allocation8 + $0x58] sm:$0xff]
    %v1984 = vld [vmem:[#allocation8 + $0x60] sm:$0xff]
    %v1985 = vld [vmem:[#allocation8 + $0x68] sm:$0xff]
    %v1986 = vld [vmem:[#allocation8 + $0x70] sm:$0xff]
    %v1987 = vld [vmem:[#allocation8 + $0x78] sm:$0xff]
    %v1988 = vld [vmem:[%s8] sm:$0x3]
    %v1990 = vlaneseq
    %v1991 = vshrl.u32 %v1990, 7
    %v1992 = vsub.s32 0, %v1991
    %v1993 = vrot.slane %v1988, %v1992
    %v1994 = vlaneseq
    %v1995 = vshrl.u32 %v1994, 7
    %v1996 = vsub.s32 1, %v1995
    %v1997 = vrot.slane %v1988, %v1996
    %vm2000 = vcmask 523264
    %v2002 = vsel %vm2000, %v1970, 0
    %v2005 = vsel %vm2000, %v1971, 0
    %2007 = vmatprep.subr.mxu0 0.0
    %2008 = vmatpush1.msra.mxu0 0.0
    %2009 = vmatprep.subr.mxu0 0.0
    %2010 = vmatpush1.msra.mxu0 0.0
    %2011 = vmatprep.subr.mxu0 0.0
    %2012 = vmatpush1.msra.mxu0 0.0
    %2013 = vmatprep.subr.mxu0 0.0
    %2014 = vmatpush1.msra.mxu0 0.0
    %2015 = vmatprep.subr.mxu0 0.0
    %2016 = vmatpush1.msra.mxu0 0.0
    %2017 = vmatprep.subr.mxu0 0.0
    %2018 = vmatpush1.msra.mxu0 0.0
    %2019 = vmatprep.subr.mxu0 0.0
    %2020 = vmatpush1.msra.mxu0 0.0
    %2021 = vmatprep.subr.mxu0 0.0
    %2022 = vmatpush1.msra.mxu0 0.0
    %2023 = vmatprep.subr.mxu0 %v1987
    %2024 = vmatpush1.msra.mxu0 %v1986
    %2025 = vmatprep.subr.mxu0 %v1985
    %2026 = vmatpush1.msra.mxu0 %v1984
    %2027 = vmatprep.subr.mxu0 %v1983
    %2028 = vmatpush1.msra.mxu0 %v1982
    %2029 = vmatprep.subr.mxu0 %v1981
    %2030 = vmatpush1.msra.mxu0 %v1980
    %2031 = vmatprep.subr.mxu0 %v1979
    %2032 = vmatpush1.msra.mxu0 %v1978
    %2033 = vmatprep.subr.mxu0 %v1977
    %2034 = vmatpush1.msra.mxu0 %v1976
    %2035 = vmatprep.subr.mxu0 %v1975
    %2036 = vmatpush1.msra.mxu0 %v1974
    %2037 = vmatprep.subr.mxu0 %v1973
    %2038 = vmatpush1.msra.mxu0 %v1972
    %2039 = vmatprep.subr.mxu0 0.0
    %2040 = vmatpush2.msra.mxu0 0.0
    %2041 = vmatprep.subr.mxu0 0.0
    %2042 = vmatpush2.msra.mxu0 0.0
    %2043 = vmatprep.subr.mxu0 0.0
    %2044 = vmatpush2.msra.mxu0 0.0
    %2045 = vmatprep.subr.mxu0 0.0
    %2046 = vmatpush2.msra.mxu0 0.0
    %2047 = vmatprep.subr.mxu0 0.0
    %2048 = vmatpush2.msra.mxu0 0.0
    %2049 = vmatprep.subr.mxu0 0.0
    %2050 = vmatpush2.msra.mxu0 0.0
    %2051 = vmatprep.subr.mxu0 0.0
    %2052 = vmatpush2.msra.mxu0 0.0
    %2053 = vmatprep.subr.mxu0 0.0
    %2054 = vmatpush2.msra.mxu0 0.0
    %2055 = vmatprep.subr.mxu0 0.0
    %2056 = vmatpush2.msra.mxu0 0.0
    %2057 = vmatprep.subr.mxu0 0.0
    %2058 = vmatpush2.msra.mxu0 0.0
    %2059 = vmatprep.subr.mxu0 0.0
    %2060 = vmatpush2.msra.mxu0 0.0
    %2061 = vmatprep.subr.mxu0 0.0
    %2062 = vmatpush2.msra.mxu0 0.0
    %2063 = vmatprep.subr.mxu0 0.0
    %2064 = vmatpush2.msra.mxu0 0.0
    %2065 = vmatprep.subr.mxu0 0.0
    %2066 = vmatpush2.msra.mxu0 0.0
    %2067 = vmatprep.subr.mxu0 0.0
    %2068 = vmatpush2.msra.mxu0 0.0
    %2069 = vmatprep.subr.mxu0 0.0
    %2070 = vmatpush2.msra.mxu0 0.0
    %2071 = vmatprep.mubr.f32.mxu0 0.0
    %2072 = vmatmul.mubr.f32.gmra.mxu0 %v2002
    %v2073 = vpop.f32.mrf.mxu0
    %v2074 = vadd.f32 %v1993, %v2073
    %v2075 = vpop.f32.mrf.mxu0
    %2076 = vmatprep.mubr.f32.mxu0 0.0
    %2077 = vmatmul.mubr.f32.gmra.mxu0 %v2005
    %v2078 = vpop.f32.mrf.mxu0
    %v2079 = vadd.f32 %v1993, %v2078
    %v2080 = vpop.f32.mrf.mxu0
    %v2081 = vadd.f32 %v1997, %v2080
    %2082 = vdwg.mxu0
    %v2083 = vld [vmem:[#allocation9] sm:$0xff]
    %v2084 = vld [vmem:[#allocation9 + $0x8] sm:$0xff]
    %v2085 = vld [vmem:[#allocation9 + $0x10] sm:$0xff]
    %v2086 = vld [vmem:[#allocation9 + $0x18] sm:$0xff]
    %v2087 = vld [vmem:[#allocation11] sm:$0xff]
    %v2088 = vld [vmem:[#allocation11 + $0x8] sm:$0xff]
    %v2089 = vld [vmem:[#allocation11 + $0x10] sm:$0xff]
    %v2090 = vld [vmem:[#allocation11 + $0x18] sm:$0xff]
    %2091 = vmatprep.subr.mxu0 0.0
    %2092 = vmatpush1.msra.mxu0 0.0
    %2093 = vmatprep.subr.mxu0 0.0
    %2094 = vmatpush1.msra.mxu0 0.0
    %2095 = vmatprep.subr.mxu0 0.0
    %2096 = vmatpush1.msra.mxu0 0.0
    %2097 = vmatprep.subr.mxu0 0.0
    %2098 = vmatpush1.msra.mxu0 0.0
    %2099 = vmatprep.subr.mxu0 0.0
    %2100 = vmatpush1.msra.mxu0 0.0
    %2101 = vmatprep.subr.mxu0 0.0
    %2102 = vmatpush1.msra.mxu0 0.0
    %2103 = vmatprep.subr.mxu0 0.0
    %2104 = vmatpush1.msra.mxu0 0.0
    %2105 = vmatprep.subr.mxu0 0.0
    %2106 = vmatpush1.msra.mxu0 0.0
    %2107 = vmatprep.subr.mxu0 0.0
    %2108 = vmatpush1.msra.mxu0 0.0
    %2109 = vmatprep.subr.mxu0 0.0
    %2110 = vmatpush1.msra.mxu0 0.0
    %2111 = vmatprep.subr.mxu0 0.0
    %2112 = vmatpush1.msra.mxu0 0.0
    %2113 = vmatprep.subr.mxu0 0.0
    %2114 = vmatpush1.msra.mxu0 0.0
    %2115 = vmatprep.subr.mxu0 0.0
    %2116 = vmatpush1.msra.mxu0 %v2086
    %2117 = vmatprep.subr.mxu0 0.0
    %2118 = vmatpush1.msra.mxu0 %v2085
    %2119 = vmatprep.subr.mxu0 0.0
    %2120 = vmatpush1.msra.mxu0 %v2084
    %2121 = vmatprep.subr.mxu0 0.0
    %2122 = vmatpush1.msra.mxu0 %v2083
    %2123 = vmatprep.subr.mxu0 0.0
    %2124 = vmatpush2.msra.mxu0 0.0
    %2125 = vmatprep.subr.mxu0 0.0
    %2126 = vmatpush2.msra.mxu0 0.0
    %2127 = vmatprep.subr.mxu0 0.0
    %2128 = vmatpush2.msra.mxu0 0.0
    %2129 = vmatprep.subr.mxu0 0.0
    %2130 = vmatpush2.msra.mxu0 0.0
    %2131 = vmatprep.subr.mxu0 0.0
    %2132 = vmatpush2.msra.mxu0 0.0
    %2133 = vmatprep.subr.mxu0 0.0
    %2134 = vmatpush2.msra.mxu0 0.0
    %2135 = vmatprep.subr.mxu0 0.0
    %2136 = vmatpush2.msra.mxu0 0.0
    %2137 = vmatprep.subr.mxu0 0.0
    %2138 = vmatpush2.msra.mxu0 0.0
    %2139 = vmatprep.subr.mxu0 0.0
    %2140 = vmatpush2.msra.mxu0 0.0
    %2141 = vmatprep.subr.mxu0 0.0
    %2142 = vmatpush2.msra.mxu0 0.0
    %2143 = vmatprep.subr.mxu0 0.0
    %2144 = vmatpush2.msra.mxu0 0.0
    %2145 = vmatprep.subr.mxu0 0.0
    %2146 = vmatpush2.msra.mxu0 0.0
    %2147 = vmatprep.subr.mxu0 0.0
    %2148 = vmatpush2.msra.mxu0 0.0
    %2149 = vmatprep.subr.mxu0 0.0
    %2150 = vmatpush2.msra.mxu0 0.0
    %2151 = vmatprep.subr.mxu0 0.0
    %2152 = vmatpush2.msra.mxu0 0.0
    %2153 = vmatprep.subr.mxu0 0.0
    %2154 = vmatpush2.msra.mxu0 0.0
    %2155 = vmatprep.mubr.f32.mxu0 0.0
    %2156 = vmatmul.mubr.f32.gmra.mxu0 %v219
    %v2157 = vpop.f32.mrf.mxu0
    %v2158 = vadd.f32 0.0, %v2157
    %v2159 = vpop.f32.mrf.mxu0
    %2160 = vdwg.mxu0
    %v2161 = vadd.f32 %v2074, %v2158
    %v2162 = vxor.u32 %v2161, 2147483648
    %v2163 = vmul.f32 %v2162, 1.442695
    %v2164 = vpow.pop %v2163
    %v2165 = vadd.f32 %v2164, 1.0
    %v2166 = vrcp.pop %v2165
    %v2167 = vmul.f32 1.0, %v2166
    %v2168 = vtanh.pop %v2161
    %v2169 = vmul.f32 %v2167, 0.0
    %2171 = vrot.lane.b32.xlu0 %v2168, 64
    %v2172 = vpop.permute.xlu0 %2171
    %v2174 = vmul.f32 %v2167, %v2172
    %2176 = vrot.lane.b32.xlu0 %v2174, 32
    %v2177 = vpop.permute.xlu0 %2176
    %v2179 = vadd.f32 %v2169, %v2177
    %v2180 = vtanh.pop %v2179
    %2182 = vrot.lane.b32.xlu0 %v2180, 64
    %v2183 = vpop.permute.xlu0 %2182
    %v2185 = vmul.f32 %v2167, %v2183
    %2186 = vmatprep.subr.mxu0 0.0
    %2187 = vmatpush1.msra.mxu0 0.0
    %2188 = vmatprep.subr.mxu0 0.0
    %2189 = vmatpush1.msra.mxu0 0.0
    %2190 = vmatprep.subr.mxu0 0.0
    %2191 = vmatpush1.msra.mxu0 0.0
    %2192 = vmatprep.subr.mxu0 0.0
    %2193 = vmatpush1.msra.mxu0 0.0
    %2194 = vmatprep.subr.mxu0 0.0
    %2195 = vmatpush1.msra.mxu0 0.0
    %2196 = vmatprep.subr.mxu0 0.0
    %2197 = vmatpush1.msra.mxu0 0.0
    %2198 = vmatprep.subr.mxu0 0.0
    %2199 = vmatpush1.msra.mxu0 0.0
    %2200 = vmatprep.subr.mxu0 0.0
    %2201 = vmatpush1.msra.mxu0 0.0
    %2202 = vmatprep.subr.mxu0 0.0
    %2203 = vmatpush1.msra.mxu0 0.0
    %2204 = vmatprep.subr.mxu0 0.0
    %2205 = vmatpush1.msra.mxu0 0.0
    %2206 = vmatprep.subr.mxu0 0.0
    %2207 = vmatpush1.msra.mxu0 0.0
    %2208 = vmatprep.subr.mxu0 0.0
    %2209 = vmatpush1.msra.mxu0 0.0
    %2210 = vmatprep.subr.mxu0 0.0
    %2211 = vmatpush1.msra.mxu0 %v2090
    %2212 = vmatprep.subr.mxu0 0.0
    %2213 = vmatpush1.msra.mxu0 %v2089
    %2214 = vmatprep.subr.mxu0 0.0
    %2215 = vmatpush1.msra.mxu0 %v2088
    %2216 = vmatprep.subr.mxu0 0.0
    %2217 = vmatpush1.msra.mxu0 %v2087
    %2218 = vmatprep.subr.mxu0 0.0
    %2219 = vmatpush2.msra.mxu0 0.0
    %2220 = vmatprep.subr.mxu0 0.0
    %2221 = vmatpush2.msra.mxu0 0.0
    %2222 = vmatprep.subr.mxu0 0.0
    %2223 = vmatpush2.msra.mxu0 0.0
    %2224 = vmatprep.subr.mxu0 0.0
    %2225 = vmatpush2.msra.mxu0 0.0
    %2226 = vmatprep.subr.mxu0 0.0
    %2227 = vmatpush2.msra.mxu0 0.0
    %2228 = vmatprep.subr.mxu0 0.0
    %2229 = vmatpush2.msra.mxu0 0.0
    %2230 = vmatprep.subr.mxu0 0.0
    %2231 = vmatpush2.msra.mxu0 0.0
    %2232 = vmatprep.subr.mxu0 0.0
    %2233 = vmatpush2.msra.mxu0 0.0
    %2234 = vmatprep.subr.mxu0 0.0
    %2235 = vmatpush2.msra.mxu0 0.0
    %2236 = vmatprep.subr.mxu0 0.0
    %2237 = vmatpush2.msra.mxu0 0.0
    %2238 = vmatprep.subr.mxu0 0.0
    %2239 = vmatpush2.msra.mxu0 0.0
    %2240 = vmatprep.subr.mxu0 0.0
    %2241 = vmatpush2.msra.mxu0 0.0
    %2242 = vmatprep.subr.mxu0 0.0
    %2243 = vmatpush2.msra.mxu0 0.0
    %2244 = vmatprep.subr.mxu0 0.0
    %2245 = vmatpush2.msra.mxu0 0.0
    %2246 = vmatprep.subr.mxu0 0.0
    %2247 = vmatpush2.msra.mxu0 0.0
    %2248 = vmatprep.subr.mxu0 0.0
    %2249 = vmatpush2.msra.mxu0 0.0
    %2250 = vmatprep.mubr.f32.mxu0 0.0
    %2251 = vmatmul.mubr.f32.gmra.mxu0 %v219
    %v2252 = vpop.f32.mrf.mxu0
    %v2253 = vadd.f32 0.0, %v2252
    %v2254 = vpop.f32.mrf.mxu0
    %2255 = vdwg.mxu0
    %v2257 = vrot.slane %v2253, 2
    %v2259 = vadd.f32 %v2081, %v2257
    %v2260 = vxor.u32 %v2259, 2147483648
    %v2261 = vmul.f32 %v2260, 1.442695
    %v2262 = vpow.pop %v2261
    %v2263 = vadd.f32 %v2262, 1.0
    %v2264 = vrcp.pop %v2263
    %v2265 = vmul.f32 1.0, %v2264
    %v2266 = vtanh.pop %v2259
    %v2267 = vmul.f32 %v2265, 0.0
    %2269 = vrot.lane.b32.xlu0 %v2266, 64
    %v2270 = vpop.permute.xlu0 %2269
    %v2272 = vmul.f32 %v2265, %v2270
    %2274 = vrot.lane.b32.xlu0 %v2272, 32
    %v2275 = vpop.permute.xlu0 %2274
    %v2277 = vadd.f32 %v2267, %v2275
    %v2278 = vtanh.pop %v2277
    %2280 = vrot.lane.b32.xlu0 %v2278, 64
    %v2281 = vpop.permute.xlu0 %2280
    %v2283 = vmul.f32 %v2265, %v2281
    %2285 = vrot.lane.b32.xlu0 %v2185, 32
    %v2286 = vpop.permute.xlu0 %2285
    %v2287 = vsel %vm217, %v2286, 0
    %2289 = vmatprep.subr.mxu0 0.0
    %2290 = vmatpush1.msra.mxu0 0.0
    %2291 = vmatprep.subr.mxu0 0.0
    %2292 = vmatpush1.msra.mxu0 0.0
    %2293 = vmatprep.subr.mxu0 0.0
    %2294 = vmatpush1.msra.mxu0 0.0
    %2295 = vmatprep.subr.mxu0 0.0
    %2296 = vmatpush1.msra.mxu0 0.0
    %2297 = vmatprep.subr.mxu0 0.0
    %2298 = vmatpush1.msra.mxu0 0.0
    %2299 = vmatprep.subr.mxu0 0.0
    %2300 = vmatpush1.msra.mxu0 0.0
    %2301 = vmatprep.subr.mxu0 0.0
    %2302 = vmatpush1.msra.mxu0 0.0
    %2303 = vmatprep.subr.mxu0 0.0
    %2304 = vmatpush1.msra.mxu0 0.0
    %2305 = vmatprep.subr.mxu0 0.0
    %2306 = vmatpush1.msra.mxu0 0.0
    %2307 = vmatprep.subr.mxu0 0.0
    %2308 = vmatpush1.msra.mxu0 0.0
    %2309 = vmatprep.subr.mxu0 0.0
    %2310 = vmatpush1.msra.mxu0 0.0
    %2311 = vmatprep.subr.mxu0 0.0
    %2312 = vmatpush1.msra.mxu0 0.0
    %2313 = vmatprep.subr.mxu0 0.0
    %2314 = vmatpush1.msra.mxu0 %v2086
    %2315 = vmatprep.subr.mxu0 0.0
    %2316 = vmatpush1.msra.mxu0 %v2085
    %2317 = vmatprep.subr.mxu0 0.0
    %2318 = vmatpush1.msra.mxu0 %v2084
    %2319 = vmatprep.subr.mxu0 0.0
    %2320 = vmatpush1.msra.mxu0 %v2083
    %2321 = vmatprep.subr.mxu0 0.0
    %2322 = vmatpush2.msra.mxu0 0.0
    %2323 = vmatprep.subr.mxu0 0.0
    %2324 = vmatpush2.msra.mxu0 0.0
    %2325 = vmatprep.subr.mxu0 0.0
    %2326 = vmatpush2.msra.mxu0 0.0
    %2327 = vmatprep.subr.mxu0 0.0
    %2328 = vmatpush2.msra.mxu0 0.0
    %2329 = vmatprep.subr.mxu0 0.0
    %2330 = vmatpush2.msra.mxu0 0.0
    %2331 = vmatprep.subr.mxu0 0.0
    %2332 = vmatpush2.msra.mxu0 0.0
    %2333 = vmatprep.subr.mxu0 0.0
    %2334 = vmatpush2.msra.mxu0 0.0
    %2335 = vmatprep.subr.mxu0 0.0
    %2336 = vmatpush2.msra.mxu0 0.0
    %2337 = vmatprep.subr.mxu0 0.0
    %2338 = vmatpush2.msra.mxu0 0.0
    %2339 = vmatprep.subr.mxu0 0.0
    %2340 = vmatpush2.msra.mxu0 0.0
    %2341 = vmatprep.subr.mxu0 0.0
    %2342 = vmatpush2.msra.mxu0 0.0
    %2343 = vmatprep.subr.mxu0 0.0
    %2344 = vmatpush2.msra.mxu0 0.0
    %2345 = vmatprep.subr.mxu0 0.0
    %2346 = vmatpush2.msra.mxu0 0.0
    %2347 = vmatprep.subr.mxu0 0.0
    %2348 = vmatpush2.msra.mxu0 0.0
    %2349 = vmatprep.subr.mxu0 0.0
    %2350 = vmatpush2.msra.mxu0 0.0
    %2351 = vmatprep.subr.mxu0 0.0
    %2352 = vmatpush2.msra.mxu0 0.0
    %2353 = vmatprep.mubr.f32.mxu0 0.0
    %2354 = vmatmul.mubr.f32.gmra.mxu0 %v2287
    %v2355 = vpop.f32.mrf.mxu0
    %v2356 = vadd.f32 0.0, %v2355
    %v2357 = vpop.f32.mrf.mxu0
    %2358 = vdwg.mxu0
    %v2360 = vrot.slane %v2356, 6
    %v2362 = vadd.f32 %v2074, %v2360
    %v2363 = vxor.u32 %v2362, 2147483648
    %v2364 = vmul.f32 %v2363, 1.442695
    %v2365 = vpow.pop %v2364
    %v2366 = vadd.f32 %v2365, 1.0
    %v2367 = vrcp.pop %v2366
    %v2368 = vmul.f32 1.0, %v2367
    %v2369 = vtanh.pop %v2362
    %v2371 = vrot.slane %v2179, 6
    %v2373 = vmul.f32 %v2368, %v2371
    %2375 = vrot.lane.b32.xlu0 %v2369, 64
    %v2376 = vpop.permute.xlu0 %2375
    %v2378 = vmul.f32 %v2368, %v2376
    %2380 = vrot.lane.b32.xlu0 %v2378, 32
    %v2381 = vpop.permute.xlu0 %2380
    %v2383 = vadd.f32 %v2373, %v2381
    %v2384 = vtanh.pop %v2383
    %2386 = vrot.lane.b32.xlu0 %v2384, 64
    %v2387 = vpop.permute.xlu0 %2386
    %v2389 = vmul.f32 %v2368, %v2387
    %v2391 = vrot.slane %v2389, 2
    %2392 = vrot.lane.b32.xlu0 %v2391, 32
    %v2393 = vpop.permute.xlu0 %2392
    %v2394 = vsel %vm217, %v2393, 0
    %2396 = vmatprep.subr.mxu0 0.0
    %2397 = vmatpush1.msra.mxu0 0.0
    %2398 = vmatprep.subr.mxu0 0.0
    %2399 = vmatpush1.msra.mxu0 0.0
    %2400 = vmatprep.subr.mxu0 0.0
    %2401 = vmatpush1.msra.mxu0 0.0
    %2402 = vmatprep.subr.mxu0 0.0
    %2403 = vmatpush1.msra.mxu0 0.0
    %2404 = vmatprep.subr.mxu0 0.0
    %2405 = vmatpush1.msra.mxu0 0.0
    %2406 = vmatprep.subr.mxu0 0.0
    %2407 = vmatpush1.msra.mxu0 0.0
    %2408 = vmatprep.subr.mxu0 0.0
    %2409 = vmatpush1.msra.mxu0 0.0
    %2410 = vmatprep.subr.mxu0 0.0
    %2411 = vmatpush1.msra.mxu0 0.0
    %2412 = vmatprep.subr.mxu0 0.0
    %2413 = vmatpush1.msra.mxu0 0.0
    %2414 = vmatprep.subr.mxu0 0.0
    %2415 = vmatpush1.msra.mxu0 0.0
    %2416 = vmatprep.subr.mxu0 0.0
    %2417 = vmatpush1.msra.mxu0 0.0
    %2418 = vmatprep.subr.mxu0 0.0
    %2419 = vmatpush1.msra.mxu0 0.0
    %2420 = vmatprep.subr.mxu0 0.0
    %2421 = vmatpush1.msra.mxu0 %v2086
    %2422 = vmatprep.subr.mxu0 0.0
    %2423 = vmatpush1.msra.mxu0 %v2085
    %2424 = vmatprep.subr.mxu0 0.0
    %2425 = vmatpush1.msra.mxu0 %v2084
    %2426 = vmatprep.subr.mxu0 0.0
    %2427 = vmatpush1.msra.mxu0 %v2083
    %2428 = vmatprep.subr.mxu0 0.0
    %2429 = vmatpush2.msra.mxu0 0.0
    %2430 = vmatprep.subr.mxu0 0.0
    %2431 = vmatpush2.msra.mxu0 0.0
    %2432 = vmatprep.subr.mxu0 0.0
    %2433 = vmatpush2.msra.mxu0 0.0
    %2434 = vmatprep.subr.mxu0 0.0
    %2435 = vmatpush2.msra.mxu0 0.0
    %2436 = vmatprep.subr.mxu0 0.0
    %2437 = vmatpush2.msra.mxu0 0.0
    %2438 = vmatprep.subr.mxu0 0.0
    %2439 = vmatpush2.msra.mxu0 0.0
    %2440 = vmatprep.subr.mxu0 0.0
    %2441 = vmatpush2.msra.mxu0 0.0
    %2442 = vmatprep.subr.mxu0 0.0
    %2443 = vmatpush2.msra.mxu0 0.0
    %2444 = vmatprep.subr.mxu0 0.0
    %2445 = vmatpush2.msra.mxu0 0.0
    %2446 = vmatprep.subr.mxu0 0.0
    %2447 = vmatpush2.msra.mxu0 0.0
    %2448 = vmatprep.subr.mxu0 0.0
    %2449 = vmatpush2.msra.mxu0 0.0
    %2450 = vmatprep.subr.mxu0 0.0
    %2451 = vmatpush2.msra.mxu0 0.0
    %2452 = vmatprep.subr.mxu0 0.0
    %2453 = vmatpush2.msra.mxu0 0.0
    %2454 = vmatprep.subr.mxu0 0.0
    %2455 = vmatpush2.msra.mxu0 0.0
    %2456 = vmatprep.subr.mxu0 0.0
    %2457 = vmatpush2.msra.mxu0 0.0
    %2458 = vmatprep.subr.mxu0 0.0
    %2459 = vmatpush2.msra.mxu0 0.0
    %2460 = vmatprep.mubr.f32.mxu0 0.0
    %2461 = vmatmul.mubr.f32.gmra.mxu0 %v2394
    %v2462 = vpop.f32.mrf.mxu0
    %v2463 = vadd.f32 0.0, %v2462
    %v2464 = vpop.f32.mrf.mxu0
    %2465 = vdwg.mxu0
    %v2467 = vrot.slane %v2463, 4
    %v2469 = vadd.f32 %v2074, %v2467
    %v2470 = vxor.u32 %v2469, 2147483648
    %v2471 = vmul.f32 %v2470, 1.442695
    %v2472 = vpow.pop %v2471
    %v2473 = vadd.f32 %v2472, 1.0
    %v2474 = vrcp.pop %v2473
    %v2475 = vmul.f32 1.0, %v2474
    %v2476 = vtanh.pop %v2469
    %v2478 = vrot.slane %v2383, 6
    %v2480 = vmul.f32 %v2475, %v2478
    %2482 = vrot.lane.b32.xlu0 %v2476, 64
    %v2483 = vpop.permute.xlu0 %2482
    %v2485 = vmul.f32 %v2475, %v2483
    %2487 = vrot.lane.b32.xlu0 %v2485, 32
    %v2488 = vpop.permute.xlu0 %2487
    %v2490 = vadd.f32 %v2480, %v2488
    %v2491 = vtanh.pop %v2490
    %2493 = vrot.lane.b32.xlu0 %v2491, 64
    %v2494 = vpop.permute.xlu0 %2493
    %v2496 = vmul.f32 %v2475, %v2494
    %v2498 = vrot.slane %v2496, 4
    %2499 = vrot.lane.b32.xlu0 %v2498, 32
    %v2500 = vpop.permute.xlu0 %2499
    %v2501 = vsel %vm217, %v2500, 0
    %2503 = vmatprep.subr.mxu0 0.0
    %2504 = vmatpush1.msra.mxu0 0.0
    %2505 = vmatprep.subr.mxu0 0.0
    %2506 = vmatpush1.msra.mxu0 0.0
    %2507 = vmatprep.subr.mxu0 0.0
    %2508 = vmatpush1.msra.mxu0 0.0
    %2509 = vmatprep.subr.mxu0 0.0
    %2510 = vmatpush1.msra.mxu0 0.0
    %2511 = vmatprep.subr.mxu0 0.0
    %2512 = vmatpush1.msra.mxu0 0.0
    %2513 = vmatprep.subr.mxu0 0.0
    %2514 = vmatpush1.msra.mxu0 0.0
    %2515 = vmatprep.subr.mxu0 0.0
    %2516 = vmatpush1.msra.mxu0 0.0
    %2517 = vmatprep.subr.mxu0 0.0
    %2518 = vmatpush1.msra.mxu0 0.0
    %2519 = vmatprep.subr.mxu0 0.0
    %2520 = vmatpush1.msra.mxu0 0.0
    %2521 = vmatprep.subr.mxu0 0.0
    %2522 = vmatpush1.msra.mxu0 0.0
    %2523 = vmatprep.subr.mxu0 0.0
    %2524 = vmatpush1.msra.mxu0 0.0
    %2525 = vmatprep.subr.mxu0 0.0
    %2526 = vmatpush1.msra.mxu0 0.0
    %2527 = vmatprep.subr.mxu0 0.0
    %2528 = vmatpush1.msra.mxu0 %v2086
    %2529 = vmatprep.subr.mxu0 0.0
    %2530 = vmatpush1.msra.mxu0 %v2085
    %2531 = vmatprep.subr.mxu0 0.0
    %2532 = vmatpush1.msra.mxu0 %v2084
    %2533 = vmatprep.subr.mxu0 0.0
    %2534 = vmatpush1.msra.mxu0 %v2083
    %2535 = vmatprep.subr.mxu0 0.0
    %2536 = vmatpush2.msra.mxu0 0.0
    %2537 = vmatprep.subr.mxu0 0.0
    %2538 = vmatpush2.msra.mxu0 0.0
    %2539 = vmatprep.subr.mxu0 0.0
    %2540 = vmatpush2.msra.mxu0 0.0
    %2541 = vmatprep.subr.mxu0 0.0
    %2542 = vmatpush2.msra.mxu0 0.0
    %2543 = vmatprep.subr.mxu0 0.0
    %2544 = vmatpush2.msra.mxu0 0.0
    %2545 = vmatprep.subr.mxu0 0.0
    %2546 = vmatpush2.msra.mxu0 0.0
    %2547 = vmatprep.subr.mxu0 0.0
    %2548 = vmatpush2.msra.mxu0 0.0
    %2549 = vmatprep.subr.mxu0 0.0
    %2550 = vmatpush2.msra.mxu0 0.0
    %2551 = vmatprep.subr.mxu0 0.0
    %2552 = vmatpush2.msra.mxu0 0.0
    %2553 = vmatprep.subr.mxu0 0.0
    %2554 = vmatpush2.msra.mxu0 0.0
    %2555 = vmatprep.subr.mxu0 0.0
    %2556 = vmatpush2.msra.mxu0 0.0
    %2557 = vmatprep.subr.mxu0 0.0
    %2558 = vmatpush2.msra.mxu0 0.0
    %2559 = vmatprep.subr.mxu0 0.0
    %2560 = vmatpush2.msra.mxu0 0.0
    %2561 = vmatprep.subr.mxu0 0.0
    %2562 = vmatpush2.msra.mxu0 0.0
    %2563 = vmatprep.subr.mxu0 0.0
    %2564 = vmatpush2.msra.mxu0 0.0
    %2565 = vmatprep.subr.mxu0 0.0
    %2566 = vmatpush2.msra.mxu0 0.0
    %2567 = vmatprep.mubr.f32.mxu0 0.0
    %2568 = vmatmul.mubr.f32.gmra.mxu0 %v2501
    %v2569 = vpop.f32.mrf.mxu0
    %v2570 = vadd.f32 0.0, %v2569
    %v2571 = vpop.f32.mrf.mxu0
    %2572 = vdwg.mxu0
    %v2574 = vrot.slane %v2570, 2
    %v2576 = vadd.f32 %v2074, %v2574
    %v2577 = vxor.u32 %v2576, 2147483648
    %v2578 = vmul.f32 %v2577, 1.442695
    %v2579 = vpow.pop %v2578
    %v2580 = vadd.f32 %v2579, 1.0
    %v2581 = vrcp.pop %v2580
    %v2582 = vmul.f32 1.0, %v2581
    %v2583 = vtanh.pop %v2576
    %v2585 = vrot.slane %v2490, 6
    %v2587 = vmul.f32 %v2582, %v2585
    %2589 = vrot.lane.b32.xlu0 %v2583, 64
    %v2590 = vpop.permute.xlu0 %2589
    %v2592 = vmul.f32 %v2582, %v2590
    %2594 = vrot.lane.b32.xlu0 %v2592, 32
    %v2595 = vpop.permute.xlu0 %2594
    %v2597 = vadd.f32 %v2587, %v2595
    %v2598 = vtanh.pop %v2597
    %2600 = vrot.lane.b32.xlu0 %v2598, 64
    %v2601 = vpop.permute.xlu0 %2600
    %v2603 = vmul.f32 %v2582, %v2601
    %v2605 = vrot.slane %v2603, 6
    %2606 = vrot.lane.b32.xlu0 %v2605, 32
    %v2607 = vpop.permute.xlu0 %2606
    %v2608 = vsel %vm217, %v2607, 0
    %2610 = vmatprep.subr.mxu0 0.0
    %2611 = vmatpush1.msra.mxu0 0.0
    %2612 = vmatprep.subr.mxu0 0.0
    %2613 = vmatpush1.msra.mxu0 0.0
    %2614 = vmatprep.subr.mxu0 0.0
    %2615 = vmatpush1.msra.mxu0 0.0
    %2616 = vmatprep.subr.mxu0 0.0
    %2617 = vmatpush1.msra.mxu0 0.0
    %2618 = vmatprep.subr.mxu0 0.0
    %2619 = vmatpush1.msra.mxu0 0.0
    %2620 = vmatprep.subr.mxu0 0.0
    %2621 = vmatpush1.msra.mxu0 0.0
    %2622 = vmatprep.subr.mxu0 0.0
    %2623 = vmatpush1.msra.mxu0 0.0
    %2624 = vmatprep.subr.mxu0 0.0
    %2625 = vmatpush1.msra.mxu0 0.0
    %2626 = vmatprep.subr.mxu0 0.0
    %2627 = vmatpush1.msra.mxu0 0.0
    %2628 = vmatprep.subr.mxu0 0.0
    %2629 = vmatpush1.msra.mxu0 0.0
    %2630 = vmatprep.subr.mxu0 0.0
    %2631 = vmatpush1.msra.mxu0 0.0
    %2632 = vmatprep.subr.mxu0 0.0
    %2633 = vmatpush1.msra.mxu0 0.0
    %2634 = vmatprep.subr.mxu0 0.0
    %2635 = vmatpush1.msra.mxu0 %v2086
    %2636 = vmatprep.subr.mxu0 0.0
    %2637 = vmatpush1.msra.mxu0 %v2085
    %2638 = vmatprep.subr.mxu0 0.0
    %2639 = vmatpush1.msra.mxu0 %v2084
    %2640 = vmatprep.subr.mxu0 0.0
    %2641 = vmatpush1.msra.mxu0 %v2083
    %2642 = vmatprep.subr.mxu0 0.0
    %2643 = vmatpush2.msra.mxu0 0.0
    %2644 = vmatprep.subr.mxu0 0.0
    %2645 = vmatpush2.msra.mxu0 0.0
    %2646 = vmatprep.subr.mxu0 0.0
    %2647 = vmatpush2.msra.mxu0 0.0
    %2648 = vmatprep.subr.mxu0 0.0
    %2649 = vmatpush2.msra.mxu0 0.0
    %2650 = vmatprep.subr.mxu0 0.0
    %2651 = vmatpush2.msra.mxu0 0.0
    %2652 = vmatprep.subr.mxu0 0.0
    %2653 = vmatpush2.msra.mxu0 0.0
    %2654 = vmatprep.subr.mxu0 0.0
    %2655 = vmatpush2.msra.mxu0 0.0
    %2656 = vmatprep.subr.mxu0 0.0
    %2657 = vmatpush2.msra.mxu0 0.0
    %2658 = vmatprep.subr.mxu0 0.0
    %2659 = vmatpush2.msra.mxu0 0.0
    %2660 = vmatprep.subr.mxu0 0.0
    %2661 = vmatpush2.msra.mxu0 0.0
    %2662 = vmatprep.subr.mxu0 0.0
    %2663 = vmatpush2.msra.mxu0 0.0
    %2664 = vmatprep.subr.mxu0 0.0
    %2665 = vmatpush2.msra.mxu0 0.0
    %2666 = vmatprep.subr.mxu0 0.0
    %2667 = vmatpush2.msra.mxu0 0.0
    %2668 = vmatprep.subr.mxu0 0.0
    %2669 = vmatpush2.msra.mxu0 0.0
    %2670 = vmatprep.subr.mxu0 0.0
    %2671 = vmatpush2.msra.mxu0 0.0
    %2672 = vmatprep.subr.mxu0 0.0
    %2673 = vmatpush2.msra.mxu0 0.0
    %2674 = vmatprep.mubr.f32.mxu0 0.0
    %2675 = vmatmul.mubr.f32.gmra.mxu0 %v2608
    %v2676 = vpop.f32.mrf.mxu0
    %v2677 = vadd.f32 0.0, %v2676
    %v2678 = vpop.f32.mrf.mxu0
    %2679 = vdwg.mxu0
    %v2680 = vadd.f32 %v2079, %v2677
    %v2681 = vxor.u32 %v2680, 2147483648
    %v2682 = vmul.f32 %v2681, 1.442695
    %v2683 = vpow.pop %v2682
    %v2684 = vadd.f32 %v2683, 1.0
    %v2685 = vrcp.pop %v2684
    %v2686 = vmul.f32 1.0, %v2685
    %v2687 = vtanh.pop %v2680
    %v2689 = vrot.slane %v2597, 6
    %v2691 = vmul.f32 %v2686, %v2689
    %2693 = vrot.lane.b32.xlu0 %v2687, 64
    %v2694 = vpop.permute.xlu0 %2693
    %v2696 = vmul.f32 %v2686, %v2694
    %2698 = vrot.lane.b32.xlu0 %v2696, 32
    %v2699 = vpop.permute.xlu0 %2698
    %v2701 = vadd.f32 %v2691, %v2699
    %v2702 = vtanh.pop %v2701
    %2704 = vrot.lane.b32.xlu0 %v2702, 64
    %v2705 = vpop.permute.xlu0 %2704
    %v2707 = vmul.f32 %v2686, %v2705
    %2709 = vrot.lane.b32.xlu0 %v2707, 32
    %v2710 = vpop.permute.xlu0 %2709
    %v2711 = vsel %vm217, %v2710, 0
    %2713 = vmatprep.subr.mxu0 0.0
    %2714 = vmatpush1.msra.mxu0 0.0
    %2715 = vmatprep.subr.mxu0 0.0
    %2716 = vmatpush1.msra.mxu0 0.0
    %2717 = vmatprep.subr.mxu0 0.0
    %2718 = vmatpush1.msra.mxu0 0.0
    %2719 = vmatprep.subr.mxu0 0.0
    %2720 = vmatpush1.msra.mxu0 0.0
    %2721 = vmatprep.subr.mxu0 0.0
    %2722 = vmatpush1.msra.mxu0 0.0
    %2723 = vmatprep.subr.mxu0 0.0
    %2724 = vmatpush1.msra.mxu0 0.0
    %2725 = vmatprep.subr.mxu0 0.0
    %2726 = vmatpush1.msra.mxu0 0.0
    %2727 = vmatprep.subr.mxu0 0.0
    %2728 = vmatpush1.msra.mxu0 0.0
    %2729 = vmatprep.subr.mxu0 0.0
    %2730 = vmatpush1.msra.mxu0 0.0
    %2731 = vmatprep.subr.mxu0 0.0
    %2732 = vmatpush1.msra.mxu0 0.0
    %2733 = vmatprep.subr.mxu0 0.0
    %2734 = vmatpush1.msra.mxu0 0.0
    %2735 = vmatprep.subr.mxu0 0.0
    %2736 = vmatpush1.msra.mxu0 0.0
    %2737 = vmatprep.subr.mxu0 0.0
    %2738 = vmatpush1.msra.mxu0 %v2086
    %2739 = vmatprep.subr.mxu0 0.0
    %2740 = vmatpush1.msra.mxu0 %v2085
    %2741 = vmatprep.subr.mxu0 0.0
    %2742 = vmatpush1.msra.mxu0 %v2084
    %2743 = vmatprep.subr.mxu0 0.0
    %2744 = vmatpush1.msra.mxu0 %v2083
    %2745 = vmatprep.subr.mxu0 0.0
    %2746 = vmatpush2.msra.mxu0 0.0
    %2747 = vmatprep.subr.mxu0 0.0
    %2748 = vmatpush2.msra.mxu0 0.0
    %2749 = vmatprep.subr.mxu0 0.0
    %2750 = vmatpush2.msra.mxu0 0.0
    %2751 = vmatprep.subr.mxu0 0.0
    %2752 = vmatpush2.msra.mxu0 0.0
    %2753 = vmatprep.subr.mxu0 0.0
    %2754 = vmatpush2.msra.mxu0 0.0
    %2755 = vmatprep.subr.mxu0 0.0
    %2756 = vmatpush2.msra.mxu0 0.0
    %2757 = vmatprep.subr.mxu0 0.0
    %2758 = vmatpush2.msra.mxu0 0.0
    %2759 = vmatprep.subr.mxu0 0.0
    %2760 = vmatpush2.msra.mxu0 0.0
    %2761 = vmatprep.subr.mxu0 0.0
    %2762 = vmatpush2.msra.mxu0 0.0
    %2763 = vmatprep.subr.mxu0 0.0
    %2764 = vmatpush2.msra.mxu0 0.0
    %2765 = vmatprep.subr.mxu0 0.0
    %2766 = vmatpush2.msra.mxu0 0.0
    %2767 = vmatprep.subr.mxu0 0.0
    %2768 = vmatpush2.msra.mxu0 0.0
    %2769 = vmatprep.subr.mxu0 0.0
    %2770 = vmatpush2.msra.mxu0 0.0
    %2771 = vmatprep.subr.mxu0 0.0
    %2772 = vmatpush2.msra.mxu0 0.0
    %2773 = vmatprep.subr.mxu0 0.0
    %2774 = vmatpush2.msra.mxu0 0.0
    %2775 = vmatprep.subr.mxu0 0.0
    %2776 = vmatpush2.msra.mxu0 0.0
    %2777 = vmatprep.mubr.f32.mxu0 0.0
    %2778 = vmatmul.mubr.f32.gmra.mxu0 %v2711
    %v2779 = vpop.f32.mrf.mxu0
    %v2780 = vadd.f32 0.0, %v2779
    %v2781 = vpop.f32.mrf.mxu0
    %2782 = vdwg.mxu0
    %v2784 = vrot.slane %v2780, 6
    %v2786 = vadd.f32 %v2079, %v2784
    %v2787 = vxor.u32 %v2786, 2147483648
    %v2788 = vmul.f32 %v2787, 1.442695
    %v2789 = vpow.pop %v2788
    %v2790 = vadd.f32 %v2789, 1.0
    %v2791 = vrcp.pop %v2790
    %v2792 = vmul.f32 1.0, %v2791
    %v2793 = vtanh.pop %v2786
    %v2795 = vrot.slane %v2701, 6
    %v2797 = vmul.f32 %v2792, %v2795
    %2799 = vrot.lane.b32.xlu0 %v2793, 64
    %v2800 = vpop.permute.xlu0 %2799
    %v2802 = vmul.f32 %v2792, %v2800
    %2804 = vrot.lane.b32.xlu0 %v2802, 32
    %v2805 = vpop.permute.xlu0 %2804
    %v2807 = vadd.f32 %v2797, %v2805
    %v2808 = vtanh.pop %v2807
    %2810 = vrot.lane.b32.xlu0 %v2808, 64
    %v2811 = vpop.permute.xlu0 %2810
    %v2813 = vmul.f32 %v2792, %v2811
    %v2815 = vrot.slane %v2813, 2
    %2816 = vrot.lane.b32.xlu0 %v2815, 32
    %v2817 = vpop.permute.xlu0 %2816
    %v2818 = vsel %vm217, %v2817, 0
    %2820 = vmatprep.subr.mxu0 0.0
    %2821 = vmatpush1.msra.mxu0 0.0
    %2822 = vmatprep.subr.mxu0 0.0
    %2823 = vmatpush1.msra.mxu0 0.0
    %2824 = vmatprep.subr.mxu0 0.0
    %2825 = vmatpush1.msra.mxu0 0.0
    %2826 = vmatprep.subr.mxu0 0.0
    %2827 = vmatpush1.msra.mxu0 0.0
    %2828 = vmatprep.subr.mxu0 0.0
    %2829 = vmatpush1.msra.mxu0 0.0
    %2830 = vmatprep.subr.mxu0 0.0
    %2831 = vmatpush1.msra.mxu0 0.0
    %2832 = vmatprep.subr.mxu0 0.0
    %2833 = vmatpush1.msra.mxu0 0.0
    %2834 = vmatprep.subr.mxu0 0.0
    %2835 = vmatpush1.msra.mxu0 0.0
    %2836 = vmatprep.subr.mxu0 0.0
    %2837 = vmatpush1.msra.mxu0 0.0
    %2838 = vmatprep.subr.mxu0 0.0
    %2839 = vmatpush1.msra.mxu0 0.0
    %2840 = vmatprep.subr.mxu0 0.0
    %2841 = vmatpush1.msra.mxu0 0.0
    %2842 = vmatprep.subr.mxu0 0.0
    %2843 = vmatpush1.msra.mxu0 0.0
    %2844 = vmatprep.subr.mxu0 0.0
    %2845 = vmatpush1.msra.mxu0 %v2086
    %2846 = vmatprep.subr.mxu0 0.0
    %2847 = vmatpush1.msra.mxu0 %v2085
    %2848 = vmatprep.subr.mxu0 0.0
    %2849 = vmatpush1.msra.mxu0 %v2084
    %2850 = vmatprep.subr.mxu0 0.0
    %2851 = vmatpush1.msra.mxu0 %v2083
    %2852 = vmatprep.subr.mxu0 0.0
    %2853 = vmatpush2.msra.mxu0 0.0
    %2854 = vmatprep.subr.mxu0 0.0
    %2855 = vmatpush2.msra.mxu0 0.0
    %2856 = vmatprep.subr.mxu0 0.0
    %2857 = vmatpush2.msra.mxu0 0.0
    %2858 = vmatprep.subr.mxu0 0.0
    %2859 = vmatpush2.msra.mxu0 0.0
    %2860 = vmatprep.subr.mxu0 0.0
    %2861 = vmatpush2.msra.mxu0 0.0
    %2862 = vmatprep.subr.mxu0 0.0
    %2863 = vmatpush2.msra.mxu0 0.0
    %2864 = vmatprep.subr.mxu0 0.0
    %2865 = vmatpush2.msra.mxu0 0.0
    %2866 = vmatprep.subr.mxu0 0.0
    %2867 = vmatpush2.msra.mxu0 0.0
    %2868 = vmatprep.subr.mxu0 0.0
    %2869 = vmatpush2.msra.mxu0 0.0
    %2870 = vmatprep.subr.mxu0 0.0
    %2871 = vmatpush2.msra.mxu0 0.0
    %2872 = vmatprep.subr.mxu0 0.0
    %2873 = vmatpush2.msra.mxu0 0.0
    %2874 = vmatprep.subr.mxu0 0.0
    %2875 = vmatpush2.msra.mxu0 0.0
    %2876 = vmatprep.subr.mxu0 0.0
    %2877 = vmatpush2.msra.mxu0 0.0
    %2878 = vmatprep.subr.mxu0 0.0
    %2879 = vmatpush2.msra.mxu0 0.0
    %2880 = vmatprep.subr.mxu0 0.0
    %2881 = vmatpush2.msra.mxu0 0.0
    %2882 = vmatprep.subr.mxu0 0.0
    %2883 = vmatpush2.msra.mxu0 0.0
    %2884 = vmatprep.mubr.f32.mxu0 0.0
    %2885 = vmatmul.mubr.f32.gmra.mxu0 %v2818
    %v2886 = vpop.f32.mrf.mxu0
    %v2887 = vadd.f32 0.0, %v2886
    %v2888 = vpop.f32.mrf.mxu0
    %2889 = vdwg.mxu0
    %v2891 = vrot.slane %v2887, 4
    %v2893 = vadd.f32 %v2079, %v2891
    %v2894 = vxor.u32 %v2893, 2147483648
    %v2895 = vmul.f32 %v2894, 1.442695
    %v2896 = vpow.pop %v2895
    %v2897 = vadd.f32 %v2896, 1.0
    %v2898 = vrcp.pop %v2897
    %v2899 = vmul.f32 1.0, %v2898
    %v2900 = vtanh.pop %v2893
    %v2902 = vrot.slane %v2807, 6
    %v2904 = vmul.f32 %v2899, %v2902
    %2906 = vrot.lane.b32.xlu0 %v2900, 64
    %v2907 = vpop.permute.xlu0 %2906
    %v2909 = vmul.f32 %v2899, %v2907
    %2911 = vrot.lane.b32.xlu0 %v2909, 32
    %v2912 = vpop.permute.xlu0 %2911
    %v2914 = vadd.f32 %v2904, %v2912
    %v2915 = vtanh.pop %v2914
    %2917 = vrot.lane.b32.xlu0 %v2915, 64
    %v2918 = vpop.permute.xlu0 %2917
    %v2920 = vmul.f32 %v2899, %v2918
    %v2922 = vrot.slane %v2920, 4
    %2923 = vrot.lane.b32.xlu0 %v2922, 32
    %v2924 = vpop.permute.xlu0 %2923
    %v2925 = vsel %vm217, %v2924, 0
    %2927 = vmatprep.subr.mxu0 0.0
    %2928 = vmatpush1.msra.mxu0 0.0
    %2929 = vmatprep.subr.mxu0 0.0
    %2930 = vmatpush1.msra.mxu0 0.0
    %2931 = vmatprep.subr.mxu0 0.0
    %2932 = vmatpush1.msra.mxu0 0.0
    %2933 = vmatprep.subr.mxu0 0.0
    %2934 = vmatpush1.msra.mxu0 0.0
    %2935 = vmatprep.subr.mxu0 0.0
    %2936 = vmatpush1.msra.mxu0 0.0
    %2937 = vmatprep.subr.mxu0 0.0
    %2938 = vmatpush1.msra.mxu0 0.0
    %2939 = vmatprep.subr.mxu0 0.0
    %2940 = vmatpush1.msra.mxu0 0.0
    %2941 = vmatprep.subr.mxu0 0.0
    %2942 = vmatpush1.msra.mxu0 0.0
    %2943 = vmatprep.subr.mxu0 0.0
    %2944 = vmatpush1.msra.mxu0 0.0
    %2945 = vmatprep.subr.mxu0 0.0
    %2946 = vmatpush1.msra.mxu0 0.0
    %2947 = vmatprep.subr.mxu0 0.0
    %2948 = vmatpush1.msra.mxu0 0.0
    %2949 = vmatprep.subr.mxu0 0.0
    %2950 = vmatpush1.msra.mxu0 0.0
    %2951 = vmatprep.subr.mxu0 0.0
    %2952 = vmatpush1.msra.mxu0 %v2086
    %2953 = vmatprep.subr.mxu0 0.0
    %2954 = vmatpush1.msra.mxu0 %v2085
    %2955 = vmatprep.subr.mxu0 0.0
    %2956 = vmatpush1.msra.mxu0 %v2084
    %2957 = vmatprep.subr.mxu0 0.0
    %2958 = vmatpush1.msra.mxu0 %v2083
    %2959 = vmatprep.subr.mxu0 0.0
    %2960 = vmatpush2.msra.mxu0 0.0
    %2961 = vmatprep.subr.mxu0 0.0
    %2962 = vmatpush2.msra.mxu0 0.0
    %2963 = vmatprep.subr.mxu0 0.0
    %2964 = vmatpush2.msra.mxu0 0.0
    %2965 = vmatprep.subr.mxu0 0.0
    %2966 = vmatpush2.msra.mxu0 0.0
    %2967 = vmatprep.subr.mxu0 0.0
    %2968 = vmatpush2.msra.mxu0 0.0
    %2969 = vmatprep.subr.mxu0 0.0
    %2970 = vmatpush2.msra.mxu0 0.0
    %2971 = vmatprep.subr.mxu0 0.0
    %2972 = vmatpush2.msra.mxu0 0.0
    %2973 = vmatprep.subr.mxu0 0.0
    %2974 = vmatpush2.msra.mxu0 0.0
    %2975 = vmatprep.subr.mxu0 0.0
    %2976 = vmatpush2.msra.mxu0 0.0
    %2977 = vmatprep.subr.mxu0 0.0
    %2978 = vmatpush2.msra.mxu0 0.0
    %2979 = vmatprep.subr.mxu0 0.0
    %2980 = vmatpush2.msra.mxu0 0.0
    %2981 = vmatprep.subr.mxu0 0.0
    %2982 = vmatpush2.msra.mxu0 0.0
    %2983 = vmatprep.subr.mxu0 0.0
    %2984 = vmatpush2.msra.mxu0 0.0
    %2985 = vmatprep.subr.mxu0 0.0
    %2986 = vmatpush2.msra.mxu0 0.0
    %2987 = vmatprep.subr.mxu0 0.0
    %2988 = vmatpush2.msra.mxu0 0.0
    %2989 = vmatprep.subr.mxu0 0.0
    %2990 = vmatpush2.msra.mxu0 0.0
    %2991 = vmatprep.mubr.f32.mxu0 0.0
    %2992 = vmatmul.mubr.f32.gmra.mxu0 %v2925
    %v2993 = vpop.f32.mrf.mxu0
    %v2994 = vadd.f32 0.0, %v2993
    %v2995 = vpop.f32.mrf.mxu0
    %2996 = vdwg.mxu0
    %v2998 = vrot.slane %v2994, 2
    %v3000 = vadd.f32 %v2079, %v2998
    %v3001 = vxor.u32 %v3000, 2147483648
    %v3002 = vmul.f32 %v3001, 1.442695
    %v3003 = vpow.pop %v3002
    %v3004 = vadd.f32 %v3003, 1.0
    %v3005 = vrcp.pop %v3004
    %v3006 = vmul.f32 1.0, %v3005
    %v3007 = vtanh.pop %v3000
    %v3009 = vrot.slane %v2914, 6
    %v3011 = vmul.f32 %v3006, %v3009
    %3013 = vrot.lane.b32.xlu0 %v3007, 64
    %v3014 = vpop.permute.xlu0 %3013
    %v3016 = vmul.f32 %v3006, %v3014
    %3018 = vrot.lane.b32.xlu0 %v3016, 32
    %v3019 = vpop.permute.xlu0 %3018
    %v3021 = vadd.f32 %v3011, %v3019
    %v3022 = vtanh.pop %v3021
    %3024 = vrot.lane.b32.xlu0 %v3022, 64
    %v3025 = vpop.permute.xlu0 %3024
    %v3027 = vmul.f32 %v3006, %v3025
    %v3028 = vld [vmem:[%s9] sm:$0xff]
    %v3029 = vld [vmem:[%s9 + $0x8] sm:$0xff]
    %v3030 = vld [vmem:[%s9 + $0x10] sm:$0xff]
    %v3031 = vld [vmem:[%s9 + $0x18] sm:$0xff]
    %v3032 = vld [vmem:[%s9 + $0x20] sm:$0xff]
    %v3033 = vld [vmem:[%s9 + $0x28] sm:$0xff]
    %v3034 = vld [vmem:[%s9 + $0x30] sm:$0xff]
    %v3035 = vld [vmem:[%s9 + $0x38] sm:$0xff]
    %v3037 = vrot.slane %v2283, 6
    %3038 = vrot.lane.b32.xlu0 %v3037, 32
    %v3039 = vpop.permute.xlu0 %3038
    %v3040 = vsel %vm217, %v3039, 0
    %3042 = vmatprep.subr.mxu0 0.0
    %3043 = vmatpush1.msra.mxu0 0.0
    %3044 = vmatprep.subr.mxu0 0.0
    %3045 = vmatpush1.msra.mxu0 0.0
    %3046 = vmatprep.subr.mxu0 0.0
    %3047 = vmatpush1.msra.mxu0 0.0
    %3048 = vmatprep.subr.mxu0 0.0
    %3049 = vmatpush1.msra.mxu0 0.0
    %3050 = vmatprep.subr.mxu0 0.0
    %3051 = vmatpush1.msra.mxu0 0.0
    %3052 = vmatprep.subr.mxu0 0.0
    %3053 = vmatpush1.msra.mxu0 0.0
    %3054 = vmatprep.subr.mxu0 0.0
    %3055 = vmatpush1.msra.mxu0 0.0
    %3056 = vmatprep.subr.mxu0 0.0
    %3057 = vmatpush1.msra.mxu0 0.0
    %3058 = vmatprep.subr.mxu0 0.0
    %3059 = vmatpush1.msra.mxu0 0.0
    %3060 = vmatprep.subr.mxu0 0.0
    %3061 = vmatpush1.msra.mxu0 0.0
    %3062 = vmatprep.subr.mxu0 0.0
    %3063 = vmatpush1.msra.mxu0 0.0
    %3064 = vmatprep.subr.mxu0 0.0
    %3065 = vmatpush1.msra.mxu0 0.0
    %3066 = vmatprep.subr.mxu0 0.0
    %3067 = vmatpush1.msra.mxu0 %v3035
    %3068 = vmatprep.subr.mxu0 0.0
    %3069 = vmatpush1.msra.mxu0 %v3034
    %3070 = vmatprep.subr.mxu0 0.0
    %3071 = vmatpush1.msra.mxu0 %v3033
    %3072 = vmatprep.subr.mxu0 0.0
    %3073 = vmatpush1.msra.mxu0 %v3032
    %3074 = vmatprep.subr.mxu0 0.0
    %3075 = vmatpush2.msra.mxu0 0.0
    %3076 = vmatprep.subr.mxu0 0.0
    %3077 = vmatpush2.msra.mxu0 0.0
    %3078 = vmatprep.subr.mxu0 0.0
    %3079 = vmatpush2.msra.mxu0 0.0
    %3080 = vmatprep.subr.mxu0 0.0
    %3081 = vmatpush2.msra.mxu0 0.0
    %3082 = vmatprep.subr.mxu0 0.0
    %3083 = vmatpush2.msra.mxu0 0.0
    %3084 = vmatprep.subr.mxu0 0.0
    %3085 = vmatpush2.msra.mxu0 0.0
    %3086 = vmatprep.subr.mxu0 0.0
    %3087 = vmatpush2.msra.mxu0 0.0
    %3088 = vmatprep.subr.mxu0 0.0
    %3089 = vmatpush2.msra.mxu0 0.0
    %3090 = vmatprep.subr.mxu0 0.0
    %3091 = vmatpush2.msra.mxu0 0.0
    %3092 = vmatprep.subr.mxu0 0.0
    %3093 = vmatpush2.msra.mxu0 0.0
    %3094 = vmatprep.subr.mxu0 0.0
    %3095 = vmatpush2.msra.mxu0 0.0
    %3096 = vmatprep.subr.mxu0 0.0
    %3097 = vmatpush2.msra.mxu0 0.0
    %3098 = vmatprep.subr.mxu0 0.0
    %3099 = vmatpush2.msra.mxu0 0.0
    %3100 = vmatprep.subr.mxu0 0.0
    %3101 = vmatpush2.msra.mxu0 0.0
    %3102 = vmatprep.subr.mxu0 0.0
    %3103 = vmatpush2.msra.mxu0 0.0
    %3104 = vmatprep.subr.mxu0 0.0
    %3105 = vmatpush2.msra.mxu0 0.0
    %3106 = vmatprep.mubr.f32.mxu0 0.0
    %3107 = vmatmul.mubr.f32.gmra.mxu0 %v3040
    %v3108 = vpop.f32.mrf.mxu0
    %v3109 = vadd.f32 0.0, %v3108
    %v3110 = vpop.f32.mrf.mxu0
    %3111 = vdwg.mxu0
    %v3113 = vrot.slane %v3027, 6
    %3114 = vrot.lane.b32.xlu0 %v3113, 32
    %v3115 = vpop.permute.xlu0 %3114
    %v3116 = vsel %vm217, %v3115, 0
    %3118 = vmatprep.subr.mxu0 0.0
    %3119 = vmatpush1.msra.mxu0 0.0
    %3120 = vmatprep.subr.mxu0 0.0
    %3121 = vmatpush1.msra.mxu0 0.0
    %3122 = vmatprep.subr.mxu0 0.0
    %3123 = vmatpush1.msra.mxu0 0.0
    %3124 = vmatprep.subr.mxu0 0.0
    %3125 = vmatpush1.msra.mxu0 0.0
    %3126 = vmatprep.subr.mxu0 0.0
    %3127 = vmatpush1.msra.mxu0 0.0
    %3128 = vmatprep.subr.mxu0 0.0
    %3129 = vmatpush1.msra.mxu0 0.0
    %3130 = vmatprep.subr.mxu0 0.0
    %3131 = vmatpush1.msra.mxu0 0.0
    %3132 = vmatprep.subr.mxu0 0.0
    %3133 = vmatpush1.msra.mxu0 0.0
    %3134 = vmatprep.subr.mxu0 0.0
    %3135 = vmatpush1.msra.mxu0 0.0
    %3136 = vmatprep.subr.mxu0 0.0
    %3137 = vmatpush1.msra.mxu0 0.0
    %3138 = vmatprep.subr.mxu0 0.0
    %3139 = vmatpush1.msra.mxu0 0.0
    %3140 = vmatprep.subr.mxu0 0.0
    %3141 = vmatpush1.msra.mxu0 0.0
    %3142 = vmatprep.subr.mxu0 0.0
    %3143 = vmatpush1.msra.mxu0 %v3031
    %3144 = vmatprep.subr.mxu0 0.0
    %3145 = vmatpush1.msra.mxu0 %v3030
    %3146 = vmatprep.subr.mxu0 0.0
    %3147 = vmatpush1.msra.mxu0 %v3029
    %3148 = vmatprep.subr.mxu0 0.0
    %3149 = vmatpush1.msra.mxu0 %v3028
    %3150 = vmatprep.subr.mxu0 0.0
    %3151 = vmatpush2.msra.mxu0 0.0
    %3152 = vmatprep.subr.mxu0 0.0
    %3153 = vmatpush2.msra.mxu0 0.0
    %3154 = vmatprep.subr.mxu0 0.0
    %3155 = vmatpush2.msra.mxu0 0.0
    %3156 = vmatprep.subr.mxu0 0.0
    %3157 = vmatpush2.msra.mxu0 0.0
    %3158 = vmatprep.subr.mxu0 0.0
    %3159 = vmatpush2.msra.mxu0 0.0
    %3160 = vmatprep.subr.mxu0 0.0
    %3161 = vmatpush2.msra.mxu0 0.0
    %3162 = vmatprep.subr.mxu0 0.0
    %3163 = vmatpush2.msra.mxu0 0.0
    %3164 = vmatprep.subr.mxu0 0.0
    %3165 = vmatpush2.msra.mxu0 0.0
    %3166 = vmatprep.subr.mxu0 0.0
    %3167 = vmatpush2.msra.mxu0 0.0
    %3168 = vmatprep.subr.mxu0 0.0
    %3169 = vmatpush2.msra.mxu0 0.0
    %3170 = vmatprep.subr.mxu0 0.0
    %3171 = vmatpush2.msra.mxu0 0.0
    %3172 = vmatprep.subr.mxu0 0.0
    %3173 = vmatpush2.msra.mxu0 0.0
    %3174 = vmatprep.subr.mxu0 0.0
    %3175 = vmatpush2.msra.mxu0 0.0
    %3176 = vmatprep.subr.mxu0 0.0
    %3177 = vmatpush2.msra.mxu0 0.0
    %3178 = vmatprep.subr.mxu0 0.0
    %3179 = vmatpush2.msra.mxu0 0.0
    %3180 = vmatprep.subr.mxu0 0.0
    %3181 = vmatpush2.msra.mxu0 0.0
    %3182 = vmatprep.mubr.f32.mxu0 0.0
    %3183 = vmatmul.mubr.f32.gmra.mxu0 %v3116
    %v3184 = vpop.f32.mrf.mxu0
    %v3185 = vadd.f32 %v3109, %v3184
    %v3186 = vpop.f32.mrf.mxu0
    %3187 = vdwg.mxu0
    %v3188 = vld [vmem:[%s10] sm:$0x1]
    %v3190 = vlaneseq
    %v3191 = vshrl.u32 %v3190, 7
    %v3192 = vsub.s32 0, %v3191
    %v3193 = vrot.slane %v3188, %v3192
    %v3195 = vadd.f32 %v3185, %v3193
    %vm3196 = vcmask 25600
    %v3197 = vsel %vm3196, %v3195, -inf
    %3198 = vmax.xlane.f32.xlu0 %v3197
    %v3199 = vpop.xlane.xlu0 %3198
    %v3200 = vsub.f32 %v3195, %v3199
    %v3201 = vmul.f32 %v3200, 1.442695
    %v3202 = vpow.pop %v3201
    %v3203 = vsel %vm3196, %v3202, 0.0
    %3204 = vadd.xlane.f32.xlu0 %v3203
    %v3205 = vpop.xlane.xlu0 %3204
    %v3206 = vrcp.pop %v3205
    %v3207 = vmul.f32 %v3202, %v3206
    %3208 = vst.msk [vmem:[#allocation12] sm:$0x3] %vm3196, %v3207
    // Predicated region
    $region66: #{tpu_custom_call.1} parent=1 // pred_check
      _
    $region67: #{tpu_custom_call.1} parent=1 // pred_check_branch
      %3210 = sbr.rel (0) target = $region69
    $region68: #{tpu_custom_call.1} parent=1 // pred_region
      %s3212 = ssub.s32 32, 32
      %3213 = vsyncadd [#allocation5], %s3212
      %s3215 = sshll.u32 [#allocation12], 4
      %s3216 = int_to_ptr.vmem [resolvable:$true] %s3215
      %3218 = dma.vmem_to_hbm [thread:$0]  %s3216, 32, %s11, [#allocation5]
    $region69: #{tpu_custom_call.1} parent=1 // pred_fallthru
      _
    // Predicated region
    $region70: #{tpu_custom_call.1} parent=1 // pred_check
      _
    $region71: #{tpu_custom_call.1} parent=1 // pred_check_branch
      %3220 = sbr.rel (0) target = $region73
    $region72: #{tpu_custom_call.1} parent=1 // pred_region
      %3221 = dma.done [#allocation5], 32
    $region73: #{tpu_custom_call.1} parent=1 // pred_fallthru
      _
    %3222 = vsyncpa [#allocation4], 1
    %3223 = vsyncpa [#allocation7], 1
    %3224 = vsyncpa [#allocation10], 1
    %3225 = vsyncpa [#allocation5], 1

</llo_original>
